<compile_context>
chip_gen: v5e
topology: v5e:2x2
jax: 0.10.0
libtpu: 0.0.40
codegen_flags: <defaults>
</compile_context>

<pallas_src>
import functools

import jax
import jax.numpy as jnp
from jax import lax
from jax.experimental import pallas as pl
from jax.experimental.pallas import tpu as pltpu


def _round_up(x, m):
    return (x + m - 1) // m * m


def _pad_gates_last(w, H, Hp):
    """(..., 4H) -> (..., 4Hp): each of the 4 gate blocks zero-padded to Hp lanes."""
    if Hp == H:
        return w
    parts = jnp.split(w, 4, axis=-1)
    pad = [(0, 0)] * (w.ndim - 1) + [(0, Hp - H)]
    return jnp.concatenate([jnp.pad(p, pad) for p in parts], axis=-1)


def _bilstm_last_kernel(x_ref, wih_f_ref, whh_f_ref, b_f_ref,
                        wih_b_ref, b_b_ref, out_ref, xw_ref, *, T, F):
    """One grid step == tile_n rows of the flattened (batch*n_walk) axis.

    x_ref   : (tile_n, TFp)      bf16  lane-dense, time-flattened x (TFp >= T*F)
    wih_f   : (F, 4*Hp)          bf16  grid-invariant, whole-array VMEM resident
    whh_f   : (Hp, 4*Hp)         bf16
    b_f     : (1, 4*Hp)          f32
    wih_b   : (F, 4*Hp)          bf16
    b_b     : (1, 4*Hp)          f32
    out_ref : (tile_n, 2*Hp)     f32
    xw_ref  : (T, tile_n, 4*Hp)  f32   VMEM scratch for the hoisted input projection
    """
    tile_n = x_ref.shape[0]
    Hp = whh_f_ref.shape[0]

    wih_f = wih_f_ref[...]
    whh_f = whh_f_ref[...]
    b_f = b_f_ref[...]

    # Hoisted, h-independent input projection: T MXU GEMMs on the lane-dense x
    # block, bias folded once.  Results are parked in VMEM scratch so they do
    # not live in vregs across the unrolled recurrence.
    for t in range(T):
        x_t = x_ref[:, t * F:(t + 1) * F]                         # (tile_n, F) bf16
        xw_ref[t] = jnp.dot(x_t, wih_f,
                            preferred_element_type=jnp.float32) + b_f

    def cell(gates, c):
        # 128-aligned gate lane slices (Hp % 128 == 0); PyTorch order i, f, g, o.
        i = jax.nn.sigmoid(gates[:, 0 * Hp:1 * Hp])
        f = jax.nn.sigmoid(gates[:, 1 * Hp:2 * Hp])
        g = jnp.tanh(gates[:, 2 * Hp:3 * Hp])
        o = jax.nn.sigmoid(gates[:, 3 * Hp:4 * Hp])
        c_new = f * c + i * g
        return o * jnp.tanh(c_new), c_new

    h0 = jnp.zeros((tile_n, Hp), jnp.float32)
    c0 = jnp.zeros((tile_n, Hp), jnp.float32)

    def step(t, carry):
        h, c = carry
        gates = xw_ref[t] + jnp.dot(h.astype(jnp.bfloat16), whh_f,
                                    preferred_element_type=jnp.float32)
        return cell(gates, c)

    # Short walks: fully unrolled (one LLO-scheduled region); long walks:
    # partial unroll to keep vreg pressure bounded.
    h_fwd, _ = lax.fori_loop(0, T, step, (h0, c0),
                             unroll=True if T <= 16 else 4)

    # Reverse direction of output[:, -1, :]: exactly one cell step on x[T-1]
    # from a zero state (the h @ W_hh_reverse contribution is exactly zero).
    x_last = x_ref[:, (T - 1) * F:T * F]
    gates_b = jnp.dot(x_last, wih_b_ref[...],
                      preferred_element_type=jnp.float32) + b_b_ref[...]
    h_bwd, _ = cell(gates_b, c0)

    # Two direct, 128-aligned, lane-dense stores (no concat materialization).
    out_ref[:, :Hp] = h_fwd
    out_ref[:, Hp:] = h_bwd


def _choose_tile_n(N, T, Hp):
    """Rows per grid step: multiple of 16 (bf16 sublane pack), target 256
    (fills the 256-wide MXU M on v6e/v7x), scratch-bounded, and >= 2 grid steps
    when there is enough work so ("parallel",) can use both v7x TensorCores."""
    scratch_cap = 8 * 1024 * 1024                       # xw scratch budget
    max_tile = max(16, (scratch_cap // (T * 4 * Hp * 4)) // 16 * 16)
    tile = min(_round_up(max(N, 1), 16), 256, max_tile)
    if N > tile:
        return tile
    if N > 16:                                          # split into >= 2 tiles
        return max(16, min(tile, _round_up((N + 1) // 2, 16)))
    return tile


def feature_encoder_forward(X, params):
    """X: (batch, n_walk, len_walk, feat_dim) f32 -> (batch, n_walk, 2H) f32.
    Matches FeatureEncoder.forward with mask=None in eval mode."""
    batch, n_walk, T, F = X.shape
    H = params["w_hh_f"].shape[0]
    Hp = _round_up(H, 128)
    N = batch * n_walk

    tile_n = _choose_tile_n(N, T, Hp)
    N_pad = _round_up(N, tile_n)
    TFp = _round_up(T * F, 128)

    # Lane-dense bf16 x: (N, T*F), padded up to a multiple of 128 lanes.
    x = X.reshape(N, T * F).astype(jnp.bfloat16)
    if N_pad != N or TFp != T * F:
        x = jnp.pad(x, ((0, N_pad - N), (0, TFp - T * F)))

    # Gate-block padding to 128-aligned lanes; MXU operands bf16 (f32 accumulation
    # in-kernel); biases stay f32.
    wih_f = _pad_gates_last(params["w_ih_f"], H, Hp).astype(jnp.bfloat16)
    whh_f = jnp.pad(_pad_gates_last(params["w_hh_f"], H, Hp),
                    ((0, Hp - H), (0, 0))).astype(jnp.bfloat16)
    b_f = _pad_gates_last(params["b_f"], H, Hp)
    wih_b = _pad_gates_last(params["w_ih_b"], H, Hp).astype(jnp.bfloat16)
    b_b = _pad_gates_last(params["b_b"], H, Hp)
    # params["w_hh_b"] never affects output[:, -1, :] of the reverse direction (h0 = 0).

    # VMEM budget: x/out double buffers + resident weights + xw scratch.
    vmem_bytes = (2 * tile_n * TFp * 2                   # x double buffer (bf16)
                  + 2 * tile_n * 2 * Hp * 4              # out double buffer (f32)
                  + T * tile_n * 4 * Hp * 4              # xw scratch (f32)
                  + 2 * F * 4 * Hp * 2                   # w_ih fwd/bwd (bf16)
                  + Hp * 4 * Hp * 2                      # w_hh fwd (bf16)
                  + 2 * 4 * Hp * 4)                      # biases (f32)
    vmem_limit = int(min(max(2 * vmem_bytes, 32 * 1024 * 1024), 48 * 1024 * 1024))

    cost = pl.CostEstimate(
        flops=(2 * N_pad * T * F * 4 * Hp                # hoisted input projection
               + 2 * N_pad * T * Hp * 4 * Hp             # h @ W_hh recurrence
               + 2 * N_pad * F * 4 * Hp),                # reverse last-step projection
        transcendentals=5 * N_pad * (T + 1) * Hp,
        bytes_accessed=(N_pad * TFp * 2 + N_pad * 2 * Hp * 4
                        + 2 * F * 4 * Hp * 2 + Hp * 4 * Hp * 2 + 2 * 4 * Hp * 4),
    )

    weight_spec = pl.BlockSpec(memory_space=pltpu.MemorySpace.VMEM)

    out = pl.pallas_call(
        functools.partial(_bilstm_last_kernel, T=T, F=F),
        out_shape=jax.ShapeDtypeStruct((N_pad, 2 * Hp), jnp.float32),
        grid=(N_pad // tile_n,),
        in_specs=[
            pl.BlockSpec((tile_n, TFp), lambda n: (n, 0)),   # x (streamed per step)
            weight_spec,                                     # w_ih_f (VMEM resident)
            weight_spec,                                     # w_hh_f
            weight_spec,                                     # b_f
            weight_spec,                                     # w_ih_b
            weight_spec,                                     # b_b
        ],
        out_specs=pl.BlockSpec((tile_n, 2 * Hp), lambda n: (n, 0)),
        scratch_shapes=[pltpu.VMEM((T, tile_n, 4 * Hp), jnp.float32)],
        compiler_params=pltpu.CompilerParams(
            dimension_semantics=("parallel",),
            vmem_limit_bytes=vmem_limit,
        ),
        cost_estimate=cost,
    )(x, wih_f, whh_f, b_f, wih_b, b_b)

    # Strip batch/hidden padding, restore the [fwd | bwd] concat order.
    out = jnp.concatenate([out[:N, :H], out[:N, Hp:Hp + H]], axis=-1)
    # Dropout is identity in eval mode.
    # TODO(synk): training-mode dropout would use pltpu.prng_seed / prng_random_bits.
    # TODO(synk): mask / pack_padded_sequence path (variable-length walks) not implemented.
    # TODO(synk): for configs with tiny H (Hp >> H) pack gates/directions into fewer
    #             128-lane blocks to cut wasted MXU/EUP/VPU lanes per step.
    return out.reshape(batch, n_walk, 2 * H)


def init_params(key, in_features, hidden_features):
    """Deterministic init matching nn.LSTM's U(-1/sqrt(H), 1/sqrt(H)) shapes."""
    H = hidden_features // 2
    k = 1.0 / jnp.sqrt(jnp.float32(H))
    ks = jax.random.split(key, 8)

    def u(kk, shape):
        return jax.random.uniform(kk, shape, jnp.float32, -k, k)

    # Stored transposed (F,4H)/(H,4H) so the kernel does x @ W directly.
    return {
        "w_ih_f": u(ks[0], (in_features, 4 * H)),
        "w_hh_f": u(ks[1], (H, 4 * H)),
        "b_f": u(ks[2], (1, 4 * H)) + u(ks[3], (1, 4 * H)),     # b_ih + b_hh
        "w_ih_b": u(ks[4], (in_features, 4 * H)),
        "w_hh_b": u(ks[5], (H, 4 * H)),
        "b_b": u(ks[6], (1, 4 * H)) + u(ks[7], (1, 4 * H)),
    }


def _reference(X, params):
    """Pure-JAX f32 reference of the same forward pass (mask=None, eval mode)."""
    batch, n_walk, T, F = X.shape
    H = params["w_hh_f"].shape[0]
    x = X.reshape(batch * n_walk, T, F)
    N = x.shape[0]
    h0 = jnp.zeros((N, H), jnp.float32)
    c0 = jnp.zeros((N, H), jnp.float32)

    def cell(h, c, x_t, w_ih, w_hh, b):
        gates = x_t @ w_ih + h @ w_hh + b
        i, f, g, o = jnp.split(gates, 4, axis=-1)
        c_new = jax.nn.sigmoid(f) * c + jax.nn.sigmoid(i) * jnp.tanh(g)
        h_new = jax.nn.sigmoid(o) * jnp.tanh(c_new)
        return h_new, c_new

    def fwd_scan(carry, x_t):
        h, c = cell(*carry, x_t, params["w_ih_f"], params["w_hh_f"], params["b_f"])
        return (h, c), None

    (h_fwd, _), _ = lax.scan(fwd_scan, (h0, c0), jnp.transpose(x, (1, 0, 2)))
    h_bwd, _ = cell(h0, c0, x[:, T - 1, :],
                    params["w_ih_b"], params["w_hh_b"], params["b_b"])
    return jnp.concatenate([h_fwd, h_bwd], axis=-1).reshape(batch, n_walk, 2 * H)


if __name__ == "__main__":
    batch, n_walk, len_walk = 2, 4, 8
    in_features, hidden_features = 16, 32   # -> H = 16 per direction, model_dim = 32

    key = jax.random.PRNGKey(0)
    kx, kp = jax.random.split(key)
    X = jax.random.normal(kx, (batch, n_walk, len_walk, in_features), jnp.float32)
    params = init_params(kp, in_features, hidden_features)

    out = jax.block_until_ready(feature_encoder_forward(X, params))
    ref = jax.block_until_ready(_reference(X, params))

    assert out.shape == (batch, n_walk, hidden_features), out.shape
    # bf16 x + bf16 MXU operands (f32 accumulation) vs f32 reference -> relaxed tol.
    assert jnp.allclose(out, ref, rtol=3e-2, atol=3e-2), "mismatch vs JAX reference"

    print("KERNEL_OK")
</pallas_src>

<mosaic_0001>
module attributes {stable_mosaic.version = 11 : i64} {
  func.func @_bilstm_last_kernel(%arg0: i32, %arg1: memref<16x128xbf16, #tpu.memory_space<vmem>>, %arg2: memref<16x512xbf16, #tpu.memory_space<vmem>>, %arg3: memref<128x512xbf16, #tpu.memory_space<vmem>>, %arg4: memref<1x512xf32, #tpu.memory_space<vmem>>, %arg5: memref<16x512xbf16, #tpu.memory_space<vmem>>, %arg6: memref<1x512xf32, #tpu.memory_space<vmem>>, %arg7: memref<16x256xf32, #tpu.memory_space<vmem>>, %arg8: memref<8x16x512xf32, #tpu.memory_space<vmem>>) attributes {dimension_semantics = [#tpu.dimension_semantics<parallel>], iteration_bounds = array<i64: 1>, scalar_prefetch = 0 : i64, scratch_operands = 1 : i64, tpu.core_type = #tpu.core_type<tc>, window_params = [{transform_indices = @transform_0, window_bounds = array<i64: 16, 128>}, {pipeline_mode = #tpu.pipeline_mode<synchronous>, transform_indices = @transform_1, window_bounds = array<i64: 16, 512>}, {pipeline_mode = #tpu.pipeline_mode<synchronous>, transform_indices = @transform_2, window_bounds = array<i64: 128, 512>}, {pipeline_mode = #tpu.pipeline_mode<synchronous>, transform_indices = @transform_3, window_bounds = array<i64: 1, 512>}, {pipeline_mode = #tpu.pipeline_mode<synchronous>, transform_indices = @transform_4, window_bounds = array<i64: 16, 512>}, {pipeline_mode = #tpu.pipeline_mode<synchronous>, transform_indices = @transform_5, window_bounds = array<i64: 1, 512>}, {transform_indices = @transform_6, window_bounds = array<i64: 16, 256>}]} {
    %c0 = arith.constant 0 : index
    %c0_0 = arith.constant 0 : index
    %0 = vector.load %arg2[%c0, %c0_0] : memref<16x512xbf16, #tpu.memory_space<vmem>>, vector<16x512xbf16>
    %c0_1 = arith.constant 0 : index
    %c0_2 = arith.constant 0 : index
    %1 = vector.load %arg3[%c0_1, %c0_2] : memref<128x512xbf16, #tpu.memory_space<vmem>>, vector<128x512xbf16>
    %c0_3 = arith.constant 0 : index
    %c0_4 = arith.constant 0 : index
    %2 = vector.load %arg4[%c0_3, %c0_4] : memref<1x512xf32, #tpu.memory_space<vmem>>, vector<1x512xf32>
    %c0_5 = arith.constant 0 : index
    %c0_6 = arith.constant 0 : index
    %3 = vector.load %arg1[%c0_5, %c0_6] : memref<16x128xbf16, #tpu.memory_space<vmem>>, vector<16x16xbf16>
    %cst = arith.constant dense<0.000000e+00> : vector<16x512xf32>
    %4 = tpu.matmul %3, %0, %cst {dimension_numbers = #tpu.dot_dimension_numbers<[1], [0], [0], [1], [0, 0, 1, 1], [], []>} : vector<16x16xbf16>, vector<16x512xbf16>, vector<16x512xf32> -> vector<16x512xf32>
    %5 = vector.broadcast %2 : vector<1x512xf32> to vector<16x512xf32>
    %6 = arith.addf %4, %5 : vector<16x512xf32>
    %c0_7 = arith.constant 0 : index
    %c0_8 = arith.constant 0 : index
    %c0_9 = arith.constant 0 : index
    %7 = vector.load %arg8[%c0_7, %c0_8, %c0_9] : memref<8x16x512xf32, #tpu.memory_space<vmem>>, vector<1x16x512xf32>
    %8 = vector.shape_cast %7 : vector<1x16x512xf32> to vector<16x512xf32>
    %9 = vector.shape_cast %6 : vector<16x512xf32> to vector<1x16x512xf32>
    tpu.vector_store %arg8[%c0_7, %c0_8, %c0_9], %9 {strides = array<i32>} : memref<8x16x512xf32, #tpu.memory_space<vmem>>, vector<1x16x512xf32>,
    %c0_10 = arith.constant 0 : index
    %c16 = arith.constant 16 : index
    %10 = vector.load %arg1[%c0_10, %c16] : memref<16x128xbf16, #tpu.memory_space<vmem>>, vector<16x16xbf16>
    %cst_11 = arith.constant dense<0.000000e+00> : vector<16x512xf32>
    %11 = tpu.matmul %10, %0, %cst_11 {dimension_numbers = #tpu.dot_dimension_numbers<[1], [0], [0], [1], [0, 0, 1, 1], [], []>} : vector<16x16xbf16>, vector<16x512xbf16>, vector<16x512xf32> -> vector<16x512xf32>
    %12 = vector.broadcast %2 : vector<1x512xf32> to vector<16x512xf32>
    %13 = arith.addf %11, %12 : vector<16x512xf32>
    %c1 = arith.constant 1 : index
    %c0_12 = arith.constant 0 : index
    %c0_13 = arith.constant 0 : index
    %14 = vector.load %arg8[%c1, %c0_12, %c0_13] : memref<8x16x512xf32, #tpu.memory_space<vmem>>, vector<1x16x512xf32>
    %15 = vector.shape_cast %14 : vector<1x16x512xf32> to vector<16x512xf32>
    %16 = vector.shape_cast %13 : vector<16x512xf32> to vector<1x16x512xf32>
    tpu.vector_store %arg8[%c1, %c0_12, %c0_13], %16 {strides = array<i32>} : memref<8x16x512xf32, #tpu.memory_space<vmem>>, vector<1x16x512xf32>,
    %c0_14 = arith.constant 0 : index
    %c32 = arith.constant 32 : index
    %17 = vector.load %arg1[%c0_14, %c32] : memref<16x128xbf16, #tpu.memory_space<vmem>>, vector<16x16xbf16>
    %cst_15 = arith.constant dense<0.000000e+00> : vector<16x512xf32>
    %18 = tpu.matmul %17, %0, %cst_15 {dimension_numbers = #tpu.dot_dimension_numbers<[1], [0], [0], [1], [0, 0, 1, 1], [], []>} : vector<16x16xbf16>, vector<16x512xbf16>, vector<16x512xf32> -> vector<16x512xf32>
    %19 = vector.broadcast %2 : vector<1x512xf32> to vector<16x512xf32>
    %20 = arith.addf %18, %19 : vector<16x512xf32>
    %c2 = arith.constant 2 : index
    %c0_16 = arith.constant 0 : index
    %c0_17 = arith.constant 0 : index
    %21 = vector.load %arg8[%c2, %c0_16, %c0_17] : memref<8x16x512xf32, #tpu.memory_space<vmem>>, vector<1x16x512xf32>
    %22 = vector.shape_cast %21 : vector<1x16x512xf32> to vector<16x512xf32>
    %23 = vector.shape_cast %20 : vector<16x512xf32> to vector<1x16x512xf32>
    tpu.vector_store %arg8[%c2, %c0_16, %c0_17], %23 {strides = array<i32>} : memref<8x16x512xf32, #tpu.memory_space<vmem>>, vector<1x16x512xf32>,
    %c0_18 = arith.constant 0 : index
    %c48 = arith.constant 48 : index
    %24 = vector.load %arg1[%c0_18, %c48] : memref<16x128xbf16, #tpu.memory_space<vmem>>, vector<16x16xbf16>
    %cst_19 = arith.constant dense<0.000000e+00> : vector<16x512xf32>
    %25 = tpu.matmul %24, %0, %cst_19 {dimension_numbers = #tpu.dot_dimension_numbers<[1], [0], [0], [1], [0, 0, 1, 1], [], []>} : vector<16x16xbf16>, vector<16x512xbf16>, vector<16x512xf32> -> vector<16x512xf32>
    %26 = vector.broadcast %2 : vector<1x512xf32> to vector<16x512xf32>
    %27 = arith.addf %25, %26 : vector<16x512xf32>
    %c3 = arith.constant 3 : index
    %c0_20 = arith.constant 0 : index
    %c0_21 = arith.constant 0 : index
    %28 = vector.load %arg8[%c3, %c0_20, %c0_21] : memref<8x16x512xf32, #tpu.memory_space<vmem>>, vector<1x16x512xf32>
    %29 = vector.shape_cast %28 : vector<1x16x512xf32> to vector<16x512xf32>
    %30 = vector.shape_cast %27 : vector<16x512xf32> to vector<1x16x512xf32>
    tpu.vector_store %arg8[%c3, %c0_20, %c0_21], %30 {strides = array<i32>} : memref<8x16x512xf32, #tpu.memory_space<vmem>>, vector<1x16x512xf32>,
    %c0_22 = arith.constant 0 : index
    %c64 = arith.constant 64 : index
    %31 = vector.load %arg1[%c0_22, %c64] : memref<16x128xbf16, #tpu.memory_space<vmem>>, vector<16x16xbf16>
    %cst_23 = arith.constant dense<0.000000e+00> : vector<16x512xf32>
    %32 = tpu.matmul %31, %0, %cst_23 {dimension_numbers = #tpu.dot_dimension_numbers<[1], [0], [0], [1], [0, 0, 1, 1], [], []>} : vector<16x16xbf16>, vector<16x512xbf16>, vector<16x512xf32> -> vector<16x512xf32>
    %33 = vector.broadcast %2 : vector<1x512xf32> to vector<16x512xf32>
    %34 = arith.addf %32, %33 : vector<16x512xf32>
    %c4 = arith.constant 4 : index
    %c0_24 = arith.constant 0 : index
    %c0_25 = arith.constant 0 : index
    %35 = vector.load %arg8[%c4, %c0_24, %c0_25] : memref<8x16x512xf32, #tpu.memory_space<vmem>>, vector<1x16x512xf32>
    %36 = vector.shape_cast %35 : vector<1x16x512xf32> to vector<16x512xf32>
    %37 = vector.shape_cast %34 : vector<16x512xf32> to vector<1x16x512xf32>
    tpu.vector_store %arg8[%c4, %c0_24, %c0_25], %37 {strides = array<i32>} : memref<8x16x512xf32, #tpu.memory_space<vmem>>, vector<1x16x512xf32>,
    %c0_26 = arith.constant 0 : index
    %c80 = arith.constant 80 : index
    %38 = vector.load %arg1[%c0_26, %c80] : memref<16x128xbf16, #tpu.memory_space<vmem>>, vector<16x16xbf16>
    %cst_27 = arith.constant dense<0.000000e+00> : vector<16x512xf32>
    %39 = tpu.matmul %38, %0, %cst_27 {dimension_numbers = #tpu.dot_dimension_numbers<[1], [0], [0], [1], [0, 0, 1, 1], [], []>} : vector<16x16xbf16>, vector<16x512xbf16>, vector<16x512xf32> -> vector<16x512xf32>
    %40 = vector.broadcast %2 : vector<1x512xf32> to vector<16x512xf32>
    %41 = arith.addf %39, %40 : vector<16x512xf32>
    %c5 = arith.constant 5 : index
    %c0_28 = arith.constant 0 : index
    %c0_29 = arith.constant 0 : index
    %42 = vector.load %arg8[%c5, %c0_28, %c0_29] : memref<8x16x512xf32, #tpu.memory_space<vmem>>, vector<1x16x512xf32>
    %43 = vector.shape_cast %42 : vector<1x16x512xf32> to vector<16x512xf32>
    %44 = vector.shape_cast %41 : vector<16x512xf32> to vector<1x16x512xf32>
    tpu.vector_store %arg8[%c5, %c0_28, %c0_29], %44 {strides = array<i32>} : memref<8x16x512xf32, #tpu.memory_space<vmem>>, vector<1x16x512xf32>,
    %c0_30 = arith.constant 0 : index
    %c96 = arith.constant 96 : index
    %45 = vector.load %arg1[%c0_30, %c96] : memref<16x128xbf16, #tpu.memory_space<vmem>>, vector<16x16xbf16>
    %cst_31 = arith.constant dense<0.000000e+00> : vector<16x512xf32>
    %46 = tpu.matmul %45, %0, %cst_31 {dimension_numbers = #tpu.dot_dimension_numbers<[1], [0], [0], [1], [0, 0, 1, 1], [], []>} : vector<16x16xbf16>, vector<16x512xbf16>, vector<16x512xf32> -> vector<16x512xf32>
    %47 = vector.broadcast %2 : vector<1x512xf32> to vector<16x512xf32>
    %48 = arith.addf %46, %47 : vector<16x512xf32>
    %c6 = arith.constant 6 : index
    %c0_32 = arith.constant 0 : index
    %c0_33 = arith.constant 0 : index
    %49 = vector.load %arg8[%c6, %c0_32, %c0_33] : memref<8x16x512xf32, #tpu.memory_space<vmem>>, vector<1x16x512xf32>
    %50 = vector.shape_cast %49 : vector<1x16x512xf32> to vector<16x512xf32>
    %51 = vector.shape_cast %48 : vector<16x512xf32> to vector<1x16x512xf32>
    tpu.vector_store %arg8[%c6, %c0_32, %c0_33], %51 {strides = array<i32>} : memref<8x16x512xf32, #tpu.memory_space<vmem>>, vector<1x16x512xf32>,
    %c0_34 = arith.constant 0 : index
    %c112 = arith.constant 112 : index
    %52 = vector.load %arg1[%c0_34, %c112] : memref<16x128xbf16, #tpu.memory_space<vmem>>, vector<16x16xbf16>
    %cst_35 = arith.constant dense<0.000000e+00> : vector<16x512xf32>
    %53 = tpu.matmul %52, %0, %cst_35 {dimension_numbers = #tpu.dot_dimension_numbers<[1], [0], [0], [1], [0, 0, 1, 1], [], []>} : vector<16x16xbf16>, vector<16x512xbf16>, vector<16x512xf32> -> vector<16x512xf32>
    %54 = vector.broadcast %2 : vector<1x512xf32> to vector<16x512xf32>
    %55 = arith.addf %53, %54 : vector<16x512xf32>
    %c7 = arith.constant 7 : index
    %c0_36 = arith.constant 0 : index
    %c0_37 = arith.constant 0 : index
    %56 = vector.load %arg8[%c7, %c0_36, %c0_37] : memref<8x16x512xf32, #tpu.memory_space<vmem>>, vector<1x16x512xf32>
    %57 = vector.shape_cast %56 : vector<1x16x512xf32> to vector<16x512xf32>
    %58 = vector.shape_cast %55 : vector<16x512xf32> to vector<1x16x512xf32>
    tpu.vector_store %arg8[%c7, %c0_36, %c0_37], %58 {strides = array<i32>} : memref<8x16x512xf32, #tpu.memory_space<vmem>>, vector<1x16x512xf32>,
    %cst_38 = arith.constant 0.000000e+00 : f32
    %59 = vector.broadcast %cst_38 : f32 to vector<16x128xf32>
    %cst_39 = arith.constant 0.000000e+00 : f32
    %60 = vector.broadcast %cst_39 : f32 to vector<16x128xf32>
    %c0_i32 = arith.constant 0 : i32
    %61 = arith.index_cast %c0_i32 : i32 to index
    %c0_40 = arith.constant 0 : index
    %c0_41 = arith.constant 0 : index
    %62 = vector.load %arg8[%61, %c0_40, %c0_41] : memref<8x16x512xf32, #tpu.memory_space<vmem>>, vector<1x16x512xf32>
    %63 = vector.shape_cast %62 : vector<1x16x512xf32> to vector<16x512xf32>
    %64 = arith.truncf %59 : vector<16x128xf32> to vector<16x128xbf16>
    %cst_42 = arith.constant dense<0.000000e+00> : vector<16x512xf32>
    %65 = tpu.matmul %64, %1, %cst_42 {dimension_numbers = #tpu.dot_dimension_numbers<[1], [0], [0], [1], [0, 0, 1, 1], [], []>} : vector<16x128xbf16>, vector<128x512xbf16>, vector<16x512xf32> -> vector<16x512xf32>
    %66 = arith.addf %63, %65 : vector<16x512xf32>
    %67 = vector.extract_strided_slice %66 {offsets = [0, 0], sizes = [16, 128], strides = [1, 1]} : vector<16x512xf32> to vector<16x128xf32>
    %68 = arith.negf %67 : vector<16x128xf32>
    %69 = math.exp %68 : vector<16x128xf32>
    %cst_43 = arith.constant 1.000000e+00 : f32
    %70 = vector.broadcast %cst_43 : f32 to vector<16x128xf32>
    %71 = arith.addf %70, %69 : vector<16x128xf32>
    %72 = arith.divf %70, %71 : vector<16x128xf32>
    %73 = vector.extract_strided_slice %66 {offsets = [0, 128], sizes = [16, 128], strides = [1, 1]} : vector<16x512xf32> to vector<16x128xf32>
    %74 = arith.negf %73 : vector<16x128xf32>
    %75 = math.exp %74 : vector<16x128xf32>
    %cst_44 = arith.constant 1.000000e+00 : f32
    %76 = vector.broadcast %cst_44 : f32 to vector<16x128xf32>
    %77 = arith.addf %76, %75 : vector<16x128xf32>
    %78 = arith.divf %76, %77 : vector<16x128xf32>
    %79 = vector.extract_strided_slice %66 {offsets = [0, 256], sizes = [16, 128], strides = [1, 1]} : vector<16x512xf32> to vector<16x128xf32>
    %80 = math.tanh %79 : vector<16x128xf32>
    %81 = vector.extract_strided_slice %66 {offsets = [0, 384], sizes = [16, 128], strides = [1, 1]} : vector<16x512xf32> to vector<16x128xf32>
    %82 = arith.negf %81 : vector<16x128xf32>
    %83 = math.exp %82 : vector<16x128xf32>
    %cst_45 = arith.constant 1.000000e+00 : f32
    %84 = vector.broadcast %cst_45 : f32 to vector<16x128xf32>
    %85 = arith.addf %84, %83 : vector<16x128xf32>
    %86 = arith.divf %84, %85 : vector<16x128xf32>
    %87 = arith.mulf %78, %60 : vector<16x128xf32>
    %88 = arith.mulf %72, %80 : vector<16x128xf32>
    %89 = arith.addf %87, %88 : vector<16x128xf32>
    %90 = math.tanh %89 : vector<16x128xf32>
    %91 = arith.mulf %86, %90 : vector<16x128xf32>
    %c1_i32 = arith.constant 1 : i32
    %92 = arith.index_cast %c1_i32 : i32 to index
    %c0_46 = arith.constant 0 : index
    %c0_47 = arith.constant 0 : index
    %93 = vector.load %arg8[%92, %c0_46, %c0_47] : memref<8x16x512xf32, #tpu.memory_space<vmem>>, vector<1x16x512xf32>
    %94 = vector.shape_cast %93 : vector<1x16x512xf32> to vector<16x512xf32>
    %95 = arith.truncf %91 : vector<16x128xf32> to vector<16x128xbf16>
    %cst_48 = arith.constant dense<0.000000e+00> : vector<16x512xf32>
    %96 = tpu.matmul %95, %1, %cst_48 {dimension_numbers = #tpu.dot_dimension_numbers<[1], [0], [0], [1], [0, 0, 1, 1], [], []>} : vector<16x128xbf16>, vector<128x512xbf16>, vector<16x512xf32> -> vector<16x512xf32>
    %97 = arith.addf %94, %96 : vector<16x512xf32>
    %98 = vector.extract_strided_slice %97 {offsets = [0, 0], sizes = [16, 128], strides = [1, 1]} : vector<16x512xf32> to vector<16x128xf32>
    %99 = arith.negf %98 : vector<16x128xf32>
    %100 = math.exp %99 : vector<16x128xf32>
    %cst_49 = arith.constant 1.000000e+00 : f32
    %101 = vector.broadcast %cst_49 : f32 to vector<16x128xf32>
    %102 = arith.addf %101, %100 : vector<16x128xf32>
    %103 = arith.divf %101, %102 : vector<16x128xf32>
    %104 = vector.extract_strided_slice %97 {offsets = [0, 128], sizes = [16, 128], strides = [1, 1]} : vector<16x512xf32> to vector<16x128xf32>
    %105 = arith.negf %104 : vector<16x128xf32>
    %106 = math.exp %105 : vector<16x128xf32>
    %cst_50 = arith.constant 1.000000e+00 : f32
    %107 = vector.broadcast %cst_50 : f32 to vector<16x128xf32>
    %108 = arith.addf %107, %106 : vector<16x128xf32>
    %109 = arith.divf %107, %108 : vector<16x128xf32>
    %110 = vector.extract_strided_slice %97 {offsets = [0, 256], sizes = [16, 128], strides = [1, 1]} : vector<16x512xf32> to vector<16x128xf32>
    %111 = math.tanh %110 : vector<16x128xf32>
    %112 = vector.extract_strided_slice %97 {offsets = [0, 384], sizes = [16, 128], strides = [1, 1]} : vector<16x512xf32> to vector<16x128xf32>
    %113 = arith.negf %112 : vector<16x128xf32>
    %114 = math.exp %113 : vector<16x128xf32>
    %cst_51 = arith.constant 1.000000e+00 : f32
    %115 = vector.broadcast %cst_51 : f32 to vector<16x128xf32>
    %116 = arith.addf %115, %114 : vector<16x128xf32>
    %117 = arith.divf %115, %116 : vector<16x128xf32>
    %118 = arith.mulf %109, %89 : vector<16x128xf32>
    %119 = arith.mulf %103, %111 : vector<16x128xf32>
    %120 = arith.addf %118, %119 : vector<16x128xf32>
    %121 = math.tanh %120 : vector<16x128xf32>
    %122 = arith.mulf %117, %121 : vector<16x128xf32>
    %c2_i32 = arith.constant 2 : i32
    %123 = arith.index_cast %c2_i32 : i32 to index
    %c0_52 = arith.constant 0 : index
    %c0_53 = arith.constant 0 : index
    %124 = vector.load %arg8[%123, %c0_52, %c0_53] : memref<8x16x512xf32, #tpu.memory_space<vmem>>, vector<1x16x512xf32>
    %125 = vector.shape_cast %124 : vector<1x16x512xf32> to vector<16x512xf32>
    %126 = arith.truncf %122 : vector<16x128xf32> to vector<16x128xbf16>
    %cst_54 = arith.constant dense<0.000000e+00> : vector<16x512xf32>
    %127 = tpu.matmul %126, %1, %cst_54 {dimension_numbers = #tpu.dot_dimension_numbers<[1], [0], [0], [1], [0, 0, 1, 1], [], []>} : vector<16x128xbf16>, vector<128x512xbf16>, vector<16x512xf32> -> vector<16x512xf32>
    %128 = arith.addf %125, %127 : vector<16x512xf32>
    %129 = vector.extract_strided_slice %128 {offsets = [0, 0], sizes = [16, 128], strides = [1, 1]} : vector<16x512xf32> to vector<16x128xf32>
    %130 = arith.negf %129 : vector<16x128xf32>
    %131 = math.exp %130 : vector<16x128xf32>
    %cst_55 = arith.constant 1.000000e+00 : f32
    %132 = vector.broadcast %cst_55 : f32 to vector<16x128xf32>
    %133 = arith.addf %132, %131 : vector<16x128xf32>
    %134 = arith.divf %132, %133 : vector<16x128xf32>
    %135 = vector.extract_strided_slice %128 {offsets = [0, 128], sizes = [16, 128], strides = [1, 1]} : vector<16x512xf32> to vector<16x128xf32>
    %136 = arith.negf %135 : vector<16x128xf32>
    %137 = math.exp %136 : vector<16x128xf32>
    %cst_56 = arith.constant 1.000000e+00 : f32
    %138 = vector.broadcast %cst_56 : f32 to vector<16x128xf32>
    %139 = arith.addf %138, %137 : vector<16x128xf32>
    %140 = arith.divf %138, %139 : vector<16x128xf32>
    %141 = vector.extract_strided_slice %128 {offsets = [0, 256], sizes = [16, 128], strides = [1, 1]} : vector<16x512xf32> to vector<16x128xf32>
    %142 = math.tanh %141 : vector<16x128xf32>
    %143 = vector.extract_strided_slice %128 {offsets = [0, 384], sizes = [16, 128], strides = [1, 1]} : vector<16x512xf32> to vector<16x128xf32>
    %144 = arith.negf %143 : vector<16x128xf32>
    %145 = math.exp %144 : vector<16x128xf32>
    %cst_57 = arith.constant 1.000000e+00 : f32
    %146 = vector.broadcast %cst_57 : f32 to vector<16x128xf32>
    %147 = arith.addf %146, %145 : vector<16x128xf32>
    %148 = arith.divf %146, %147 : vector<16x128xf32>
    %149 = arith.mulf %140, %120 : vector<16x128xf32>
    %150 = arith.mulf %134, %142 : vector<16x128xf32>
    %151 = arith.addf %149, %150 : vector<16x128xf32>
    %152 = math.tanh %151 : vector<16x128xf32>
    %153 = arith.mulf %148, %152 : vector<16x128xf32>
    %c3_i32 = arith.constant 3 : i32
    %154 = arith.index_cast %c3_i32 : i32 to index
    %c0_58 = arith.constant 0 : index
    %c0_59 = arith.constant 0 : index
    %155 = vector.load %arg8[%154, %c0_58, %c0_59] : memref<8x16x512xf32, #tpu.memory_space<vmem>>, vector<1x16x512xf32>
    %156 = vector.shape_cast %155 : vector<1x16x512xf32> to vector<16x512xf32>
    %157 = arith.truncf %153 : vector<16x128xf32> to vector<16x128xbf16>
    %cst_60 = arith.constant dense<0.000000e+00> : vector<16x512xf32>
    %158 = tpu.matmul %157, %1, %cst_60 {dimension_numbers = #tpu.dot_dimension_numbers<[1], [0], [0], [1], [0, 0, 1, 1], [], []>} : vector<16x128xbf16>, vector<128x512xbf16>, vector<16x512xf32> -> vector<16x512xf32>
    %159 = arith.addf %156, %158 : vector<16x512xf32>
    %160 = vector.extract_strided_slice %159 {offsets = [0, 0], sizes = [16, 128], strides = [1, 1]} : vector<16x512xf32> to vector<16x128xf32>
    %161 = arith.negf %160 : vector<16x128xf32>
    %162 = math.exp %161 : vector<16x128xf32>
    %cst_61 = arith.constant 1.000000e+00 : f32
    %163 = vector.broadcast %cst_61 : f32 to vector<16x128xf32>
    %164 = arith.addf %163, %162 : vector<16x128xf32>
    %165 = arith.divf %163, %164 : vector<16x128xf32>
    %166 = vector.extract_strided_slice %159 {offsets = [0, 128], sizes = [16, 128], strides = [1, 1]} : vector<16x512xf32> to vector<16x128xf32>
    %167 = arith.negf %166 : vector<16x128xf32>
    %168 = math.exp %167 : vector<16x128xf32>
    %cst_62 = arith.constant 1.000000e+00 : f32
    %169 = vector.broadcast %cst_62 : f32 to vector<16x128xf32>
    %170 = arith.addf %169, %168 : vector<16x128xf32>
    %171 = arith.divf %169, %170 : vector<16x128xf32>
    %172 = vector.extract_strided_slice %159 {offsets = [0, 256], sizes = [16, 128], strides = [1, 1]} : vector<16x512xf32> to vector<16x128xf32>
    %173 = math.tanh %172 : vector<16x128xf32>
    %174 = vector.extract_strided_slice %159 {offsets = [0, 384], sizes = [16, 128], strides = [1, 1]} : vector<16x512xf32> to vector<16x128xf32>
    %175 = arith.negf %174 : vector<16x128xf32>
    %176 = math.exp %175 : vector<16x128xf32>
    %cst_63 = arith.constant 1.000000e+00 : f32
    %177 = vector.broadcast %cst_63 : f32 to vector<16x128xf32>
    %178 = arith.addf %177, %176 : vector<16x128xf32>
    %179 = arith.divf %177, %178 : vector<16x128xf32>
    %180 = arith.mulf %171, %151 : vector<16x128xf32>
    %181 = arith.mulf %165, %173 : vector<16x128xf32>
    %182 = arith.addf %180, %181 : vector<16x128xf32>
    %183 = math.tanh %182 : vector<16x128xf32>
    %184 = arith.mulf %179, %183 : vector<16x128xf32>
    %c4_i32 = arith.constant 4 : i32
    %185 = arith.index_cast %c4_i32 : i32 to index
    %c0_64 = arith.constant 0 : index
    %c0_65 = arith.constant 0 : index
    %186 = vector.load %arg8[%185, %c0_64, %c0_65] : memref<8x16x512xf32, #tpu.memory_space<vmem>>, vector<1x16x512xf32>
    %187 = vector.shape_cast %186 : vector<1x16x512xf32> to vector<16x512xf32>
    %188 = arith.truncf %184 : vector<16x128xf32> to vector<16x128xbf16>
    %cst_66 = arith.constant dense<0.000000e+00> : vector<16x512xf32>
    %189 = tpu.matmul %188, %1, %cst_66 {dimension_numbers = #tpu.dot_dimension_numbers<[1], [0], [0], [1], [0, 0, 1, 1], [], []>} : vector<16x128xbf16>, vector<128x512xbf16>, vector<16x512xf32> -> vector<16x512xf32>
    %190 = arith.addf %187, %189 : vector<16x512xf32>
    %191 = vector.extract_strided_slice %190 {offsets = [0, 0], sizes = [16, 128], strides = [1, 1]} : vector<16x512xf32> to vector<16x128xf32>
    %192 = arith.negf %191 : vector<16x128xf32>
    %193 = math.exp %192 : vector<16x128xf32>
    %cst_67 = arith.constant 1.000000e+00 : f32
    %194 = vector.broadcast %cst_67 : f32 to vector<16x128xf32>
    %195 = arith.addf %194, %193 : vector<16x128xf32>
    %196 = arith.divf %194, %195 : vector<16x128xf32>
    %197 = vector.extract_strided_slice %190 {offsets = [0, 128], sizes = [16, 128], strides = [1, 1]} : vector<16x512xf32> to vector<16x128xf32>
    %198 = arith.negf %197 : vector<16x128xf32>
    %199 = math.exp %198 : vector<16x128xf32>
    %cst_68 = arith.constant 1.000000e+00 : f32
    %200 = vector.broadcast %cst_68 : f32 to vector<16x128xf32>
    %201 = arith.addf %200, %199 : vector<16x128xf32>
    %202 = arith.divf %200, %201 : vector<16x128xf32>
    %203 = vector.extract_strided_slice %190 {offsets = [0, 256], sizes = [16, 128], strides = [1, 1]} : vector<16x512xf32> to vector<16x128xf32>
    %204 = math.tanh %203 : vector<16x128xf32>
    %205 = vector.extract_strided_slice %190 {offsets = [0, 384], sizes = [16, 128], strides = [1, 1]} : vector<16x512xf32> to vector<16x128xf32>
    %206 = arith.negf %205 : vector<16x128xf32>
    %207 = math.exp %206 : vector<16x128xf32>
    %cst_69 = arith.constant 1.000000e+00 : f32
    %208 = vector.broadcast %cst_69 : f32 to vector<16x128xf32>
    %209 = arith.addf %208, %207 : vector<16x128xf32>
    %210 = arith.divf %208, %209 : vector<16x128xf32>
    %211 = arith.mulf %202, %182 : vector<16x128xf32>
    %212 = arith.mulf %196, %204 : vector<16x128xf32>
    %213 = arith.addf %211, %212 : vector<16x128xf32>
    %214 = math.tanh %213 : vector<16x128xf32>
    %215 = arith.mulf %210, %214 : vector<16x128xf32>
    %c5_i32 = arith.constant 5 : i32
    %216 = arith.index_cast %c5_i32 : i32 to index
    %c0_70 = arith.constant 0 : index
    %c0_71 = arith.constant 0 : index
    %217 = vector.load %arg8[%216, %c0_70, %c0_71] : memref<8x16x512xf32, #tpu.memory_space<vmem>>, vector<1x16x512xf32>
    %218 = vector.shape_cast %217 : vector<1x16x512xf32> to vector<16x512xf32>
    %219 = arith.truncf %215 : vector<16x128xf32> to vector<16x128xbf16>
    %cst_72 = arith.constant dense<0.000000e+00> : vector<16x512xf32>
    %220 = tpu.matmul %219, %1, %cst_72 {dimension_numbers = #tpu.dot_dimension_numbers<[1], [0], [0], [1], [0, 0, 1, 1], [], []>} : vector<16x128xbf16>, vector<128x512xbf16>, vector<16x512xf32> -> vector<16x512xf32>
    %221 = arith.addf %218, %220 : vector<16x512xf32>
    %222 = vector.extract_strided_slice %221 {offsets = [0, 0], sizes = [16, 128], strides = [1, 1]} : vector<16x512xf32> to vector<16x128xf32>
    %223 = arith.negf %222 : vector<16x128xf32>
    %224 = math.exp %223 : vector<16x128xf32>
    %cst_73 = arith.constant 1.000000e+00 : f32
    %225 = vector.broadcast %cst_73 : f32 to vector<16x128xf32>
    %226 = arith.addf %225, %224 : vector<16x128xf32>
    %227 = arith.divf %225, %226 : vector<16x128xf32>
    %228 = vector.extract_strided_slice %221 {offsets = [0, 128], sizes = [16, 128], strides = [1, 1]} : vector<16x512xf32> to vector<16x128xf32>
    %229 = arith.negf %228 : vector<16x128xf32>
    %230 = math.exp %229 : vector<16x128xf32>
    %cst_74 = arith.constant 1.000000e+00 : f32
    %231 = vector.broadcast %cst_74 : f32 to vector<16x128xf32>
    %232 = arith.addf %231, %230 : vector<16x128xf32>
    %233 = arith.divf %231, %232 : vector<16x128xf32>
    %234 = vector.extract_strided_slice %221 {offsets = [0, 256], sizes = [16, 128], strides = [1, 1]} : vector<16x512xf32> to vector<16x128xf32>
    %235 = math.tanh %234 : vector<16x128xf32>
    %236 = vector.extract_strided_slice %221 {offsets = [0, 384], sizes = [16, 128], strides = [1, 1]} : vector<16x512xf32> to vector<16x128xf32>
    %237 = arith.negf %236 : vector<16x128xf32>
    %238 = math.exp %237 : vector<16x128xf32>
    %cst_75 = arith.constant 1.000000e+00 : f32
    %239 = vector.broadcast %cst_75 : f32 to vector<16x128xf32>
    %240 = arith.addf %239, %238 : vector<16x128xf32>
    %241 = arith.divf %239, %240 : vector<16x128xf32>
    %242 = arith.mulf %233, %213 : vector<16x128xf32>
    %243 = arith.mulf %227, %235 : vector<16x128xf32>
    %244 = arith.addf %242, %243 : vector<16x128xf32>
    %245 = math.tanh %244 : vector<16x128xf32>
    %246 = arith.mulf %241, %245 : vector<16x128xf32>
    %c6_i32 = arith.constant 6 : i32
    %247 = arith.index_cast %c6_i32 : i32 to index
    %c0_76 = arith.constant 0 : index
    %c0_77 = arith.constant 0 : index
    %248 = vector.load %arg8[%247, %c0_76, %c0_77] : memref<8x16x512xf32, #tpu.memory_space<vmem>>, vector<1x16x512xf32>
    %249 = vector.shape_cast %248 : vector<1x16x512xf32> to vector<16x512xf32>
    %250 = arith.truncf %246 : vector<16x128xf32> to vector<16x128xbf16>
    %cst_78 = arith.constant dense<0.000000e+00> : vector<16x512xf32>
    %251 = tpu.matmul %250, %1, %cst_78 {dimension_numbers = #tpu.dot_dimension_numbers<[1], [0], [0], [1], [0, 0, 1, 1], [], []>} : vector<16x128xbf16>, vector<128x512xbf16>, vector<16x512xf32> -> vector<16x512xf32>
    %252 = arith.addf %249, %251 : vector<16x512xf32>
    %253 = vector.extract_strided_slice %252 {offsets = [0, 0], sizes = [16, 128], strides = [1, 1]} : vector<16x512xf32> to vector<16x128xf32>
    %254 = arith.negf %253 : vector<16x128xf32>
    %255 = math.exp %254 : vector<16x128xf32>
    %cst_79 = arith.constant 1.000000e+00 : f32
    %256 = vector.broadcast %cst_79 : f32 to vector<16x128xf32>
    %257 = arith.addf %256, %255 : vector<16x128xf32>
    %258 = arith.divf %256, %257 : vector<16x128xf32>
    %259 = vector.extract_strided_slice %252 {offsets = [0, 128], sizes = [16, 128], strides = [1, 1]} : vector<16x512xf32> to vector<16x128xf32>
    %260 = arith.negf %259 : vector<16x128xf32>
    %261 = math.exp %260 : vector<16x128xf32>
    %cst_80 = arith.constant 1.000000e+00 : f32
    %262 = vector.broadcast %cst_80 : f32 to vector<16x128xf32>
    %263 = arith.addf %262, %261 : vector<16x128xf32>
    %264 = arith.divf %262, %263 : vector<16x128xf32>
    %265 = vector.extract_strided_slice %252 {offsets = [0, 256], sizes = [16, 128], strides = [1, 1]} : vector<16x512xf32> to vector<16x128xf32>
    %266 = math.tanh %265 : vector<16x128xf32>
    %267 = vector.extract_strided_slice %252 {offsets = [0, 384], sizes = [16, 128], strides = [1, 1]} : vector<16x512xf32> to vector<16x128xf32>
    %268 = arith.negf %267 : vector<16x128xf32>
    %269 = math.exp %268 : vector<16x128xf32>
    %cst_81 = arith.constant 1.000000e+00 : f32
    %270 = vector.broadcast %cst_81 : f32 to vector<16x128xf32>
    %271 = arith.addf %270, %269 : vector<16x128xf32>
    %272 = arith.divf %270, %271 : vector<16x128xf32>
    %273 = arith.mulf %264, %244 : vector<16x128xf32>
    %274 = arith.mulf %258, %266 : vector<16x128xf32>
    %275 = arith.addf %273, %274 : vector<16x128xf32>
    %276 = math.tanh %275 : vector<16x128xf32>
    %277 = arith.mulf %272, %276 : vector<16x128xf32>
    %c7_i32 = arith.constant 7 : i32
    %278 = arith.index_cast %c7_i32 : i32 to index
    %c0_82 = arith.constant 0 : index
    %c0_83 = arith.constant 0 : index
    %279 = vector.load %arg8[%278, %c0_82, %c0_83] : memref<8x16x512xf32, #tpu.memory_space<vmem>>, vector<1x16x512xf32>
    %280 = vector.shape_cast %279 : vector<1x16x512xf32> to vector<16x512xf32>
    %281 = arith.truncf %277 : vector<16x128xf32> to vector<16x128xbf16>
    %cst_84 = arith.constant dense<0.000000e+00> : vector<16x512xf32>
    %282 = tpu.matmul %281, %1, %cst_84 {dimension_numbers = #tpu.dot_dimension_numbers<[1], [0], [0], [1], [0, 0, 1, 1], [], []>} : vector<16x128xbf16>, vector<128x512xbf16>, vector<16x512xf32> -> vector<16x512xf32>
    %283 = arith.addf %280, %282 : vector<16x512xf32>
    %284 = vector.extract_strided_slice %283 {offsets = [0, 0], sizes = [16, 128], strides = [1, 1]} : vector<16x512xf32> to vector<16x128xf32>
    %285 = arith.negf %284 : vector<16x128xf32>
    %286 = math.exp %285 : vector<16x128xf32>
    %cst_85 = arith.constant 1.000000e+00 : f32
    %287 = vector.broadcast %cst_85 : f32 to vector<16x128xf32>
    %288 = arith.addf %287, %286 : vector<16x128xf32>
    %289 = arith.divf %287, %288 : vector<16x128xf32>
    %290 = vector.extract_strided_slice %283 {offsets = [0, 128], sizes = [16, 128], strides = [1, 1]} : vector<16x512xf32> to vector<16x128xf32>
    %291 = arith.negf %290 : vector<16x128xf32>
    %292 = math.exp %291 : vector<16x128xf32>
    %cst_86 = arith.constant 1.000000e+00 : f32
    %293 = vector.broadcast %cst_86 : f32 to vector<16x128xf32>
    %294 = arith.addf %293, %292 : vector<16x128xf32>
    %295 = arith.divf %293, %294 : vector<16x128xf32>
    %296 = vector.extract_strided_slice %283 {offsets = [0, 256], sizes = [16, 128], strides = [1, 1]} : vector<16x512xf32> to vector<16x128xf32>
    %297 = math.tanh %296 : vector<16x128xf32>
    %298 = vector.extract_strided_slice %283 {offsets = [0, 384], sizes = [16, 128], strides = [1, 1]} : vector<16x512xf32> to vector<16x128xf32>
    %299 = arith.negf %298 : vector<16x128xf32>
    %300 = math.exp %299 : vector<16x128xf32>
    %cst_87 = arith.constant 1.000000e+00 : f32
    %301 = vector.broadcast %cst_87 : f32 to vector<16x128xf32>
    %302 = arith.addf %301, %300 : vector<16x128xf32>
    %303 = arith.divf %301, %302 : vector<16x128xf32>
    %304 = arith.mulf %295, %275 : vector<16x128xf32>
    %305 = arith.mulf %289, %297 : vector<16x128xf32>
    %306 = arith.addf %304, %305 : vector<16x128xf32>
    %307 = math.tanh %306 : vector<16x128xf32>
    %308 = arith.mulf %303, %307 : vector<16x128xf32>
    %c8_i32 = arith.constant 8 : i32
    %c0_88 = arith.constant 0 : index
    %c112_89 = arith.constant 112 : index
    %309 = vector.load %arg1[%c0_88, %c112_89] : memref<16x128xbf16, #tpu.memory_space<vmem>>, vector<16x16xbf16>
    %c0_90 = arith.constant 0 : index
    %c0_91 = arith.constant 0 : index
    %310 = vector.load %arg5[%c0_90, %c0_91] : memref<16x512xbf16, #tpu.memory_space<vmem>>, vector<16x512xbf16>
    %cst_92 = arith.constant dense<0.000000e+00> : vector<16x512xf32>
    %311 = tpu.matmul %309, %310, %cst_92 {dimension_numbers = #tpu.dot_dimension_numbers<[1], [0], [0], [1], [0, 0, 1, 1], [], []>} : vector<16x16xbf16>, vector<16x512xbf16>, vector<16x512xf32> -> vector<16x512xf32>
    %c0_93 = arith.constant 0 : index
    %c0_94 = arith.constant 0 : index
    %312 = vector.load %arg6[%c0_93, %c0_94] : memref<1x512xf32, #tpu.memory_space<vmem>>, vector<1x512xf32>
    %313 = vector.broadcast %312 : vector<1x512xf32> to vector<16x512xf32>
    %314 = arith.addf %311, %313 : vector<16x512xf32>
    %315 = vector.extract_strided_slice %314 {offsets = [0, 0], sizes = [16, 128], strides = [1, 1]} : vector<16x512xf32> to vector<16x128xf32>
    %316 = arith.negf %315 : vector<16x128xf32>
    %317 = math.exp %316 : vector<16x128xf32>
    %cst_95 = arith.constant 1.000000e+00 : f32
    %318 = vector.broadcast %cst_95 : f32 to vector<16x128xf32>
    %319 = arith.addf %318, %317 : vector<16x128xf32>
    %320 = arith.divf %318, %319 : vector<16x128xf32>
    %321 = vector.extract_strided_slice %314 {offsets = [0, 128], sizes = [16, 128], strides = [1, 1]} : vector<16x512xf32> to vector<16x128xf32>
    %322 = arith.negf %321 : vector<16x128xf32>
    %323 = math.exp %322 : vector<16x128xf32>
    %cst_96 = arith.constant 1.000000e+00 : f32
    %324 = vector.broadcast %cst_96 : f32 to vector<16x128xf32>
    %325 = arith.addf %324, %323 : vector<16x128xf32>
    %326 = arith.divf %324, %325 : vector<16x128xf32>
    %327 = vector.extract_strided_slice %314 {offsets = [0, 256], sizes = [16, 128], strides = [1, 1]} : vector<16x512xf32> to vector<16x128xf32>
    %328 = math.tanh %327 : vector<16x128xf32>
    %329 = vector.extract_strided_slice %314 {offsets = [0, 384], sizes = [16, 128], strides = [1, 1]} : vector<16x512xf32> to vector<16x128xf32>
    %330 = arith.negf %329 : vector<16x128xf32>
    %331 = math.exp %330 : vector<16x128xf32>
    %cst_97 = arith.constant 1.000000e+00 : f32
    %332 = vector.broadcast %cst_97 : f32 to vector<16x128xf32>
    %333 = arith.addf %332, %331 : vector<16x128xf32>
    %334 = arith.divf %332, %333 : vector<16x128xf32>
    %335 = arith.mulf %326, %60 : vector<16x128xf32>
    %336 = arith.mulf %320, %328 : vector<16x128xf32>
    %337 = arith.addf %335, %336 : vector<16x128xf32>
    %338 = math.tanh %337 : vector<16x128xf32>
    %339 = arith.mulf %334, %338 : vector<16x128xf32>
    %c0_98 = arith.constant 0 : index
    %c0_99 = arith.constant 0 : index
    %340 = vector.load %arg7[%c0_98, %c0_99] : memref<16x256xf32, #tpu.memory_space<vmem>>, vector<16x128xf32>
    tpu.vector_store %arg7[%c0_98, %c0_99], %308 {strides = array<i32>} : memref<16x256xf32, #tpu.memory_space<vmem>>, vector<16x128xf32>,
    %c0_100 = arith.constant 0 : index
    %c128 = arith.constant 128 : index
    %341 = vector.load %arg7[%c0_100, %c128] : memref<16x256xf32, #tpu.memory_space<vmem>>, vector<16x128xf32>
    tpu.vector_store %arg7[%c0_100, %c128], %339 {strides = array<i32>} : memref<16x256xf32, #tpu.memory_space<vmem>>, vector<16x128xf32>,
    return
  }
  func.func @transform_0(%arg0: i32) -> (i32, i32) {
    %c0_i32 = arith.constant 0 : i32
    %c0_i32_0 = arith.constant 0 : i32
    return %arg0, %c0_i32 : i32, i32
  }
  func.func @transform_1(%arg0: i32) -> (i32, i32) {
    %c0_i32 = arith.constant 0 : i32
    %c0_i32_0 = arith.constant 0 : i32
    %c0_i32_1 = arith.constant 0 : i32
    return %c0_i32, %c0_i32_0 : i32, i32
  }
  func.func @transform_2(%arg0: i32) -> (i32, i32) {
    %c0_i32 = arith.constant 0 : i32
    %c0_i32_0 = arith.constant 0 : i32
    %c0_i32_1 = arith.constant 0 : i32
    return %c0_i32, %c0_i32_0 : i32, i32
  }
  func.func @transform_3(%arg0: i32) -> (i32, i32) {
    %c0_i32 = arith.constant 0 : i32
    %c0_i32_0 = arith.constant 0 : i32
    %c0_i32_1 = arith.constant 0 : i32
    return %c0_i32, %c0_i32_0 : i32, i32
  }
  func.func @transform_4(%arg0: i32) -> (i32, i32) {
    %c0_i32 = arith.constant 0 : i32
    %c0_i32_0 = arith.constant 0 : i32
    %c0_i32_1 = arith.constant 0 : i32
    return %c0_i32, %c0_i32_0 : i32, i32
  }
  func.func @transform_5(%arg0: i32) -> (i32, i32) {
    %c0_i32 = arith.constant 0 : i32
    %c0_i32_0 = arith.constant 0 : i32
    %c0_i32_1 = arith.constant 0 : i32
    return %c0_i32, %c0_i32_0 : i32, i32
  }
  func.func @transform_6(%arg0: i32) -> (i32, i32) {
    %c0_i32 = arith.constant 0 : i32
    %c0_i32_0 = arith.constant 0 : i32
    return %arg0, %c0_i32 : i32, i32
  }
}

</mosaic_0001>

<llo_original>
// kernel: tpu_custom_call.1
$region0: #{tpu_custom_call.1}
  #allocation0 [shape = 'u32[]', space=smem, size = 0x4, offset = 0x4, fixed_abs, tag = 'smem constant byte address 0x4 - core index']
  #allocation1 [shape = 'u32[72,128]{1,0:T(1,128)}', space=vmem, size = 0x9000, scoped, tag = 'internal scratch']
  #allocation2 [shape = 'f32[8,16,512]{2,1,0:T(8,128)}', space=vmem, size = 0x40000, scoped, tag = 'scratch operand']
  %s0 = inlined_call_operand.hbm [shape: bf16[16,128], index: 0, kind: input, shape index: {}]
  %s1 = inlined_call_operand.hbm [shape: bf16[16,512], index: 1, kind: input, shape index: {}]
  %s2 = inlined_call_operand.hbm [shape: bf16[128,512], index: 2, kind: input, shape index: {}]
  %s3 = inlined_call_operand.hbm [shape: f32[1,512], index: 3, kind: input, shape index: {}]
  %s4 = inlined_call_operand.hbm [shape: bf16[16,512], index: 4, kind: input, shape index: {}]
  %s5 = inlined_call_operand.vmem [shape: f32[1,512], index: 5, kind: input, shape index: {}]
  %s6 = inlined_call_operand.hbm [shape: f32[16,256], index: 6, kind: output, shape index: {}]
  %s7 = sld [smem:[#allocation0]]
  $region54: #{tpu_custom_call.1} parent=0
    _
  %s9 = ssub.s32 1, %s7
  %s10 = scalar_select 0, %s9, %s7
  $region1: #{tpu_custom_call.1} parent=0
    #allocation3 [shape = 'u8[4096]{0}', space=vmem, size = 0x1000, scoped, tag = 'input window, operand 0, single buffered']
    #allocation4 [shape = 's32[1]{0}', space=sflag, size = 0x4, scoped, tag = 'scoped memory for tpu_custom_call.1']
    #allocation5 [shape = 's32[1]{0}', space=sflag, size = 0x4, scoped, tag = 'scoped memory for tpu_custom_call.1']
    #allocation6 [shape = 'u8[16384]{0}', space=vmem, size = 0x4000, scoped, tag = 'input window, operand 1, single buffered']
    #allocation7 [shape = 's32[1]{0}', space=sflag, size = 0x4, scoped, tag = 'scoped memory for tpu_custom_call.1']
    #allocation8 [shape = 'u8[131072]{0}', space=vmem, size = 0x20000, scoped, tag = 'input window, operand 2, single buffered']
    #allocation9 [shape = 'u8[2048]{0}', space=vmem, size = 0x800, scoped, tag = 'input window, operand 3, single buffered']
    #allocation10 [shape = 's32[1]{0}', space=sflag, size = 0x4, scoped, tag = 'scoped memory for tpu_custom_call.1']
    #allocation11 [shape = 'u8[16384]{0}', space=vmem, size = 0x4000, scoped, tag = 'input window, operand 4, single buffered']
    #allocation12 [shape = 'u8[16384]{0}', space=vmem, size = 0x4000, scoped, tag = 'output window, operand 0, single buffered']
    %11 = vsyncpa [#allocation4], 0
    %12 = vsyncpa [#allocation7], 0
    %13 = vsyncpa [#allocation10], 0
    %14 = vsyncpa [#allocation5], 0
    // Predicated region
    $region2: #{tpu_custom_call.1} parent=1 // pred_check
      _
    $region3: #{tpu_custom_call.1} parent=1 // pred_check_branch
      %16 = sbr.rel (0) target = $region5
    $region4: #{tpu_custom_call.1} parent=1 // pred_region
      %18 = vsyncadd [#allocation4], 0
      %s19 = sshll.u32 %s0, 4
      %s20 = int_to_ptr.hbm [resolvable:$true] %s19
      %s21 = sshll.u32 [#allocation3], 4
      %s22 = int_to_ptr.vmem [resolvable:$true] %s21
      %27 = dma.hbm_to_vmem [thread:$0]  %s20, 128, %s22, [#allocation4], 64, 64, 4
    $region5: #{tpu_custom_call.1} parent=1 // pred_fallthru
      _
    // Predicated region
    $region6: #{tpu_custom_call.1} parent=1 // pred_check
      _
    $region7: #{tpu_custom_call.1} parent=1 // pred_check_branch
      %29 = sbr.rel (0) target = $region9
    $region8: #{tpu_custom_call.1} parent=1 // pred_region
      %31 = vsyncadd [#allocation7], 0
      %s32 = sshll.u32 %s1, 4
      %s33 = int_to_ptr.hbm [resolvable:$true] %s32
      %s34 = sshll.u32 [#allocation6], 4
      %s35 = int_to_ptr.vmem [resolvable:$true] %s34
      %40 = dma.hbm_to_vmem [thread:$0]  %s33, 512, %s35, [#allocation7], 256, 256, 16
    $region9: #{tpu_custom_call.1} parent=1 // pred_fallthru
      _
    // Predicated region
    $region10: #{tpu_custom_call.1} parent=1 // pred_check
      _
    $region11: #{tpu_custom_call.1} parent=1 // pred_check_branch
      %42 = sbr.rel (0) target = $region13
    $region12: #{tpu_custom_call.1} parent=1 // pred_region
      %44 = vsyncadd [#allocation7], 0
      %s45 = sshll.u32 %s2, 4
      %s46 = int_to_ptr.hbm [resolvable:$true] %s45
      %s47 = sshll.u32 [#allocation8], 4
      %s48 = int_to_ptr.vmem [resolvable:$true] %s47
      %53 = dma.hbm_to_vmem [thread:$0]  %s46, 4096, %s48, [#allocation7], 256, 256, 16
    $region13: #{tpu_custom_call.1} parent=1 // pred_fallthru
      _
    // Predicated region
    $region14: #{tpu_custom_call.1} parent=1 // pred_check
      _
    $region15: #{tpu_custom_call.1} parent=1 // pred_check_branch
      %55 = sbr.rel (0) target = $region17
    $region16: #{tpu_custom_call.1} parent=1 // pred_region
      %57 = vsyncadd [#allocation10], 0
      %s59 = sshll.u32 %s3, 4
      %s60 = int_to_ptr.hbm [resolvable:$true] %s59
      %s61 = sshll.u32 [#allocation9], 4
      %s62 = int_to_ptr.vmem [resolvable:$true] %s61
      %64 = dma.hbm_to_vmem [thread:$0]  %s60, 64, %s62, [#allocation10]
    $region17: #{tpu_custom_call.1} parent=1 // pred_fallthru
      _
    // Predicated region
    $region18: #{tpu_custom_call.1} parent=1 // pred_check
      _
    $region19: #{tpu_custom_call.1} parent=1 // pred_check_branch
      %66 = sbr.rel (0) target = $region21
    $region20: #{tpu_custom_call.1} parent=1 // pred_region
      %68 = vsyncadd [#allocation10], 0
      %s69 = sshll.u32 %s4, 4
      %s70 = int_to_ptr.hbm [resolvable:$true] %s69
      %s71 = sshll.u32 [#allocation11], 4
      %s72 = int_to_ptr.vmem [resolvable:$true] %s71
      %77 = dma.hbm_to_vmem [thread:$0]  %s70, 512, %s72, [#allocation10], 256, 256, 16
    $region21: #{tpu_custom_call.1} parent=1 // pred_fallthru
      _
    // Predicated region
    $region22: #{tpu_custom_call.1} parent=1 // pred_check
      _
    $region23: #{tpu_custom_call.1} parent=1 // pred_check_branch
      %79 = sbr.rel (0) target = $region25
    $region24: #{tpu_custom_call.1} parent=1 // pred_region
      _
    $region25: #{tpu_custom_call.1} parent=1 // pred_fallthru
      _
    // Predicated region
    $region26: #{tpu_custom_call.1} parent=1 // pred_check
      _
    $region27: #{tpu_custom_call.1} parent=1 // pred_check_branch
      %81 = sbr.rel (0) target = $region29
    $region28: #{tpu_custom_call.1} parent=1 // pred_region
      %83 = dma.done [#allocation4], 128
    $region29: #{tpu_custom_call.1} parent=1 // pred_fallthru
      _
    // Predicated region
    $region30: #{tpu_custom_call.1} parent=1 // pred_check
      _
    $region31: #{tpu_custom_call.1} parent=1 // pred_check_branch
      %85 = sbr.rel (0) target = $region33
    $region32: #{tpu_custom_call.1} parent=1 // pred_region
      %87 = dma.done [#allocation7], 512
    $region33: #{tpu_custom_call.1} parent=1 // pred_fallthru
      _
    // Predicated region
    $region34: #{tpu_custom_call.1} parent=1 // pred_check
      _
    $region35: #{tpu_custom_call.1} parent=1 // pred_check_branch
      %89 = sbr.rel (0) target = $region37
    $region36: #{tpu_custom_call.1} parent=1 // pred_region
      %91 = dma.done [#allocation7], 4096
    $region37: #{tpu_custom_call.1} parent=1 // pred_fallthru
      _
    // Predicated region
    $region38: #{tpu_custom_call.1} parent=1 // pred_check
      _
    $region39: #{tpu_custom_call.1} parent=1 // pred_check_branch
      %93 = sbr.rel (0) target = $region41
    $region40: #{tpu_custom_call.1} parent=1 // pred_region
      %95 = dma.done [#allocation10], 64
    $region41: #{tpu_custom_call.1} parent=1 // pred_fallthru
      _
    // Predicated region
    $region42: #{tpu_custom_call.1} parent=1 // pred_check
      _
    $region43: #{tpu_custom_call.1} parent=1 // pred_check_branch
      %97 = sbr.rel (0) target = $region45
    $region44: #{tpu_custom_call.1} parent=1 // pred_region
      %99 = dma.done [#allocation10], 512
    $region45: #{tpu_custom_call.1} parent=1 // pred_fallthru
      _
    %v101 = vld [vmem:[#allocation6] sm:$0xff]
    %v102 = vld [vmem:[#allocation6 + $0x8] sm:$0xff]
    %v103 = vld [vmem:[#allocation6 + $0x10] sm:$0xff]
    %v104 = vld [vmem:[#allocation6 + $0x18] sm:$0xff]
    %v105 = vld [vmem:[#allocation8] sm:$0xff]
    %v106 = vld [vmem:[#allocation8 + $0x8] sm:$0xff]
    %v107 = vld [vmem:[#allocation8 + $0x10] sm:$0xff]
    %v108 = vld [vmem:[#allocation8 + $0x18] sm:$0xff]
    %v109 = vld [vmem:[#allocation8 + $0x20] sm:$0xff]
    %v110 = vld [vmem:[#allocation8 + $0x28] sm:$0xff]
    %v111 = vld [vmem:[#allocation8 + $0x30] sm:$0xff]
    %v112 = vld [vmem:[#allocation8 + $0x38] sm:$0xff]
    %v113 = vld [vmem:[#allocation8 + $0x40] sm:$0xff]
    %v114 = vld [vmem:[#allocation8 + $0x48] sm:$0xff]
    %v115 = vld [vmem:[#allocation8 + $0x50] sm:$0xff]
    %v116 = vld [vmem:[#allocation8 + $0x58] sm:$0xff]
    %v117 = vld [vmem:[#allocation8 + $0x60] sm:$0xff]
    %v118 = vld [vmem:[#allocation8 + $0x68] sm:$0xff]
    %v119 = vld [vmem:[#allocation8 + $0x70] sm:$0xff]
    %v120 = vld [vmem:[#allocation8 + $0x78] sm:$0xff]
    %v121 = vld [vmem:[#allocation8 + $0x80] sm:$0xff]
    %v122 = vld [vmem:[#allocation8 + $0x88] sm:$0xff]
    %v123 = vld [vmem:[#allocation8 + $0x90] sm:$0xff]
    %v124 = vld [vmem:[#allocation8 + $0x98] sm:$0xff]
    %v125 = vld [vmem:[#allocation8 + $0xa0] sm:$0xff]
    %v126 = vld [vmem:[#allocation8 + $0xa8] sm:$0xff]
    %v127 = vld [vmem:[#allocation8 + $0xb0] sm:$0xff]
    %v128 = vld [vmem:[#allocation8 + $0xb8] sm:$0xff]
    %v129 = vld [vmem:[#allocation8 + $0xc0] sm:$0xff]
    %v130 = vld [vmem:[#allocation8 + $0xc8] sm:$0xff]
    %v131 = vld [vmem:[#allocation8 + $0xd0] sm:$0xff]
    %v132 = vld [vmem:[#allocation8 + $0xd8] sm:$0xff]
    %v133 = vld [vmem:[#allocation8 + $0xe0] sm:$0xff]
    %v134 = vld [vmem:[#allocation8 + $0xe8] sm:$0xff]
    %v135 = vld [vmem:[#allocation8 + $0xf0] sm:$0xff]
    %v136 = vld [vmem:[#allocation8 + $0xf8] sm:$0xff]
    %v137 = vld [vmem:[#allocation9] sm:$0xf]
    %v138 = vld [vmem:[#allocation3] sm:$0xf]
    %v139 = vld [vmem:[#allocation3 + $0x4] sm:$0xf]
    %v141 = vperm.slane %v137, 0
    %v142 = vperm.slane %v137, 1
    %v143 = vperm.slane %v137, 2
    %v144 = vperm.slane %v137, 3
    %v151 = vunpack.c.l.b16 %v138
    %v152 = vunpack.c.l.b16 %v139
    %v153 = vpack.c.b16 %v152, %v151
    %v158 = vunpack.c.l.b16 %v101
    %v159 = vunpack.c.h.b16 %v101
    %v160 = vunpack.c.l.b16 %v102
    %v161 = vunpack.c.h.b16 %v102
    %v162 = vunpack.c.l.b16 %v103
    %v163 = vunpack.c.h.b16 %v103
    %v164 = vunpack.c.l.b16 %v104
    %v165 = vunpack.c.h.b16 %v104
    %v166 = vpack.c.b16 %v162, %v158
    %v167 = vpack.c.b16 %v163, %v159
    %v168 = vpack.c.b16 %v164, %v160
    %v169 = vpack.c.b16 %v165, %v161
    %vm174 = vcmask 130048
    %v176 = vsel %vm174, %v153, 0
    %178 = vmatpush.bf16.msra.mxu0 0
    %179 = vmatpush.bf16.msra.mxu0 0
    %180 = vmatpush.bf16.msra.mxu0 0
    %181 = vmatpush.bf16.msra.mxu0 0
    %182 = vmatpush.bf16.msra.mxu0 0
    %183 = vmatpush.bf16.msra.mxu0 0
    %184 = vmatpush.bf16.msra.mxu0 0
    %185 = vmatpush.bf16.msra.mxu0 %v166
    %186 = vmatmul.bf16.gmra.mxu0 %v176
    %v187 = vpop.f32.mrf.mxu0
    %v188 = vadd.f32 %v141, %v187
    %v189 = vpop.f32.mrf.mxu0
    %v190 = vadd.f32 %v141, %v189
    %191 = vdwg.mxu0
    %192 = vmatpush.bf16.msra.mxu0 0
    %193 = vmatpush.bf16.msra.mxu0 0
    %194 = vmatpush.bf16.msra.mxu0 0
    %195 = vmatpush.bf16.msra.mxu0 0
    %196 = vmatpush.bf16.msra.mxu0 0
    %197 = vmatpush.bf16.msra.mxu0 0
    %198 = vmatpush.bf16.msra.mxu0 0
    %199 = vmatpush.bf16.msra.mxu0 %v167
    %200 = vmatmul.bf16.gmra.mxu0 %v176
    %v201 = vpop.f32.mrf.mxu0
    %v202 = vadd.f32 %v142, %v201
    %v203 = vpop.f32.mrf.mxu0
    %v204 = vadd.f32 %v142, %v203
    %205 = vdwg.mxu0
    %206 = vmatpush.bf16.msra.mxu0 0
    %207 = vmatpush.bf16.msra.mxu0 0
    %208 = vmatpush.bf16.msra.mxu0 0
    %209 = vmatpush.bf16.msra.mxu0 0
    %210 = vmatpush.bf16.msra.mxu0 0
    %211 = vmatpush.bf16.msra.mxu0 0
    %212 = vmatpush.bf16.msra.mxu0 0
    %213 = vmatpush.bf16.msra.mxu0 %v168
    %214 = vmatmul.bf16.gmra.mxu0 %v176
    %v215 = vpop.f32.mrf.mxu0
    %v216 = vadd.f32 %v143, %v215
    %v217 = vpop.f32.mrf.mxu0
    %v218 = vadd.f32 %v143, %v217
    %219 = vdwg.mxu0
    %220 = vmatpush.bf16.msra.mxu0 0
    %221 = vmatpush.bf16.msra.mxu0 0
    %222 = vmatpush.bf16.msra.mxu0 0
    %223 = vmatpush.bf16.msra.mxu0 0
    %224 = vmatpush.bf16.msra.mxu0 0
    %225 = vmatpush.bf16.msra.mxu0 0
    %226 = vmatpush.bf16.msra.mxu0 0
    %227 = vmatpush.bf16.msra.mxu0 %v169
    %228 = vmatmul.bf16.gmra.mxu0 %v176
    %v229 = vpop.f32.mrf.mxu0
    %v230 = vadd.f32 %v144, %v229
    %v231 = vpop.f32.mrf.mxu0
    %v232 = vadd.f32 %v144, %v231
    %233 = vdwg.mxu0
    %234 = vst [vmem:[#allocation2] sm:$0xff] %v188
    %235 = vst [vmem:[#allocation2 + $0x8] sm:$0xff] %v202
    %236 = vst [vmem:[#allocation2 + $0x10] sm:$0xff] %v216
    %237 = vst [vmem:[#allocation2 + $0x18] sm:$0xff] %v230
    %238 = vst [vmem:[#allocation2 + $0x20] sm:$0xff] %v190
    %239 = vst [vmem:[#allocation2 + $0x28] sm:$0xff] %v204
    %240 = vst [vmem:[#allocation2 + $0x30] sm:$0xff] %v218
    %241 = vst [vmem:[#allocation2 + $0x38] sm:$0xff] %v232
    %v242 = vld [vmem:[#allocation3] sm:$0xf]
    %v243 = vld [vmem:[#allocation3 + $0x4] sm:$0xf]
    %v246 = vunpack.c.l.b16 %v242
    %v247 = vunpack.c.l.b16 %v243
    %v248 = vpack.c.b16 %v247, %v246
    %249 = vrot.lane.b32.xlu0 %v248, 112
    %v250 = vpop.permute.xlu0 %249
    %v252 = vsel %vm174, %v250, 0
    %254 = vmatpush.bf16.msra.mxu0 0
    %255 = vmatpush.bf16.msra.mxu0 0
    %256 = vmatpush.bf16.msra.mxu0 0
    %257 = vmatpush.bf16.msra.mxu0 0
    %258 = vmatpush.bf16.msra.mxu0 0
    %259 = vmatpush.bf16.msra.mxu0 0
    %260 = vmatpush.bf16.msra.mxu0 0
    %261 = vmatpush.bf16.msra.mxu0 %v166
    %262 = vmatmul.bf16.gmra.mxu0 %v252
    %v263 = vpop.f32.mrf.mxu0
    %v264 = vadd.f32 %v141, %v263
    %v265 = vpop.f32.mrf.mxu0
    %v266 = vadd.f32 %v141, %v265
    %267 = vdwg.mxu0
    %268 = vmatpush.bf16.msra.mxu0 0
    %269 = vmatpush.bf16.msra.mxu0 0
    %270 = vmatpush.bf16.msra.mxu0 0
    %271 = vmatpush.bf16.msra.mxu0 0
    %272 = vmatpush.bf16.msra.mxu0 0
    %273 = vmatpush.bf16.msra.mxu0 0
    %274 = vmatpush.bf16.msra.mxu0 0
    %275 = vmatpush.bf16.msra.mxu0 %v167
    %276 = vmatmul.bf16.gmra.mxu0 %v252
    %v277 = vpop.f32.mrf.mxu0
    %v278 = vadd.f32 %v142, %v277
    %v279 = vpop.f32.mrf.mxu0
    %v280 = vadd.f32 %v142, %v279
    %281 = vdwg.mxu0
    %282 = vmatpush.bf16.msra.mxu0 0
    %283 = vmatpush.bf16.msra.mxu0 0
    %284 = vmatpush.bf16.msra.mxu0 0
    %285 = vmatpush.bf16.msra.mxu0 0
    %286 = vmatpush.bf16.msra.mxu0 0
    %287 = vmatpush.bf16.msra.mxu0 0
    %288 = vmatpush.bf16.msra.mxu0 0
    %289 = vmatpush.bf16.msra.mxu0 %v168
    %290 = vmatmul.bf16.gmra.mxu0 %v252
    %v291 = vpop.f32.mrf.mxu0
    %v292 = vadd.f32 %v143, %v291
    %v293 = vpop.f32.mrf.mxu0
    %v294 = vadd.f32 %v143, %v293
    %295 = vdwg.mxu0
    %296 = vmatpush.bf16.msra.mxu0 0
    %297 = vmatpush.bf16.msra.mxu0 0
    %298 = vmatpush.bf16.msra.mxu0 0
    %299 = vmatpush.bf16.msra.mxu0 0
    %300 = vmatpush.bf16.msra.mxu0 0
    %301 = vmatpush.bf16.msra.mxu0 0
    %302 = vmatpush.bf16.msra.mxu0 0
    %303 = vmatpush.bf16.msra.mxu0 %v169
    %304 = vmatmul.bf16.gmra.mxu0 %v252
    %v305 = vpop.f32.mrf.mxu0
    %v306 = vadd.f32 %v144, %v305
    %v307 = vpop.f32.mrf.mxu0
    %v308 = vadd.f32 %v144, %v307
    %309 = vdwg.mxu0
    %s310 = scalar_lea.vmem [#allocation2], 64
    %311 = vst [vmem:[%s310] sm:$0xff] %v264
    %312 = vst [vmem:[%s310 + $0x8] sm:$0xff] %v278
    %313 = vst [vmem:[%s310 + $0x10] sm:$0xff] %v292
    %314 = vst [vmem:[%s310 + $0x18] sm:$0xff] %v306
    %315 = vst [vmem:[%s310 + $0x20] sm:$0xff] %v266
    %316 = vst [vmem:[%s310 + $0x28] sm:$0xff] %v280
    %317 = vst [vmem:[%s310 + $0x30] sm:$0xff] %v294
    %318 = vst [vmem:[%s310 + $0x38] sm:$0xff] %v308
    %v319 = vld [vmem:[#allocation3] sm:$0xf]
    %v320 = vld [vmem:[#allocation3 + $0x4] sm:$0xf]
    %v323 = vunpack.c.l.b16 %v319
    %v324 = vunpack.c.l.b16 %v320
    %v325 = vpack.c.b16 %v324, %v323
    %326 = vrot.lane.b32.xlu0 %v325, 96
    %v327 = vpop.permute.xlu0 %326
    %v329 = vsel %vm174, %v327, 0
    %331 = vmatpush.bf16.msra.mxu0 0
    %332 = vmatpush.bf16.msra.mxu0 0
    %333 = vmatpush.bf16.msra.mxu0 0
    %334 = vmatpush.bf16.msra.mxu0 0
    %335 = vmatpush.bf16.msra.mxu0 0
    %336 = vmatpush.bf16.msra.mxu0 0
    %337 = vmatpush.bf16.msra.mxu0 0
    %338 = vmatpush.bf16.msra.mxu0 %v166
    %339 = vmatmul.bf16.gmra.mxu0 %v329
    %v340 = vpop.f32.mrf.mxu0
    %v341 = vadd.f32 %v141, %v340
    %v342 = vpop.f32.mrf.mxu0
    %v343 = vadd.f32 %v141, %v342
    %344 = vdwg.mxu0
    %345 = vmatpush.bf16.msra.mxu0 0
    %346 = vmatpush.bf16.msra.mxu0 0
    %347 = vmatpush.bf16.msra.mxu0 0
    %348 = vmatpush.bf16.msra.mxu0 0
    %349 = vmatpush.bf16.msra.mxu0 0
    %350 = vmatpush.bf16.msra.mxu0 0
    %351 = vmatpush.bf16.msra.mxu0 0
    %352 = vmatpush.bf16.msra.mxu0 %v167
    %353 = vmatmul.bf16.gmra.mxu0 %v329
    %v354 = vpop.f32.mrf.mxu0
    %v355 = vadd.f32 %v142, %v354
    %v356 = vpop.f32.mrf.mxu0
    %v357 = vadd.f32 %v142, %v356
    %358 = vdwg.mxu0
    %359 = vmatpush.bf16.msra.mxu0 0
    %360 = vmatpush.bf16.msra.mxu0 0
    %361 = vmatpush.bf16.msra.mxu0 0
    %362 = vmatpush.bf16.msra.mxu0 0
    %363 = vmatpush.bf16.msra.mxu0 0
    %364 = vmatpush.bf16.msra.mxu0 0
    %365 = vmatpush.bf16.msra.mxu0 0
    %366 = vmatpush.bf16.msra.mxu0 %v168
    %367 = vmatmul.bf16.gmra.mxu0 %v329
    %v368 = vpop.f32.mrf.mxu0
    %v369 = vadd.f32 %v143, %v368
    %v370 = vpop.f32.mrf.mxu0
    %v371 = vadd.f32 %v143, %v370
    %372 = vdwg.mxu0
    %373 = vmatpush.bf16.msra.mxu0 0
    %374 = vmatpush.bf16.msra.mxu0 0
    %375 = vmatpush.bf16.msra.mxu0 0
    %376 = vmatpush.bf16.msra.mxu0 0
    %377 = vmatpush.bf16.msra.mxu0 0
    %378 = vmatpush.bf16.msra.mxu0 0
    %379 = vmatpush.bf16.msra.mxu0 0
    %380 = vmatpush.bf16.msra.mxu0 %v169
    %381 = vmatmul.bf16.gmra.mxu0 %v329
    %v382 = vpop.f32.mrf.mxu0
    %v383 = vadd.f32 %v144, %v382
    %v384 = vpop.f32.mrf.mxu0
    %v385 = vadd.f32 %v144, %v384
    %386 = vdwg.mxu0
    %s387 = scalar_lea.vmem [#allocation2], 128
    %388 = vst [vmem:[%s387] sm:$0xff] %v341
    %389 = vst [vmem:[%s387 + $0x8] sm:$0xff] %v355
    %390 = vst [vmem:[%s387 + $0x10] sm:$0xff] %v369
    %391 = vst [vmem:[%s387 + $0x18] sm:$0xff] %v383
    %392 = vst [vmem:[%s387 + $0x20] sm:$0xff] %v343
    %393 = vst [vmem:[%s387 + $0x28] sm:$0xff] %v357
    %394 = vst [vmem:[%s387 + $0x30] sm:$0xff] %v371
    %395 = vst [vmem:[%s387 + $0x38] sm:$0xff] %v385
    %v396 = vld [vmem:[#allocation3] sm:$0xf]
    %v397 = vld [vmem:[#allocation3 + $0x4] sm:$0xf]
    %v400 = vunpack.c.l.b16 %v396
    %v401 = vunpack.c.l.b16 %v397
    %v402 = vpack.c.b16 %v401, %v400
    %403 = vrot.lane.b32.xlu0 %v402, 80
    %v404 = vpop.permute.xlu0 %403
    %v406 = vsel %vm174, %v404, 0
    %408 = vmatpush.bf16.msra.mxu0 0
    %409 = vmatpush.bf16.msra.mxu0 0
    %410 = vmatpush.bf16.msra.mxu0 0
    %411 = vmatpush.bf16.msra.mxu0 0
    %412 = vmatpush.bf16.msra.mxu0 0
    %413 = vmatpush.bf16.msra.mxu0 0
    %414 = vmatpush.bf16.msra.mxu0 0
    %415 = vmatpush.bf16.msra.mxu0 %v166
    %416 = vmatmul.bf16.gmra.mxu0 %v406
    %v417 = vpop.f32.mrf.mxu0
    %v418 = vadd.f32 %v141, %v417
    %v419 = vpop.f32.mrf.mxu0
    %v420 = vadd.f32 %v141, %v419
    %421 = vdwg.mxu0
    %422 = vmatpush.bf16.msra.mxu0 0
    %423 = vmatpush.bf16.msra.mxu0 0
    %424 = vmatpush.bf16.msra.mxu0 0
    %425 = vmatpush.bf16.msra.mxu0 0
    %426 = vmatpush.bf16.msra.mxu0 0
    %427 = vmatpush.bf16.msra.mxu0 0
    %428 = vmatpush.bf16.msra.mxu0 0
    %429 = vmatpush.bf16.msra.mxu0 %v167
    %430 = vmatmul.bf16.gmra.mxu0 %v406
    %v431 = vpop.f32.mrf.mxu0
    %v432 = vadd.f32 %v142, %v431
    %v433 = vpop.f32.mrf.mxu0
    %v434 = vadd.f32 %v142, %v433
    %435 = vdwg.mxu0
    %436 = vmatpush.bf16.msra.mxu0 0
    %437 = vmatpush.bf16.msra.mxu0 0
    %438 = vmatpush.bf16.msra.mxu0 0
    %439 = vmatpush.bf16.msra.mxu0 0
    %440 = vmatpush.bf16.msra.mxu0 0
    %441 = vmatpush.bf16.msra.mxu0 0
    %442 = vmatpush.bf16.msra.mxu0 0
    %443 = vmatpush.bf16.msra.mxu0 %v168
    %444 = vmatmul.bf16.gmra.mxu0 %v406
    %v445 = vpop.f32.mrf.mxu0
    %v446 = vadd.f32 %v143, %v445
    %v447 = vpop.f32.mrf.mxu0
    %v448 = vadd.f32 %v143, %v447
    %449 = vdwg.mxu0
    %450 = vmatpush.bf16.msra.mxu0 0
    %451 = vmatpush.bf16.msra.mxu0 0
    %452 = vmatpush.bf16.msra.mxu0 0
    %453 = vmatpush.bf16.msra.mxu0 0
    %454 = vmatpush.bf16.msra.mxu0 0
    %455 = vmatpush.bf16.msra.mxu0 0
    %456 = vmatpush.bf16.msra.mxu0 0
    %457 = vmatpush.bf16.msra.mxu0 %v169
    %458 = vmatmul.bf16.gmra.mxu0 %v406
    %v459 = vpop.f32.mrf.mxu0
    %v460 = vadd.f32 %v144, %v459
    %v461 = vpop.f32.mrf.mxu0
    %v462 = vadd.f32 %v144, %v461
    %463 = vdwg.mxu0
    %s464 = scalar_lea.vmem [#allocation2], 192
    %465 = vst [vmem:[%s464] sm:$0xff] %v418
    %466 = vst [vmem:[%s464 + $0x8] sm:$0xff] %v432
    %467 = vst [vmem:[%s464 + $0x10] sm:$0xff] %v446
    %468 = vst [vmem:[%s464 + $0x18] sm:$0xff] %v460
    %469 = vst [vmem:[%s464 + $0x20] sm:$0xff] %v420
    %470 = vst [vmem:[%s464 + $0x28] sm:$0xff] %v434
    %471 = vst [vmem:[%s464 + $0x30] sm:$0xff] %v448
    %472 = vst [vmem:[%s464 + $0x38] sm:$0xff] %v462
    %v473 = vld [vmem:[#allocation3] sm:$0xf]
    %v474 = vld [vmem:[#allocation3 + $0x4] sm:$0xf]
    %v477 = vunpack.c.l.b16 %v473
    %v478 = vunpack.c.l.b16 %v474
    %v479 = vpack.c.b16 %v478, %v477
    %480 = vrot.lane.b32.xlu0 %v479, 64
    %v481 = vpop.permute.xlu0 %480
    %v483 = vsel %vm174, %v481, 0
    %485 = vmatpush.bf16.msra.mxu0 0
    %486 = vmatpush.bf16.msra.mxu0 0
    %487 = vmatpush.bf16.msra.mxu0 0
    %488 = vmatpush.bf16.msra.mxu0 0
    %489 = vmatpush.bf16.msra.mxu0 0
    %490 = vmatpush.bf16.msra.mxu0 0
    %491 = vmatpush.bf16.msra.mxu0 0
    %492 = vmatpush.bf16.msra.mxu0 %v166
    %493 = vmatmul.bf16.gmra.mxu0 %v483
    %v494 = vpop.f32.mrf.mxu0
    %v495 = vadd.f32 %v141, %v494
    %v496 = vpop.f32.mrf.mxu0
    %v497 = vadd.f32 %v141, %v496
    %498 = vdwg.mxu0
    %499 = vmatpush.bf16.msra.mxu0 0
    %500 = vmatpush.bf16.msra.mxu0 0
    %501 = vmatpush.bf16.msra.mxu0 0
    %502 = vmatpush.bf16.msra.mxu0 0
    %503 = vmatpush.bf16.msra.mxu0 0
    %504 = vmatpush.bf16.msra.mxu0 0
    %505 = vmatpush.bf16.msra.mxu0 0
    %506 = vmatpush.bf16.msra.mxu0 %v167
    %507 = vmatmul.bf16.gmra.mxu0 %v483
    %v508 = vpop.f32.mrf.mxu0
    %v509 = vadd.f32 %v142, %v508
    %v510 = vpop.f32.mrf.mxu0
    %v511 = vadd.f32 %v142, %v510
    %512 = vdwg.mxu0
    %513 = vmatpush.bf16.msra.mxu0 0
    %514 = vmatpush.bf16.msra.mxu0 0
    %515 = vmatpush.bf16.msra.mxu0 0
    %516 = vmatpush.bf16.msra.mxu0 0
    %517 = vmatpush.bf16.msra.mxu0 0
    %518 = vmatpush.bf16.msra.mxu0 0
    %519 = vmatpush.bf16.msra.mxu0 0
    %520 = vmatpush.bf16.msra.mxu0 %v168
    %521 = vmatmul.bf16.gmra.mxu0 %v483
    %v522 = vpop.f32.mrf.mxu0
    %v523 = vadd.f32 %v143, %v522
    %v524 = vpop.f32.mrf.mxu0
    %v525 = vadd.f32 %v143, %v524
    %526 = vdwg.mxu0
    %527 = vmatpush.bf16.msra.mxu0 0
    %528 = vmatpush.bf16.msra.mxu0 0
    %529 = vmatpush.bf16.msra.mxu0 0
    %530 = vmatpush.bf16.msra.mxu0 0
    %531 = vmatpush.bf16.msra.mxu0 0
    %532 = vmatpush.bf16.msra.mxu0 0
    %533 = vmatpush.bf16.msra.mxu0 0
    %534 = vmatpush.bf16.msra.mxu0 %v169
    %535 = vmatmul.bf16.gmra.mxu0 %v483
    %v536 = vpop.f32.mrf.mxu0
    %v537 = vadd.f32 %v144, %v536
    %v538 = vpop.f32.mrf.mxu0
    %v539 = vadd.f32 %v144, %v538
    %540 = vdwg.mxu0
    %s541 = scalar_lea.vmem [#allocation2], 256
    %542 = vst [vmem:[%s541] sm:$0xff] %v495
    %543 = vst [vmem:[%s541 + $0x8] sm:$0xff] %v509
    %544 = vst [vmem:[%s541 + $0x10] sm:$0xff] %v523
    %545 = vst [vmem:[%s541 + $0x18] sm:$0xff] %v537
    %546 = vst [vmem:[%s541 + $0x20] sm:$0xff] %v497
    %547 = vst [vmem:[%s541 + $0x28] sm:$0xff] %v511
    %548 = vst [vmem:[%s541 + $0x30] sm:$0xff] %v525
    %549 = vst [vmem:[%s541 + $0x38] sm:$0xff] %v539
    %v550 = vld [vmem:[#allocation3] sm:$0xf]
    %v551 = vld [vmem:[#allocation3 + $0x4] sm:$0xf]
    %v554 = vunpack.c.l.b16 %v550
    %v555 = vunpack.c.l.b16 %v551
    %v556 = vpack.c.b16 %v555, %v554
    %557 = vrot.lane.b32.xlu0 %v556, 48
    %v558 = vpop.permute.xlu0 %557
    %v560 = vsel %vm174, %v558, 0
    %562 = vmatpush.bf16.msra.mxu0 0
    %563 = vmatpush.bf16.msra.mxu0 0
    %564 = vmatpush.bf16.msra.mxu0 0
    %565 = vmatpush.bf16.msra.mxu0 0
    %566 = vmatpush.bf16.msra.mxu0 0
    %567 = vmatpush.bf16.msra.mxu0 0
    %568 = vmatpush.bf16.msra.mxu0 0
    %569 = vmatpush.bf16.msra.mxu0 %v166
    %570 = vmatmul.bf16.gmra.mxu0 %v560
    %v571 = vpop.f32.mrf.mxu0
    %v572 = vadd.f32 %v141, %v571
    %v573 = vpop.f32.mrf.mxu0
    %v574 = vadd.f32 %v141, %v573
    %575 = vdwg.mxu0
    %576 = vmatpush.bf16.msra.mxu0 0
    %577 = vmatpush.bf16.msra.mxu0 0
    %578 = vmatpush.bf16.msra.mxu0 0
    %579 = vmatpush.bf16.msra.mxu0 0
    %580 = vmatpush.bf16.msra.mxu0 0
    %581 = vmatpush.bf16.msra.mxu0 0
    %582 = vmatpush.bf16.msra.mxu0 0
    %583 = vmatpush.bf16.msra.mxu0 %v167
    %584 = vmatmul.bf16.gmra.mxu0 %v560
    %v585 = vpop.f32.mrf.mxu0
    %v586 = vadd.f32 %v142, %v585
    %v587 = vpop.f32.mrf.mxu0
    %v588 = vadd.f32 %v142, %v587
    %589 = vdwg.mxu0
    %590 = vmatpush.bf16.msra.mxu0 0
    %591 = vmatpush.bf16.msra.mxu0 0
    %592 = vmatpush.bf16.msra.mxu0 0
    %593 = vmatpush.bf16.msra.mxu0 0
    %594 = vmatpush.bf16.msra.mxu0 0
    %595 = vmatpush.bf16.msra.mxu0 0
    %596 = vmatpush.bf16.msra.mxu0 0
    %597 = vmatpush.bf16.msra.mxu0 %v168
    %598 = vmatmul.bf16.gmra.mxu0 %v560
    %v599 = vpop.f32.mrf.mxu0
    %v600 = vadd.f32 %v143, %v599
    %v601 = vpop.f32.mrf.mxu0
    %v602 = vadd.f32 %v143, %v601
    %603 = vdwg.mxu0
    %604 = vmatpush.bf16.msra.mxu0 0
    %605 = vmatpush.bf16.msra.mxu0 0
    %606 = vmatpush.bf16.msra.mxu0 0
    %607 = vmatpush.bf16.msra.mxu0 0
    %608 = vmatpush.bf16.msra.mxu0 0
    %609 = vmatpush.bf16.msra.mxu0 0
    %610 = vmatpush.bf16.msra.mxu0 0
    %611 = vmatpush.bf16.msra.mxu0 %v169
    %612 = vmatmul.bf16.gmra.mxu0 %v560
    %v613 = vpop.f32.mrf.mxu0
    %v614 = vadd.f32 %v144, %v613
    %v615 = vpop.f32.mrf.mxu0
    %v616 = vadd.f32 %v144, %v615
    %617 = vdwg.mxu0
    %s618 = scalar_lea.vmem [#allocation2], 320
    %619 = vst [vmem:[%s618] sm:$0xff] %v572
    %620 = vst [vmem:[%s618 + $0x8] sm:$0xff] %v586
    %621 = vst [vmem:[%s618 + $0x10] sm:$0xff] %v600
    %622 = vst [vmem:[%s618 + $0x18] sm:$0xff] %v614
    %623 = vst [vmem:[%s618 + $0x20] sm:$0xff] %v574
    %624 = vst [vmem:[%s618 + $0x28] sm:$0xff] %v588
    %625 = vst [vmem:[%s618 + $0x30] sm:$0xff] %v602
    %626 = vst [vmem:[%s618 + $0x38] sm:$0xff] %v616
    %v627 = vld [vmem:[#allocation3] sm:$0xf]
    %v628 = vld [vmem:[#allocation3 + $0x4] sm:$0xf]
    %v631 = vunpack.c.l.b16 %v627
    %v632 = vunpack.c.l.b16 %v628
    %v633 = vpack.c.b16 %v632, %v631
    %634 = vrot.lane.b32.xlu0 %v633, 32
    %v635 = vpop.permute.xlu0 %634
    %v637 = vsel %vm174, %v635, 0
    %639 = vmatpush.bf16.msra.mxu0 0
    %640 = vmatpush.bf16.msra.mxu0 0
    %641 = vmatpush.bf16.msra.mxu0 0
    %642 = vmatpush.bf16.msra.mxu0 0
    %643 = vmatpush.bf16.msra.mxu0 0
    %644 = vmatpush.bf16.msra.mxu0 0
    %645 = vmatpush.bf16.msra.mxu0 0
    %646 = vmatpush.bf16.msra.mxu0 %v166
    %647 = vmatmul.bf16.gmra.mxu0 %v637
    %v648 = vpop.f32.mrf.mxu0
    %v649 = vadd.f32 %v141, %v648
    %v650 = vpop.f32.mrf.mxu0
    %v651 = vadd.f32 %v141, %v650
    %652 = vdwg.mxu0
    %653 = vmatpush.bf16.msra.mxu0 0
    %654 = vmatpush.bf16.msra.mxu0 0
    %655 = vmatpush.bf16.msra.mxu0 0
    %656 = vmatpush.bf16.msra.mxu0 0
    %657 = vmatpush.bf16.msra.mxu0 0
    %658 = vmatpush.bf16.msra.mxu0 0
    %659 = vmatpush.bf16.msra.mxu0 0
    %660 = vmatpush.bf16.msra.mxu0 %v167
    %661 = vmatmul.bf16.gmra.mxu0 %v637
    %v662 = vpop.f32.mrf.mxu0
    %v663 = vadd.f32 %v142, %v662
    %v664 = vpop.f32.mrf.mxu0
    %v665 = vadd.f32 %v142, %v664
    %666 = vdwg.mxu0
    %667 = vmatpush.bf16.msra.mxu0 0
    %668 = vmatpush.bf16.msra.mxu0 0
    %669 = vmatpush.bf16.msra.mxu0 0
    %670 = vmatpush.bf16.msra.mxu0 0
    %671 = vmatpush.bf16.msra.mxu0 0
    %672 = vmatpush.bf16.msra.mxu0 0
    %673 = vmatpush.bf16.msra.mxu0 0
    %674 = vmatpush.bf16.msra.mxu0 %v168
    %675 = vmatmul.bf16.gmra.mxu0 %v637
    %v676 = vpop.f32.mrf.mxu0
    %v677 = vadd.f32 %v143, %v676
    %v678 = vpop.f32.mrf.mxu0
    %v679 = vadd.f32 %v143, %v678
    %680 = vdwg.mxu0
    %681 = vmatpush.bf16.msra.mxu0 0
    %682 = vmatpush.bf16.msra.mxu0 0
    %683 = vmatpush.bf16.msra.mxu0 0
    %684 = vmatpush.bf16.msra.mxu0 0
    %685 = vmatpush.bf16.msra.mxu0 0
    %686 = vmatpush.bf16.msra.mxu0 0
    %687 = vmatpush.bf16.msra.mxu0 0
    %688 = vmatpush.bf16.msra.mxu0 %v169
    %689 = vmatmul.bf16.gmra.mxu0 %v637
    %v690 = vpop.f32.mrf.mxu0
    %v691 = vadd.f32 %v144, %v690
    %v692 = vpop.f32.mrf.mxu0
    %v693 = vadd.f32 %v144, %v692
    %694 = vdwg.mxu0
    %s695 = scalar_lea.vmem [#allocation2], 384
    %696 = vst [vmem:[%s695] sm:$0xff] %v649
    %697 = vst [vmem:[%s695 + $0x8] sm:$0xff] %v663
    %698 = vst [vmem:[%s695 + $0x10] sm:$0xff] %v677
    %699 = vst [vmem:[%s695 + $0x18] sm:$0xff] %v691
    %700 = vst [vmem:[%s695 + $0x20] sm:$0xff] %v651
    %701 = vst [vmem:[%s695 + $0x28] sm:$0xff] %v665
    %702 = vst [vmem:[%s695 + $0x30] sm:$0xff] %v679
    %703 = vst [vmem:[%s695 + $0x38] sm:$0xff] %v693
    %v704 = vld [vmem:[#allocation3] sm:$0xf]
    %v705 = vld [vmem:[#allocation3 + $0x4] sm:$0xf]
    %v708 = vunpack.c.l.b16 %v704
    %v709 = vunpack.c.l.b16 %v705
    %v710 = vpack.c.b16 %v709, %v708
    %711 = vrot.lane.b32.xlu0 %v710, 16
    %v712 = vpop.permute.xlu0 %711
    %v714 = vsel %vm174, %v712, 0
    %716 = vmatpush.bf16.msra.mxu0 0
    %717 = vmatpush.bf16.msra.mxu0 0
    %718 = vmatpush.bf16.msra.mxu0 0
    %719 = vmatpush.bf16.msra.mxu0 0
    %720 = vmatpush.bf16.msra.mxu0 0
    %721 = vmatpush.bf16.msra.mxu0 0
    %722 = vmatpush.bf16.msra.mxu0 0
    %723 = vmatpush.bf16.msra.mxu0 %v166
    %724 = vmatmul.bf16.gmra.mxu0 %v714
    %v725 = vpop.f32.mrf.mxu0
    %v726 = vadd.f32 %v141, %v725
    %v727 = vpop.f32.mrf.mxu0
    %v728 = vadd.f32 %v141, %v727
    %729 = vdwg.mxu0
    %730 = vmatpush.bf16.msra.mxu0 0
    %731 = vmatpush.bf16.msra.mxu0 0
    %732 = vmatpush.bf16.msra.mxu0 0
    %733 = vmatpush.bf16.msra.mxu0 0
    %734 = vmatpush.bf16.msra.mxu0 0
    %735 = vmatpush.bf16.msra.mxu0 0
    %736 = vmatpush.bf16.msra.mxu0 0
    %737 = vmatpush.bf16.msra.mxu0 %v167
    %738 = vmatmul.bf16.gmra.mxu0 %v714
    %v739 = vpop.f32.mrf.mxu0
    %v740 = vadd.f32 %v142, %v739
    %v741 = vpop.f32.mrf.mxu0
    %v742 = vadd.f32 %v142, %v741
    %743 = vdwg.mxu0
    %744 = vmatpush.bf16.msra.mxu0 0
    %745 = vmatpush.bf16.msra.mxu0 0
    %746 = vmatpush.bf16.msra.mxu0 0
    %747 = vmatpush.bf16.msra.mxu0 0
    %748 = vmatpush.bf16.msra.mxu0 0
    %749 = vmatpush.bf16.msra.mxu0 0
    %750 = vmatpush.bf16.msra.mxu0 0
    %751 = vmatpush.bf16.msra.mxu0 %v168
    %752 = vmatmul.bf16.gmra.mxu0 %v714
    %v753 = vpop.f32.mrf.mxu0
    %v754 = vadd.f32 %v143, %v753
    %v755 = vpop.f32.mrf.mxu0
    %v756 = vadd.f32 %v143, %v755
    %757 = vdwg.mxu0
    %758 = vmatpush.bf16.msra.mxu0 0
    %759 = vmatpush.bf16.msra.mxu0 0
    %760 = vmatpush.bf16.msra.mxu0 0
    %761 = vmatpush.bf16.msra.mxu0 0
    %762 = vmatpush.bf16.msra.mxu0 0
    %763 = vmatpush.bf16.msra.mxu0 0
    %764 = vmatpush.bf16.msra.mxu0 0
    %765 = vmatpush.bf16.msra.mxu0 %v169
    %766 = vmatmul.bf16.gmra.mxu0 %v714
    %v767 = vpop.f32.mrf.mxu0
    %v768 = vadd.f32 %v144, %v767
    %v769 = vpop.f32.mrf.mxu0
    %v770 = vadd.f32 %v144, %v769
    %771 = vdwg.mxu0
    %s772 = scalar_lea.vmem [#allocation2], 448
    %773 = vst [vmem:[%s772] sm:$0xff] %v726
    %774 = vst [vmem:[%s772 + $0x8] sm:$0xff] %v740
    %775 = vst [vmem:[%s772 + $0x10] sm:$0xff] %v754
    %776 = vst [vmem:[%s772 + $0x18] sm:$0xff] %v768
    %777 = vst [vmem:[%s772 + $0x20] sm:$0xff] %v728
    %778 = vst [vmem:[%s772 + $0x28] sm:$0xff] %v742
    %779 = vst [vmem:[%s772 + $0x30] sm:$0xff] %v756
    %780 = vst [vmem:[%s772 + $0x38] sm:$0xff] %v770
    %v781 = vld [vmem:[#allocation2] sm:$0xff]
    %v782 = vld [vmem:[#allocation2 + $0x8] sm:$0xff]
    %v783 = vld [vmem:[#allocation2 + $0x10] sm:$0xff]
    %v784 = vld [vmem:[#allocation2 + $0x18] sm:$0xff]
    %v785 = vld [vmem:[#allocation2 + $0x20] sm:$0xff]
    %v786 = vld [vmem:[#allocation2 + $0x28] sm:$0xff]
    %v787 = vld [vmem:[#allocation2 + $0x30] sm:$0xff]
    %v788 = vld [vmem:[#allocation2 + $0x38] sm:$0xff]
    %v821 = vunpack.c.l.b16 %v105
    %v822 = vunpack.c.h.b16 %v105
    %v823 = vunpack.c.l.b16 %v106
    %v824 = vunpack.c.h.b16 %v106
    %v825 = vunpack.c.l.b16 %v107
    %v826 = vunpack.c.h.b16 %v107
    %v827 = vunpack.c.l.b16 %v108
    %v828 = vunpack.c.h.b16 %v108
    %v829 = vunpack.c.l.b16 %v109
    %v830 = vunpack.c.h.b16 %v109
    %v831 = vunpack.c.l.b16 %v110
    %v832 = vunpack.c.h.b16 %v110
    %v833 = vunpack.c.l.b16 %v111
    %v834 = vunpack.c.h.b16 %v111
    %v835 = vunpack.c.l.b16 %v112
    %v836 = vunpack.c.h.b16 %v112
    %v837 = vunpack.c.l.b16 %v113
    %v838 = vunpack.c.h.b16 %v113
    %v839 = vunpack.c.l.b16 %v114
    %v840 = vunpack.c.h.b16 %v114
    %v841 = vunpack.c.l.b16 %v115
    %v842 = vunpack.c.h.b16 %v115
    %v843 = vunpack.c.l.b16 %v116
    %v844 = vunpack.c.h.b16 %v116
    %v845 = vunpack.c.l.b16 %v117
    %v846 = vunpack.c.h.b16 %v117
    %v847 = vunpack.c.l.b16 %v118
    %v848 = vunpack.c.h.b16 %v118
    %v849 = vunpack.c.l.b16 %v119
    %v850 = vunpack.c.h.b16 %v119
    %v851 = vunpack.c.l.b16 %v120
    %v852 = vunpack.c.h.b16 %v120
    %v853 = vunpack.c.l.b16 %v121
    %v854 = vunpack.c.h.b16 %v121
    %v855 = vunpack.c.l.b16 %v122
    %v856 = vunpack.c.h.b16 %v122
    %v857 = vunpack.c.l.b16 %v123
    %v858 = vunpack.c.h.b16 %v123
    %v859 = vunpack.c.l.b16 %v124
    %v860 = vunpack.c.h.b16 %v124
    %v861 = vunpack.c.l.b16 %v125
    %v862 = vunpack.c.h.b16 %v125
    %v863 = vunpack.c.l.b16 %v126
    %v864 = vunpack.c.h.b16 %v126
    %v865 = vunpack.c.l.b16 %v127
    %v866 = vunpack.c.h.b16 %v127
    %v867 = vunpack.c.l.b16 %v128
    %v868 = vunpack.c.h.b16 %v128
    %v869 = vunpack.c.l.b16 %v129
    %v870 = vunpack.c.h.b16 %v129
    %v871 = vunpack.c.l.b16 %v130
    %v872 = vunpack.c.h.b16 %v130
    %v873 = vunpack.c.l.b16 %v131
    %v874 = vunpack.c.h.b16 %v131
    %v875 = vunpack.c.l.b16 %v132
    %v876 = vunpack.c.h.b16 %v132
    %v877 = vunpack.c.l.b16 %v133
    %v878 = vunpack.c.h.b16 %v133
    %v879 = vunpack.c.l.b16 %v134
    %v880 = vunpack.c.h.b16 %v134
    %v881 = vunpack.c.l.b16 %v135
    %v882 = vunpack.c.h.b16 %v135
    %v883 = vunpack.c.l.b16 %v136
    %v884 = vunpack.c.h.b16 %v136
    %v885 = vpack.c.b16 %v825, %v821
    %v886 = vpack.c.b16 %v826, %v822
    %v887 = vpack.c.b16 %v827, %v823
    %v888 = vpack.c.b16 %v828, %v824
    %v889 = vpack.c.b16 %v833, %v829
    %v890 = vpack.c.b16 %v834, %v830
    %v891 = vpack.c.b16 %v835, %v831
    %v892 = vpack.c.b16 %v836, %v832
    %v893 = vpack.c.b16 %v841, %v837
    %v894 = vpack.c.b16 %v842, %v838
    %v895 = vpack.c.b16 %v843, %v839
    %v896 = vpack.c.b16 %v844, %v840
    %v897 = vpack.c.b16 %v849, %v845
    %v898 = vpack.c.b16 %v850, %v846
    %v899 = vpack.c.b16 %v851, %v847
    %v900 = vpack.c.b16 %v852, %v848
    %v901 = vpack.c.b16 %v857, %v853
    %v902 = vpack.c.b16 %v858, %v854
    %v903 = vpack.c.b16 %v859, %v855
    %v904 = vpack.c.b16 %v860, %v856
    %v905 = vpack.c.b16 %v865, %v861
    %v906 = vpack.c.b16 %v866, %v862
    %v907 = vpack.c.b16 %v867, %v863
    %v908 = vpack.c.b16 %v868, %v864
    %v909 = vpack.c.b16 %v873, %v869
    %v910 = vpack.c.b16 %v874, %v870
    %v911 = vpack.c.b16 %v875, %v871
    %v912 = vpack.c.b16 %v876, %v872
    %v913 = vpack.c.b16 %v881, %v877
    %v914 = vpack.c.b16 %v882, %v878
    %v915 = vpack.c.b16 %v883, %v879
    %v916 = vpack.c.b16 %v884, %v880
    %949 = vmatpush.bf16.msra.mxu0 %v913
    %950 = vmatpush.bf16.msra.mxu0 %v909
    %951 = vmatpush.bf16.msra.mxu0 %v905
    %952 = vmatpush.bf16.msra.mxu0 %v901
    %953 = vmatpush.bf16.msra.mxu0 %v897
    %954 = vmatpush.bf16.msra.mxu0 %v893
    %955 = vmatpush.bf16.msra.mxu0 %v889
    %956 = vmatpush.bf16.msra.mxu0 %v885
    %957 = vmatmul.bf16.gmra.mxu0 0
    %v958 = vpop.f32.mrf.mxu0
    %v959 = vadd.f32 0.0, %v958
    %v960 = vpop.f32.mrf.mxu0
    %v961 = vadd.f32 0.0, %v960
    %962 = vdwg.mxu0
    %963 = vmatpush.bf16.msra.mxu0 %v914
    %964 = vmatpush.bf16.msra.mxu0 %v910
    %965 = vmatpush.bf16.msra.mxu0 %v906
    %966 = vmatpush.bf16.msra.mxu0 %v902
    %967 = vmatpush.bf16.msra.mxu0 %v898
    %968 = vmatpush.bf16.msra.mxu0 %v894
    %969 = vmatpush.bf16.msra.mxu0 %v890
    %970 = vmatpush.bf16.msra.mxu0 %v886
    %971 = vmatmul.bf16.gmra.mxu0 0
    %v972 = vpop.f32.mrf.mxu0
    %v973 = vadd.f32 0.0, %v972
    %v974 = vpop.f32.mrf.mxu0
    %v975 = vadd.f32 0.0, %v974
    %976 = vdwg.mxu0
    %977 = vmatpush.bf16.msra.mxu0 %v915
    %978 = vmatpush.bf16.msra.mxu0 %v911
    %979 = vmatpush.bf16.msra.mxu0 %v907
    %980 = vmatpush.bf16.msra.mxu0 %v903
    %981 = vmatpush.bf16.msra.mxu0 %v899
    %982 = vmatpush.bf16.msra.mxu0 %v895
    %983 = vmatpush.bf16.msra.mxu0 %v891
    %984 = vmatpush.bf16.msra.mxu0 %v887
    %985 = vmatmul.bf16.gmra.mxu0 0
    %v986 = vpop.f32.mrf.mxu0
    %v987 = vadd.f32 0.0, %v986
    %v988 = vpop.f32.mrf.mxu0
    %v989 = vadd.f32 0.0, %v988
    %990 = vdwg.mxu0
    %991 = vmatpush.bf16.msra.mxu0 %v916
    %992 = vmatpush.bf16.msra.mxu0 %v912
    %993 = vmatpush.bf16.msra.mxu0 %v908
    %994 = vmatpush.bf16.msra.mxu0 %v904
    %995 = vmatpush.bf16.msra.mxu0 %v900
    %996 = vmatpush.bf16.msra.mxu0 %v896
    %997 = vmatpush.bf16.msra.mxu0 %v892
    %998 = vmatpush.bf16.msra.mxu0 %v888
    %999 = vmatmul.bf16.gmra.mxu0 0
    %v1000 = vpop.f32.mrf.mxu0
    %v1001 = vadd.f32 0.0, %v1000
    %v1002 = vpop.f32.mrf.mxu0
    %v1003 = vadd.f32 0.0, %v1002
    %1004 = vdwg.mxu0
    %v1005 = vadd.f32 %v781, %v959
    %v1006 = vadd.f32 %v782, %v973
    %v1007 = vadd.f32 %v783, %v987
    %v1008 = vadd.f32 %v784, %v1001
    %v1009 = vadd.f32 %v785, %v961
    %v1010 = vadd.f32 %v786, %v975
    %v1011 = vadd.f32 %v787, %v989
    %v1012 = vadd.f32 %v788, %v1003
    %v1013 = vxor.u32 %v1005, 2147483648
    %v1014 = vxor.u32 %v1009, 2147483648
    %v1015 = vmul.f32 %v1013, 1.442695
    %v1016 = vpow.pop %v1015
    %v1017 = vmul.f32 %v1014, 1.442695
    %v1018 = vpow.pop %v1017
    %v1019 = vadd.f32 %v1016, 1.0
    %v1020 = vadd.f32 %v1018, 1.0
    %v1021 = vrcp.pop %v1019
    %v1022 = vmul.f32 %v1019, %v1021
    %v1023 = vsub.f32 1.0, %v1022
    %v1024 = vmul.f32 %v1021, %v1023
    %v1025 = vadd.f32 %v1021, %v1024
    %vm1026 = vweird.f32 %v1019
    %vm1027 = vweird.f32 %v1021
    %vm1028 = vmor %vm1026, %vm1027
    %v1029 = vsel %vm1028, %v1021, %v1025
    %v1030 = vand.u32 2147483647, %v1019
    %vm1031 = vcmp.eq.f32.partialorder %v1030, 8.507059e+37
    %v1032 = vand.u32 %v1019, 2147483648
    %v1033 = vor.u32 1.1754944e-38, %v1032
    %v1034 = vsel %vm1031, %v1033, %v1029
    %v1035 = vmul.f32 1.0, %v1034
    %v1036 = vrcp.pop %v1020
    %v1037 = vmul.f32 %v1020, %v1036
    %v1038 = vsub.f32 1.0, %v1037
    %v1039 = vmul.f32 %v1036, %v1038
    %v1040 = vadd.f32 %v1036, %v1039
    %vm1041 = vweird.f32 %v1020
    %vm1042 = vweird.f32 %v1036
    %vm1043 = vmor %vm1041, %vm1042
    %v1044 = vsel %vm1043, %v1036, %v1040
    %v1045 = vand.u32 2147483647, %v1020
    %vm1046 = vcmp.eq.f32.partialorder %v1045, 8.507059e+37
    %v1047 = vand.u32 %v1020, 2147483648
    %v1048 = vor.u32 1.1754944e-38, %v1047
    %v1049 = vsel %vm1046, %v1048, %v1044
    %v1050 = vmul.f32 1.0, %v1049
    %v1051 = vxor.u32 %v1006, 2147483648
    %v1052 = vxor.u32 %v1010, 2147483648
    %v1053 = vmul.f32 %v1051, 1.442695
    %v1054 = vpow.pop %v1053
    %v1055 = vmul.f32 %v1052, 1.442695
    %v1056 = vpow.pop %v1055
    %v1057 = vadd.f32 %v1054, 1.0
    %v1058 = vadd.f32 %v1056, 1.0
    %v1059 = vrcp.pop %v1057
    %v1060 = vmul.f32 %v1057, %v1059
    %v1061 = vsub.f32 1.0, %v1060
    %v1062 = vmul.f32 %v1059, %v1061
    %v1063 = vadd.f32 %v1059, %v1062
    %vm1064 = vweird.f32 %v1057
    %vm1065 = vweird.f32 %v1059
    %vm1066 = vmor %vm1064, %vm1065
    %v1067 = vsel %vm1066, %v1059, %v1063
    %v1068 = vand.u32 2147483647, %v1057
    %vm1069 = vcmp.eq.f32.partialorder %v1068, 8.507059e+37
    %v1070 = vand.u32 %v1057, 2147483648
    %v1071 = vor.u32 1.1754944e-38, %v1070
    %v1072 = vsel %vm1069, %v1071, %v1067
    %v1073 = vmul.f32 1.0, %v1072
    %v1074 = vrcp.pop %v1058
    %v1075 = vmul.f32 %v1058, %v1074
    %v1076 = vsub.f32 1.0, %v1075
    %v1077 = vmul.f32 %v1074, %v1076
    %v1078 = vadd.f32 %v1074, %v1077
    %vm1079 = vweird.f32 %v1058
    %vm1080 = vweird.f32 %v1074
    %vm1081 = vmor %vm1079, %vm1080
    %v1082 = vsel %vm1081, %v1074, %v1078
    %v1083 = vand.u32 2147483647, %v1058
    %vm1084 = vcmp.eq.f32.partialorder %v1083, 8.507059e+37
    %v1085 = vand.u32 %v1058, 2147483648
    %v1086 = vor.u32 1.1754944e-38, %v1085
    %v1087 = vsel %vm1084, %v1086, %v1082
    %v1088 = vmul.f32 1.0, %v1087
    %v1089 = vtanh.pop %v1007
    %v1090 = vtanh.pop %v1011
    %v1091 = vxor.u32 %v1008, 2147483648
    %v1092 = vxor.u32 %v1012, 2147483648
    %v1093 = vmul.f32 %v1091, 1.442695
    %v1094 = vpow.pop %v1093
    %v1095 = vmul.f32 %v1092, 1.442695
    %v1096 = vpow.pop %v1095
    %v1097 = vadd.f32 %v1094, 1.0
    %v1098 = vadd.f32 %v1096, 1.0
    %v1099 = vrcp.pop %v1097
    %v1100 = vmul.f32 %v1097, %v1099
    %v1101 = vsub.f32 1.0, %v1100
    %v1102 = vmul.f32 %v1099, %v1101
    %v1103 = vadd.f32 %v1099, %v1102
    %vm1104 = vweird.f32 %v1097
    %vm1105 = vweird.f32 %v1099
    %vm1106 = vmor %vm1104, %vm1105
    %v1107 = vsel %vm1106, %v1099, %v1103
    %v1108 = vand.u32 2147483647, %v1097
    %vm1109 = vcmp.eq.f32.partialorder %v1108, 8.507059e+37
    %v1110 = vand.u32 %v1097, 2147483648
    %v1111 = vor.u32 1.1754944e-38, %v1110
    %v1112 = vsel %vm1109, %v1111, %v1107
    %v1113 = vmul.f32 1.0, %v1112
    %v1114 = vrcp.pop %v1098
    %v1115 = vmul.f32 %v1098, %v1114
    %v1116 = vsub.f32 1.0, %v1115
    %v1117 = vmul.f32 %v1114, %v1116
    %v1118 = vadd.f32 %v1114, %v1117
    %vm1119 = vweird.f32 %v1098
    %vm1120 = vweird.f32 %v1114
    %vm1121 = vmor %vm1119, %vm1120
    %v1122 = vsel %vm1121, %v1114, %v1118
    %v1123 = vand.u32 2147483647, %v1098
    %vm1124 = vcmp.eq.f32.partialorder %v1123, 8.507059e+37
    %v1125 = vand.u32 %v1098, 2147483648
    %v1126 = vor.u32 1.1754944e-38, %v1125
    %v1127 = vsel %vm1124, %v1126, %v1122
    %v1128 = vmul.f32 1.0, %v1127
    %v1129 = vmul.f32 %v1073, 0.0
    %v1130 = vmul.f32 %v1088, 0.0
    %v1131 = vmul.f32 %v1035, %v1089
    %v1132 = vmul.f32 %v1050, %v1090
    %v1133 = vadd.f32 %v1129, %v1131
    %v1134 = vadd.f32 %v1130, %v1132
    %v1135 = vtanh.pop %v1133
    %v1136 = vtanh.pop %v1134
    %v1137 = vmul.f32 %v1113, %v1135
    %v1138 = vmul.f32 %v1128, %v1136
    %v1139 = vld [vmem:[%s310] sm:$0xff]
    %v1140 = vld [vmem:[%s310 + $0x8] sm:$0xff]
    %v1141 = vld [vmem:[%s310 + $0x10] sm:$0xff]
    %v1142 = vld [vmem:[%s310 + $0x18] sm:$0xff]
    %v1143 = vld [vmem:[%s310 + $0x20] sm:$0xff]
    %v1144 = vld [vmem:[%s310 + $0x28] sm:$0xff]
    %v1145 = vld [vmem:[%s310 + $0x30] sm:$0xff]
    %v1146 = vld [vmem:[%s310 + $0x38] sm:$0xff]
    %v1147 = vpack.c.bf16 %v1138, %v1137
    %1148 = vmatpush.bf16.msra.mxu0 %v913
    %1149 = vmatpush.bf16.msra.mxu0 %v909
    %1150 = vmatpush.bf16.msra.mxu0 %v905
    %1151 = vmatpush.bf16.msra.mxu0 %v901
    %1152 = vmatpush.bf16.msra.mxu0 %v897
    %1153 = vmatpush.bf16.msra.mxu0 %v893
    %1154 = vmatpush.bf16.msra.mxu0 %v889
    %1155 = vmatpush.bf16.msra.mxu0 %v885
    %1156 = vmatmul.bf16.gmra.mxu0 %v1147
    %v1157 = vpop.f32.mrf.mxu0
    %v1158 = vadd.f32 0.0, %v1157
    %v1159 = vpop.f32.mrf.mxu0
    %v1160 = vadd.f32 0.0, %v1159
    %1161 = vdwg.mxu0
    %1162 = vmatpush.bf16.msra.mxu0 %v914
    %1163 = vmatpush.bf16.msra.mxu0 %v910
    %1164 = vmatpush.bf16.msra.mxu0 %v906
    %1165 = vmatpush.bf16.msra.mxu0 %v902
    %1166 = vmatpush.bf16.msra.mxu0 %v898
    %1167 = vmatpush.bf16.msra.mxu0 %v894
    %1168 = vmatpush.bf16.msra.mxu0 %v890
    %1169 = vmatpush.bf16.msra.mxu0 %v886
    %1170 = vmatmul.bf16.gmra.mxu0 %v1147
    %v1171 = vpop.f32.mrf.mxu0
    %v1172 = vadd.f32 0.0, %v1171
    %v1173 = vpop.f32.mrf.mxu0
    %v1174 = vadd.f32 0.0, %v1173
    %1175 = vdwg.mxu0
    %1176 = vmatpush.bf16.msra.mxu0 %v915
    %1177 = vmatpush.bf16.msra.mxu0 %v911
    %1178 = vmatpush.bf16.msra.mxu0 %v907
    %1179 = vmatpush.bf16.msra.mxu0 %v903
    %1180 = vmatpush.bf16.msra.mxu0 %v899
    %1181 = vmatpush.bf16.msra.mxu0 %v895
    %1182 = vmatpush.bf16.msra.mxu0 %v891
    %1183 = vmatpush.bf16.msra.mxu0 %v887
    %1184 = vmatmul.bf16.gmra.mxu0 %v1147
    %v1185 = vpop.f32.mrf.mxu0
    %v1186 = vadd.f32 0.0, %v1185
    %v1187 = vpop.f32.mrf.mxu0
    %v1188 = vadd.f32 0.0, %v1187
    %1189 = vdwg.mxu0
    %1190 = vmatpush.bf16.msra.mxu0 %v916
    %1191 = vmatpush.bf16.msra.mxu0 %v912
    %1192 = vmatpush.bf16.msra.mxu0 %v908
    %1193 = vmatpush.bf16.msra.mxu0 %v904
    %1194 = vmatpush.bf16.msra.mxu0 %v900
    %1195 = vmatpush.bf16.msra.mxu0 %v896
    %1196 = vmatpush.bf16.msra.mxu0 %v892
    %1197 = vmatpush.bf16.msra.mxu0 %v888
    %1198 = vmatmul.bf16.gmra.mxu0 %v1147
    %v1199 = vpop.f32.mrf.mxu0
    %v1200 = vadd.f32 0.0, %v1199
    %v1201 = vpop.f32.mrf.mxu0
    %v1202 = vadd.f32 0.0, %v1201
    %1203 = vdwg.mxu0
    %v1204 = vadd.f32 %v1139, %v1158
    %v1205 = vadd.f32 %v1140, %v1172
    %v1206 = vadd.f32 %v1141, %v1186
    %v1207 = vadd.f32 %v1142, %v1200
    %v1208 = vadd.f32 %v1143, %v1160
    %v1209 = vadd.f32 %v1144, %v1174
    %v1210 = vadd.f32 %v1145, %v1188
    %v1211 = vadd.f32 %v1146, %v1202
    %v1212 = vxor.u32 %v1204, 2147483648
    %v1213 = vxor.u32 %v1208, 2147483648
    %v1214 = vmul.f32 %v1212, 1.442695
    %v1215 = vpow.pop %v1214
    %v1216 = vmul.f32 %v1213, 1.442695
    %v1217 = vpow.pop %v1216
    %v1218 = vadd.f32 %v1215, 1.0
    %v1219 = vadd.f32 %v1217, 1.0
    %v1220 = vrcp.pop %v1218
    %v1221 = vmul.f32 %v1218, %v1220
    %v1222 = vsub.f32 1.0, %v1221
    %v1223 = vmul.f32 %v1220, %v1222
    %v1224 = vadd.f32 %v1220, %v1223
    %vm1225 = vweird.f32 %v1218
    %vm1226 = vweird.f32 %v1220
    %vm1227 = vmor %vm1225, %vm1226
    %v1228 = vsel %vm1227, %v1220, %v1224
    %v1229 = vand.u32 2147483647, %v1218
    %vm1230 = vcmp.eq.f32.partialorder %v1229, 8.507059e+37
    %v1231 = vand.u32 %v1218, 2147483648
    %v1232 = vor.u32 1.1754944e-38, %v1231
    %v1233 = vsel %vm1230, %v1232, %v1228
    %v1234 = vmul.f32 1.0, %v1233
    %v1235 = vrcp.pop %v1219
    %v1236 = vmul.f32 %v1219, %v1235
    %v1237 = vsub.f32 1.0, %v1236
    %v1238 = vmul.f32 %v1235, %v1237
    %v1239 = vadd.f32 %v1235, %v1238
    %vm1240 = vweird.f32 %v1219
    %vm1241 = vweird.f32 %v1235
    %vm1242 = vmor %vm1240, %vm1241
    %v1243 = vsel %vm1242, %v1235, %v1239
    %v1244 = vand.u32 2147483647, %v1219
    %vm1245 = vcmp.eq.f32.partialorder %v1244, 8.507059e+37
    %v1246 = vand.u32 %v1219, 2147483648
    %v1247 = vor.u32 1.1754944e-38, %v1246
    %v1248 = vsel %vm1245, %v1247, %v1243
    %v1249 = vmul.f32 1.0, %v1248
    %v1250 = vxor.u32 %v1205, 2147483648
    %v1251 = vxor.u32 %v1209, 2147483648
    %v1252 = vmul.f32 %v1250, 1.442695
    %v1253 = vpow.pop %v1252
    %v1254 = vmul.f32 %v1251, 1.442695
    %v1255 = vpow.pop %v1254
    %v1256 = vadd.f32 %v1253, 1.0
    %v1257 = vadd.f32 %v1255, 1.0
    %v1258 = vrcp.pop %v1256
    %v1259 = vmul.f32 %v1256, %v1258
    %v1260 = vsub.f32 1.0, %v1259
    %v1261 = vmul.f32 %v1258, %v1260
    %v1262 = vadd.f32 %v1258, %v1261
    %vm1263 = vweird.f32 %v1256
    %vm1264 = vweird.f32 %v1258
    %vm1265 = vmor %vm1263, %vm1264
    %v1266 = vsel %vm1265, %v1258, %v1262
    %v1267 = vand.u32 2147483647, %v1256
    %vm1268 = vcmp.eq.f32.partialorder %v1267, 8.507059e+37
    %v1269 = vand.u32 %v1256, 2147483648
    %v1270 = vor.u32 1.1754944e-38, %v1269
    %v1271 = vsel %vm1268, %v1270, %v1266
    %v1272 = vmul.f32 1.0, %v1271
    %v1273 = vrcp.pop %v1257
    %v1274 = vmul.f32 %v1257, %v1273
    %v1275 = vsub.f32 1.0, %v1274
    %v1276 = vmul.f32 %v1273, %v1275
    %v1277 = vadd.f32 %v1273, %v1276
    %vm1278 = vweird.f32 %v1257
    %vm1279 = vweird.f32 %v1273
    %vm1280 = vmor %vm1278, %vm1279
    %v1281 = vsel %vm1280, %v1273, %v1277
    %v1282 = vand.u32 2147483647, %v1257
    %vm1283 = vcmp.eq.f32.partialorder %v1282, 8.507059e+37
    %v1284 = vand.u32 %v1257, 2147483648
    %v1285 = vor.u32 1.1754944e-38, %v1284
    %v1286 = vsel %vm1283, %v1285, %v1281
    %v1287 = vmul.f32 1.0, %v1286
    %v1288 = vtanh.pop %v1206
    %v1289 = vtanh.pop %v1210
    %v1290 = vxor.u32 %v1207, 2147483648
    %v1291 = vxor.u32 %v1211, 2147483648
    %v1292 = vmul.f32 %v1290, 1.442695
    %v1293 = vpow.pop %v1292
    %v1294 = vmul.f32 %v1291, 1.442695
    %v1295 = vpow.pop %v1294
    %v1296 = vadd.f32 %v1293, 1.0
    %v1297 = vadd.f32 %v1295, 1.0
    %v1298 = vrcp.pop %v1296
    %v1299 = vmul.f32 %v1296, %v1298
    %v1300 = vsub.f32 1.0, %v1299
    %v1301 = vmul.f32 %v1298, %v1300
    %v1302 = vadd.f32 %v1298, %v1301
    %vm1303 = vweird.f32 %v1296
    %vm1304 = vweird.f32 %v1298
    %vm1305 = vmor %vm1303, %vm1304
    %v1306 = vsel %vm1305, %v1298, %v1302
    %v1307 = vand.u32 2147483647, %v1296
    %vm1308 = vcmp.eq.f32.partialorder %v1307, 8.507059e+37
    %v1309 = vand.u32 %v1296, 2147483648
    %v1310 = vor.u32 1.1754944e-38, %v1309
    %v1311 = vsel %vm1308, %v1310, %v1306
    %v1312 = vmul.f32 1.0, %v1311
    %v1313 = vrcp.pop %v1297
    %v1314 = vmul.f32 %v1297, %v1313
    %v1315 = vsub.f32 1.0, %v1314
    %v1316 = vmul.f32 %v1313, %v1315
    %v1317 = vadd.f32 %v1313, %v1316
    %vm1318 = vweird.f32 %v1297
    %vm1319 = vweird.f32 %v1313
    %vm1320 = vmor %vm1318, %vm1319
    %v1321 = vsel %vm1320, %v1313, %v1317
    %v1322 = vand.u32 2147483647, %v1297
    %vm1323 = vcmp.eq.f32.partialorder %v1322, 8.507059e+37
    %v1324 = vand.u32 %v1297, 2147483648
    %v1325 = vor.u32 1.1754944e-38, %v1324
    %v1326 = vsel %vm1323, %v1325, %v1321
    %v1327 = vmul.f32 1.0, %v1326
    %v1328 = vmul.f32 %v1272, %v1133
    %v1329 = vmul.f32 %v1287, %v1134
    %v1330 = vmul.f32 %v1234, %v1288
    %v1331 = vmul.f32 %v1249, %v1289
    %v1332 = vadd.f32 %v1328, %v1330
    %v1333 = vadd.f32 %v1329, %v1331
    %v1334 = vtanh.pop %v1332
    %v1335 = vtanh.pop %v1333
    %v1336 = vmul.f32 %v1312, %v1334
    %v1337 = vmul.f32 %v1327, %v1335
    %v1338 = vld [vmem:[%s387] sm:$0xff]
    %v1339 = vld [vmem:[%s387 + $0x8] sm:$0xff]
    %v1340 = vld [vmem:[%s387 + $0x10] sm:$0xff]
    %v1341 = vld [vmem:[%s387 + $0x18] sm:$0xff]
    %v1342 = vld [vmem:[%s387 + $0x20] sm:$0xff]
    %v1343 = vld [vmem:[%s387 + $0x28] sm:$0xff]
    %v1344 = vld [vmem:[%s387 + $0x30] sm:$0xff]
    %v1345 = vld [vmem:[%s387 + $0x38] sm:$0xff]
    %v1346 = vpack.c.bf16 %v1337, %v1336
    %1347 = vmatpush.bf16.msra.mxu0 %v913
    %1348 = vmatpush.bf16.msra.mxu0 %v909
    %1349 = vmatpush.bf16.msra.mxu0 %v905
    %1350 = vmatpush.bf16.msra.mxu0 %v901
    %1351 = vmatpush.bf16.msra.mxu0 %v897
    %1352 = vmatpush.bf16.msra.mxu0 %v893
    %1353 = vmatpush.bf16.msra.mxu0 %v889
    %1354 = vmatpush.bf16.msra.mxu0 %v885
    %1355 = vmatmul.bf16.gmra.mxu0 %v1346
    %v1356 = vpop.f32.mrf.mxu0
    %v1357 = vadd.f32 0.0, %v1356
    %v1358 = vpop.f32.mrf.mxu0
    %v1359 = vadd.f32 0.0, %v1358
    %1360 = vdwg.mxu0
    %1361 = vmatpush.bf16.msra.mxu0 %v914
    %1362 = vmatpush.bf16.msra.mxu0 %v910
    %1363 = vmatpush.bf16.msra.mxu0 %v906
    %1364 = vmatpush.bf16.msra.mxu0 %v902
    %1365 = vmatpush.bf16.msra.mxu0 %v898
    %1366 = vmatpush.bf16.msra.mxu0 %v894
    %1367 = vmatpush.bf16.msra.mxu0 %v890
    %1368 = vmatpush.bf16.msra.mxu0 %v886
    %1369 = vmatmul.bf16.gmra.mxu0 %v1346
    %v1370 = vpop.f32.mrf.mxu0
    %v1371 = vadd.f32 0.0, %v1370
    %v1372 = vpop.f32.mrf.mxu0
    %v1373 = vadd.f32 0.0, %v1372
    %1374 = vdwg.mxu0
    %1375 = vmatpush.bf16.msra.mxu0 %v915
    %1376 = vmatpush.bf16.msra.mxu0 %v911
    %1377 = vmatpush.bf16.msra.mxu0 %v907
    %1378 = vmatpush.bf16.msra.mxu0 %v903
    %1379 = vmatpush.bf16.msra.mxu0 %v899
    %1380 = vmatpush.bf16.msra.mxu0 %v895
    %1381 = vmatpush.bf16.msra.mxu0 %v891
    %1382 = vmatpush.bf16.msra.mxu0 %v887
    %1383 = vmatmul.bf16.gmra.mxu0 %v1346
    %v1384 = vpop.f32.mrf.mxu0
    %v1385 = vadd.f32 0.0, %v1384
    %v1386 = vpop.f32.mrf.mxu0
    %v1387 = vadd.f32 0.0, %v1386
    %1388 = vdwg.mxu0
    %1389 = vmatpush.bf16.msra.mxu0 %v916
    %1390 = vmatpush.bf16.msra.mxu0 %v912
    %1391 = vmatpush.bf16.msra.mxu0 %v908
    %1392 = vmatpush.bf16.msra.mxu0 %v904
    %1393 = vmatpush.bf16.msra.mxu0 %v900
    %1394 = vmatpush.bf16.msra.mxu0 %v896
    %1395 = vmatpush.bf16.msra.mxu0 %v892
    %1396 = vmatpush.bf16.msra.mxu0 %v888
    %1397 = vmatmul.bf16.gmra.mxu0 %v1346
    %v1398 = vpop.f32.mrf.mxu0
    %v1399 = vadd.f32 0.0, %v1398
    %v1400 = vpop.f32.mrf.mxu0
    %v1401 = vadd.f32 0.0, %v1400
    %1402 = vdwg.mxu0
    %v1403 = vadd.f32 %v1338, %v1357
    %v1404 = vadd.f32 %v1339, %v1371
    %v1405 = vadd.f32 %v1340, %v1385
    %v1406 = vadd.f32 %v1341, %v1399
    %v1407 = vadd.f32 %v1342, %v1359
    %v1408 = vadd.f32 %v1343, %v1373
    %v1409 = vadd.f32 %v1344, %v1387
    %v1410 = vadd.f32 %v1345, %v1401
    %v1411 = vxor.u32 %v1403, 2147483648
    %v1412 = vxor.u32 %v1407, 2147483648
    %v1413 = vmul.f32 %v1411, 1.442695
    %v1414 = vpow.pop %v1413
    %v1415 = vmul.f32 %v1412, 1.442695
    %v1416 = vpow.pop %v1415
    %v1417 = vadd.f32 %v1414, 1.0
    %v1418 = vadd.f32 %v1416, 1.0
    %v1419 = vrcp.pop %v1417
    %v1420 = vmul.f32 %v1417, %v1419
    %v1421 = vsub.f32 1.0, %v1420
    %v1422 = vmul.f32 %v1419, %v1421
    %v1423 = vadd.f32 %v1419, %v1422
    %vm1424 = vweird.f32 %v1417
    %vm1425 = vweird.f32 %v1419
    %vm1426 = vmor %vm1424, %vm1425
    %v1427 = vsel %vm1426, %v1419, %v1423
    %v1428 = vand.u32 2147483647, %v1417
    %vm1429 = vcmp.eq.f32.partialorder %v1428, 8.507059e+37
    %v1430 = vand.u32 %v1417, 2147483648
    %v1431 = vor.u32 1.1754944e-38, %v1430
    %v1432 = vsel %vm1429, %v1431, %v1427
    %v1433 = vmul.f32 1.0, %v1432
    %v1434 = vrcp.pop %v1418
    %v1435 = vmul.f32 %v1418, %v1434
    %v1436 = vsub.f32 1.0, %v1435
    %v1437 = vmul.f32 %v1434, %v1436
    %v1438 = vadd.f32 %v1434, %v1437
    %vm1439 = vweird.f32 %v1418
    %vm1440 = vweird.f32 %v1434
    %vm1441 = vmor %vm1439, %vm1440
    %v1442 = vsel %vm1441, %v1434, %v1438
    %v1443 = vand.u32 2147483647, %v1418
    %vm1444 = vcmp.eq.f32.partialorder %v1443, 8.507059e+37
    %v1445 = vand.u32 %v1418, 2147483648
    %v1446 = vor.u32 1.1754944e-38, %v1445
    %v1447 = vsel %vm1444, %v1446, %v1442
    %v1448 = vmul.f32 1.0, %v1447
    %v1449 = vxor.u32 %v1404, 2147483648
    %v1450 = vxor.u32 %v1408, 2147483648
    %v1451 = vmul.f32 %v1449, 1.442695
    %v1452 = vpow.pop %v1451
    %v1453 = vmul.f32 %v1450, 1.442695
    %v1454 = vpow.pop %v1453
    %v1455 = vadd.f32 %v1452, 1.0
    %v1456 = vadd.f32 %v1454, 1.0
    %v1457 = vrcp.pop %v1455
    %v1458 = vmul.f32 %v1455, %v1457
    %v1459 = vsub.f32 1.0, %v1458
    %v1460 = vmul.f32 %v1457, %v1459
    %v1461 = vadd.f32 %v1457, %v1460
    %vm1462 = vweird.f32 %v1455
    %vm1463 = vweird.f32 %v1457
    %vm1464 = vmor %vm1462, %vm1463
    %v1465 = vsel %vm1464, %v1457, %v1461
    %v1466 = vand.u32 2147483647, %v1455
    %vm1467 = vcmp.eq.f32.partialorder %v1466, 8.507059e+37
    %v1468 = vand.u32 %v1455, 2147483648
    %v1469 = vor.u32 1.1754944e-38, %v1468
    %v1470 = vsel %vm1467, %v1469, %v1465
    %v1471 = vmul.f32 1.0, %v1470
    %v1472 = vrcp.pop %v1456
    %v1473 = vmul.f32 %v1456, %v1472
    %v1474 = vsub.f32 1.0, %v1473
    %v1475 = vmul.f32 %v1472, %v1474
    %v1476 = vadd.f32 %v1472, %v1475
    %vm1477 = vweird.f32 %v1456
    %vm1478 = vweird.f32 %v1472
    %vm1479 = vmor %vm1477, %vm1478
    %v1480 = vsel %vm1479, %v1472, %v1476
    %v1481 = vand.u32 2147483647, %v1456
    %vm1482 = vcmp.eq.f32.partialorder %v1481, 8.507059e+37
    %v1483 = vand.u32 %v1456, 2147483648
    %v1484 = vor.u32 1.1754944e-38, %v1483
    %v1485 = vsel %vm1482, %v1484, %v1480
    %v1486 = vmul.f32 1.0, %v1485
    %v1487 = vtanh.pop %v1405
    %v1488 = vtanh.pop %v1409
    %v1489 = vxor.u32 %v1406, 2147483648
    %v1490 = vxor.u32 %v1410, 2147483648
    %v1491 = vmul.f32 %v1489, 1.442695
    %v1492 = vpow.pop %v1491
    %v1493 = vmul.f32 %v1490, 1.442695
    %v1494 = vpow.pop %v1493
    %v1495 = vadd.f32 %v1492, 1.0
    %v1496 = vadd.f32 %v1494, 1.0
    %v1497 = vrcp.pop %v1495
    %v1498 = vmul.f32 %v1495, %v1497
    %v1499 = vsub.f32 1.0, %v1498
    %v1500 = vmul.f32 %v1497, %v1499
    %v1501 = vadd.f32 %v1497, %v1500
    %vm1502 = vweird.f32 %v1495
    %vm1503 = vweird.f32 %v1497
    %vm1504 = vmor %vm1502, %vm1503
    %v1505 = vsel %vm1504, %v1497, %v1501
    %v1506 = vand.u32 2147483647, %v1495
    %vm1507 = vcmp.eq.f32.partialorder %v1506, 8.507059e+37
    %v1508 = vand.u32 %v1495, 2147483648
    %v1509 = vor.u32 1.1754944e-38, %v1508
    %v1510 = vsel %vm1507, %v1509, %v1505
    %v1511 = vmul.f32 1.0, %v1510
    %v1512 = vrcp.pop %v1496
    %v1513 = vmul.f32 %v1496, %v1512
    %v1514 = vsub.f32 1.0, %v1513
    %v1515 = vmul.f32 %v1512, %v1514
    %v1516 = vadd.f32 %v1512, %v1515
    %vm1517 = vweird.f32 %v1496
    %vm1518 = vweird.f32 %v1512
    %vm1519 = vmor %vm1517, %vm1518
    %v1520 = vsel %vm1519, %v1512, %v1516
    %v1521 = vand.u32 2147483647, %v1496
    %vm1522 = vcmp.eq.f32.partialorder %v1521, 8.507059e+37
    %v1523 = vand.u32 %v1496, 2147483648
    %v1524 = vor.u32 1.1754944e-38, %v1523
    %v1525 = vsel %vm1522, %v1524, %v1520
    %v1526 = vmul.f32 1.0, %v1525
    %v1527 = vmul.f32 %v1471, %v1332
    %v1528 = vmul.f32 %v1486, %v1333
    %v1529 = vmul.f32 %v1433, %v1487
    %v1530 = vmul.f32 %v1448, %v1488
    %v1531 = vadd.f32 %v1527, %v1529
    %v1532 = vadd.f32 %v1528, %v1530
    %v1533 = vtanh.pop %v1531
    %v1534 = vtanh.pop %v1532
    %v1535 = vmul.f32 %v1511, %v1533
    %v1536 = vmul.f32 %v1526, %v1534
    %v1537 = vld [vmem:[%s464] sm:$0xff]
    %v1538 = vld [vmem:[%s464 + $0x8] sm:$0xff]
    %v1539 = vld [vmem:[%s464 + $0x10] sm:$0xff]
    %v1540 = vld [vmem:[%s464 + $0x18] sm:$0xff]
    %v1541 = vld [vmem:[%s464 + $0x20] sm:$0xff]
    %v1542 = vld [vmem:[%s464 + $0x28] sm:$0xff]
    %v1543 = vld [vmem:[%s464 + $0x30] sm:$0xff]
    %v1544 = vld [vmem:[%s464 + $0x38] sm:$0xff]
    %v1545 = vpack.c.bf16 %v1536, %v1535
    %1546 = vmatpush.bf16.msra.mxu0 %v913
    %1547 = vmatpush.bf16.msra.mxu0 %v909
    %1548 = vmatpush.bf16.msra.mxu0 %v905
    %1549 = vmatpush.bf16.msra.mxu0 %v901
    %1550 = vmatpush.bf16.msra.mxu0 %v897
    %1551 = vmatpush.bf16.msra.mxu0 %v893
    %1552 = vmatpush.bf16.msra.mxu0 %v889
    %1553 = vmatpush.bf16.msra.mxu0 %v885
    %1554 = vmatmul.bf16.gmra.mxu0 %v1545
    %v1555 = vpop.f32.mrf.mxu0
    %v1556 = vadd.f32 0.0, %v1555
    %v1557 = vpop.f32.mrf.mxu0
    %v1558 = vadd.f32 0.0, %v1557
    %1559 = vdwg.mxu0
    %1560 = vmatpush.bf16.msra.mxu0 %v914
    %1561 = vmatpush.bf16.msra.mxu0 %v910
    %1562 = vmatpush.bf16.msra.mxu0 %v906
    %1563 = vmatpush.bf16.msra.mxu0 %v902
    %1564 = vmatpush.bf16.msra.mxu0 %v898
    %1565 = vmatpush.bf16.msra.mxu0 %v894
    %1566 = vmatpush.bf16.msra.mxu0 %v890
    %1567 = vmatpush.bf16.msra.mxu0 %v886
    %1568 = vmatmul.bf16.gmra.mxu0 %v1545
    %v1569 = vpop.f32.mrf.mxu0
    %v1570 = vadd.f32 0.0, %v1569
    %v1571 = vpop.f32.mrf.mxu0
    %v1572 = vadd.f32 0.0, %v1571
    %1573 = vdwg.mxu0
    %1574 = vmatpush.bf16.msra.mxu0 %v915
    %1575 = vmatpush.bf16.msra.mxu0 %v911
    %1576 = vmatpush.bf16.msra.mxu0 %v907
    %1577 = vmatpush.bf16.msra.mxu0 %v903
    %1578 = vmatpush.bf16.msra.mxu0 %v899
    %1579 = vmatpush.bf16.msra.mxu0 %v895
    %1580 = vmatpush.bf16.msra.mxu0 %v891
    %1581 = vmatpush.bf16.msra.mxu0 %v887
    %1582 = vmatmul.bf16.gmra.mxu0 %v1545
    %v1583 = vpop.f32.mrf.mxu0
    %v1584 = vadd.f32 0.0, %v1583
    %v1585 = vpop.f32.mrf.mxu0
    %v1586 = vadd.f32 0.0, %v1585
    %1587 = vdwg.mxu0
    %1588 = vmatpush.bf16.msra.mxu0 %v916
    %1589 = vmatpush.bf16.msra.mxu0 %v912
    %1590 = vmatpush.bf16.msra.mxu0 %v908
    %1591 = vmatpush.bf16.msra.mxu0 %v904
    %1592 = vmatpush.bf16.msra.mxu0 %v900
    %1593 = vmatpush.bf16.msra.mxu0 %v896
    %1594 = vmatpush.bf16.msra.mxu0 %v892
    %1595 = vmatpush.bf16.msra.mxu0 %v888
    %1596 = vmatmul.bf16.gmra.mxu0 %v1545
    %v1597 = vpop.f32.mrf.mxu0
    %v1598 = vadd.f32 0.0, %v1597
    %v1599 = vpop.f32.mrf.mxu0
    %v1600 = vadd.f32 0.0, %v1599
    %1601 = vdwg.mxu0
    %v1602 = vadd.f32 %v1537, %v1556
    %v1603 = vadd.f32 %v1538, %v1570
    %v1604 = vadd.f32 %v1539, %v1584
    %v1605 = vadd.f32 %v1540, %v1598
    %v1606 = vadd.f32 %v1541, %v1558
    %v1607 = vadd.f32 %v1542, %v1572
    %v1608 = vadd.f32 %v1543, %v1586
    %v1609 = vadd.f32 %v1544, %v1600
    %v1610 = vxor.u32 %v1602, 2147483648
    %v1611 = vxor.u32 %v1606, 2147483648
    %v1612 = vmul.f32 %v1610, 1.442695
    %v1613 = vpow.pop %v1612
    %v1614 = vmul.f32 %v1611, 1.442695
    %v1615 = vpow.pop %v1614
    %v1616 = vadd.f32 %v1613, 1.0
    %v1617 = vadd.f32 %v1615, 1.0
    %v1618 = vrcp.pop %v1616
    %v1619 = vmul.f32 %v1616, %v1618
    %v1620 = vsub.f32 1.0, %v1619
    %v1621 = vmul.f32 %v1618, %v1620
    %v1622 = vadd.f32 %v1618, %v1621
    %vm1623 = vweird.f32 %v1616
    %vm1624 = vweird.f32 %v1618
    %vm1625 = vmor %vm1623, %vm1624
    %v1626 = vsel %vm1625, %v1618, %v1622
    %v1627 = vand.u32 2147483647, %v1616
    %vm1628 = vcmp.eq.f32.partialorder %v1627, 8.507059e+37
    %v1629 = vand.u32 %v1616, 2147483648
    %v1630 = vor.u32 1.1754944e-38, %v1629
    %v1631 = vsel %vm1628, %v1630, %v1626
    %v1632 = vmul.f32 1.0, %v1631
    %v1633 = vrcp.pop %v1617
    %v1634 = vmul.f32 %v1617, %v1633
    %v1635 = vsub.f32 1.0, %v1634
    %v1636 = vmul.f32 %v1633, %v1635
    %v1637 = vadd.f32 %v1633, %v1636
    %vm1638 = vweird.f32 %v1617
    %vm1639 = vweird.f32 %v1633
    %vm1640 = vmor %vm1638, %vm1639
    %v1641 = vsel %vm1640, %v1633, %v1637
    %v1642 = vand.u32 2147483647, %v1617
    %vm1643 = vcmp.eq.f32.partialorder %v1642, 8.507059e+37
    %v1644 = vand.u32 %v1617, 2147483648
    %v1645 = vor.u32 1.1754944e-38, %v1644
    %v1646 = vsel %vm1643, %v1645, %v1641
    %v1647 = vmul.f32 1.0, %v1646
    %v1648 = vxor.u32 %v1603, 2147483648
    %v1649 = vxor.u32 %v1607, 2147483648
    %v1650 = vmul.f32 %v1648, 1.442695
    %v1651 = vpow.pop %v1650
    %v1652 = vmul.f32 %v1649, 1.442695
    %v1653 = vpow.pop %v1652
    %v1654 = vadd.f32 %v1651, 1.0
    %v1655 = vadd.f32 %v1653, 1.0
    %v1656 = vrcp.pop %v1654
    %v1657 = vmul.f32 %v1654, %v1656
    %v1658 = vsub.f32 1.0, %v1657
    %v1659 = vmul.f32 %v1656, %v1658
    %v1660 = vadd.f32 %v1656, %v1659
    %vm1661 = vweird.f32 %v1654
    %vm1662 = vweird.f32 %v1656
    %vm1663 = vmor %vm1661, %vm1662
    %v1664 = vsel %vm1663, %v1656, %v1660
    %v1665 = vand.u32 2147483647, %v1654
    %vm1666 = vcmp.eq.f32.partialorder %v1665, 8.507059e+37
    %v1667 = vand.u32 %v1654, 2147483648
    %v1668 = vor.u32 1.1754944e-38, %v1667
    %v1669 = vsel %vm1666, %v1668, %v1664
    %v1670 = vmul.f32 1.0, %v1669
    %v1671 = vrcp.pop %v1655
    %v1672 = vmul.f32 %v1655, %v1671
    %v1673 = vsub.f32 1.0, %v1672
    %v1674 = vmul.f32 %v1671, %v1673
    %v1675 = vadd.f32 %v1671, %v1674
    %vm1676 = vweird.f32 %v1655
    %vm1677 = vweird.f32 %v1671
    %vm1678 = vmor %vm1676, %vm1677
    %v1679 = vsel %vm1678, %v1671, %v1675
    %v1680 = vand.u32 2147483647, %v1655
    %vm1681 = vcmp.eq.f32.partialorder %v1680, 8.507059e+37
    %v1682 = vand.u32 %v1655, 2147483648
    %v1683 = vor.u32 1.1754944e-38, %v1682
    %v1684 = vsel %vm1681, %v1683, %v1679
    %v1685 = vmul.f32 1.0, %v1684
    %v1686 = vtanh.pop %v1604
    %v1687 = vtanh.pop %v1608
    %v1688 = vxor.u32 %v1605, 2147483648
    %v1689 = vxor.u32 %v1609, 2147483648
    %v1690 = vmul.f32 %v1688, 1.442695
    %v1691 = vpow.pop %v1690
    %v1692 = vmul.f32 %v1689, 1.442695
    %v1693 = vpow.pop %v1692
    %v1694 = vadd.f32 %v1691, 1.0
    %v1695 = vadd.f32 %v1693, 1.0
    %v1696 = vrcp.pop %v1694
    %v1697 = vmul.f32 %v1694, %v1696
    %v1698 = vsub.f32 1.0, %v1697
    %v1699 = vmul.f32 %v1696, %v1698
    %v1700 = vadd.f32 %v1696, %v1699
    %vm1701 = vweird.f32 %v1694
    %vm1702 = vweird.f32 %v1696
    %vm1703 = vmor %vm1701, %vm1702
    %v1704 = vsel %vm1703, %v1696, %v1700
    %v1705 = vand.u32 2147483647, %v1694
    %vm1706 = vcmp.eq.f32.partialorder %v1705, 8.507059e+37
    %v1707 = vand.u32 %v1694, 2147483648
    %v1708 = vor.u32 1.1754944e-38, %v1707
    %v1709 = vsel %vm1706, %v1708, %v1704
    %v1710 = vmul.f32 1.0, %v1709
    %v1711 = vrcp.pop %v1695
    %v1712 = vmul.f32 %v1695, %v1711
    %v1713 = vsub.f32 1.0, %v1712
    %v1714 = vmul.f32 %v1711, %v1713
    %v1715 = vadd.f32 %v1711, %v1714
    %vm1716 = vweird.f32 %v1695
    %vm1717 = vweird.f32 %v1711
    %vm1718 = vmor %vm1716, %vm1717
    %v1719 = vsel %vm1718, %v1711, %v1715
    %v1720 = vand.u32 2147483647, %v1695
    %vm1721 = vcmp.eq.f32.partialorder %v1720, 8.507059e+37
    %v1722 = vand.u32 %v1695, 2147483648
    %v1723 = vor.u32 1.1754944e-38, %v1722
    %v1724 = vsel %vm1721, %v1723, %v1719
    %v1725 = vmul.f32 1.0, %v1724
    %v1726 = vmul.f32 %v1670, %v1531
    %v1727 = vmul.f32 %v1685, %v1532
    %v1728 = vmul.f32 %v1632, %v1686
    %v1729 = vmul.f32 %v1647, %v1687
    %v1730 = vadd.f32 %v1726, %v1728
    %v1731 = vadd.f32 %v1727, %v1729
    %v1732 = vtanh.pop %v1730
    %v1733 = vtanh.pop %v1731
    %v1734 = vmul.f32 %v1710, %v1732
    %v1735 = vmul.f32 %v1725, %v1733
    %v1736 = vld [vmem:[%s541] sm:$0xff]
    %v1737 = vld [vmem:[%s541 + $0x8] sm:$0xff]
    %v1738 = vld [vmem:[%s541 + $0x10] sm:$0xff]
    %v1739 = vld [vmem:[%s541 + $0x18] sm:$0xff]
    %v1740 = vld [vmem:[%s541 + $0x20] sm:$0xff]
    %v1741 = vld [vmem:[%s541 + $0x28] sm:$0xff]
    %v1742 = vld [vmem:[%s541 + $0x30] sm:$0xff]
    %v1743 = vld [vmem:[%s541 + $0x38] sm:$0xff]
    %v1744 = vpack.c.bf16 %v1735, %v1734
    %1745 = vmatpush.bf16.msra.mxu0 %v913
    %1746 = vmatpush.bf16.msra.mxu0 %v909
    %1747 = vmatpush.bf16.msra.mxu0 %v905
    %1748 = vmatpush.bf16.msra.mxu0 %v901
    %1749 = vmatpush.bf16.msra.mxu0 %v897
    %1750 = vmatpush.bf16.msra.mxu0 %v893
    %1751 = vmatpush.bf16.msra.mxu0 %v889
    %1752 = vmatpush.bf16.msra.mxu0 %v885
    %1753 = vmatmul.bf16.gmra.mxu0 %v1744
    %v1754 = vpop.f32.mrf.mxu0
    %v1755 = vadd.f32 0.0, %v1754
    %v1756 = vpop.f32.mrf.mxu0
    %v1757 = vadd.f32 0.0, %v1756
    %1758 = vdwg.mxu0
    %1759 = vmatpush.bf16.msra.mxu0 %v914
    %1760 = vmatpush.bf16.msra.mxu0 %v910
    %1761 = vmatpush.bf16.msra.mxu0 %v906
    %1762 = vmatpush.bf16.msra.mxu0 %v902
    %1763 = vmatpush.bf16.msra.mxu0 %v898
    %1764 = vmatpush.bf16.msra.mxu0 %v894
    %1765 = vmatpush.bf16.msra.mxu0 %v890
    %1766 = vmatpush.bf16.msra.mxu0 %v886
    %1767 = vmatmul.bf16.gmra.mxu0 %v1744
    %v1768 = vpop.f32.mrf.mxu0
    %v1769 = vadd.f32 0.0, %v1768
    %v1770 = vpop.f32.mrf.mxu0
    %v1771 = vadd.f32 0.0, %v1770
    %1772 = vdwg.mxu0
    %1773 = vmatpush.bf16.msra.mxu0 %v915
    %1774 = vmatpush.bf16.msra.mxu0 %v911
    %1775 = vmatpush.bf16.msra.mxu0 %v907
    %1776 = vmatpush.bf16.msra.mxu0 %v903
    %1777 = vmatpush.bf16.msra.mxu0 %v899
    %1778 = vmatpush.bf16.msra.mxu0 %v895
    %1779 = vmatpush.bf16.msra.mxu0 %v891
    %1780 = vmatpush.bf16.msra.mxu0 %v887
    %1781 = vmatmul.bf16.gmra.mxu0 %v1744
    %v1782 = vpop.f32.mrf.mxu0
    %v1783 = vadd.f32 0.0, %v1782
    %v1784 = vpop.f32.mrf.mxu0
    %v1785 = vadd.f32 0.0, %v1784
    %1786 = vdwg.mxu0
    %1787 = vmatpush.bf16.msra.mxu0 %v916
    %1788 = vmatpush.bf16.msra.mxu0 %v912
    %1789 = vmatpush.bf16.msra.mxu0 %v908
    %1790 = vmatpush.bf16.msra.mxu0 %v904
    %1791 = vmatpush.bf16.msra.mxu0 %v900
    %1792 = vmatpush.bf16.msra.mxu0 %v896
    %1793 = vmatpush.bf16.msra.mxu0 %v892
    %1794 = vmatpush.bf16.msra.mxu0 %v888
    %1795 = vmatmul.bf16.gmra.mxu0 %v1744
    %v1796 = vpop.f32.mrf.mxu0
    %v1797 = vadd.f32 0.0, %v1796
    %v1798 = vpop.f32.mrf.mxu0
    %v1799 = vadd.f32 0.0, %v1798
    %1800 = vdwg.mxu0
    %v1801 = vadd.f32 %v1736, %v1755
    %v1802 = vadd.f32 %v1737, %v1769
    %v1803 = vadd.f32 %v1738, %v1783
    %v1804 = vadd.f32 %v1739, %v1797
    %v1805 = vadd.f32 %v1740, %v1757
    %v1806 = vadd.f32 %v1741, %v1771
    %v1807 = vadd.f32 %v1742, %v1785
    %v1808 = vadd.f32 %v1743, %v1799
    %v1809 = vxor.u32 %v1801, 2147483648
    %v1810 = vxor.u32 %v1805, 2147483648
    %v1811 = vmul.f32 %v1809, 1.442695
    %v1812 = vpow.pop %v1811
    %v1813 = vmul.f32 %v1810, 1.442695
    %v1814 = vpow.pop %v1813
    %v1815 = vadd.f32 %v1812, 1.0
    %v1816 = vadd.f32 %v1814, 1.0
    %v1817 = vrcp.pop %v1815
    %v1818 = vmul.f32 %v1815, %v1817
    %v1819 = vsub.f32 1.0, %v1818
    %v1820 = vmul.f32 %v1817, %v1819
    %v1821 = vadd.f32 %v1817, %v1820
    %vm1822 = vweird.f32 %v1815
    %vm1823 = vweird.f32 %v1817
    %vm1824 = vmor %vm1822, %vm1823
    %v1825 = vsel %vm1824, %v1817, %v1821
    %v1826 = vand.u32 2147483647, %v1815
    %vm1827 = vcmp.eq.f32.partialorder %v1826, 8.507059e+37
    %v1828 = vand.u32 %v1815, 2147483648
    %v1829 = vor.u32 1.1754944e-38, %v1828
    %v1830 = vsel %vm1827, %v1829, %v1825
    %v1831 = vmul.f32 1.0, %v1830
    %v1832 = vrcp.pop %v1816
    %v1833 = vmul.f32 %v1816, %v1832
    %v1834 = vsub.f32 1.0, %v1833
    %v1835 = vmul.f32 %v1832, %v1834
    %v1836 = vadd.f32 %v1832, %v1835
    %vm1837 = vweird.f32 %v1816
    %vm1838 = vweird.f32 %v1832
    %vm1839 = vmor %vm1837, %vm1838
    %v1840 = vsel %vm1839, %v1832, %v1836
    %v1841 = vand.u32 2147483647, %v1816
    %vm1842 = vcmp.eq.f32.partialorder %v1841, 8.507059e+37
    %v1843 = vand.u32 %v1816, 2147483648
    %v1844 = vor.u32 1.1754944e-38, %v1843
    %v1845 = vsel %vm1842, %v1844, %v1840
    %v1846 = vmul.f32 1.0, %v1845
    %v1847 = vxor.u32 %v1802, 2147483648
    %v1848 = vxor.u32 %v1806, 2147483648
    %v1849 = vmul.f32 %v1847, 1.442695
    %v1850 = vpow.pop %v1849
    %v1851 = vmul.f32 %v1848, 1.442695
    %v1852 = vpow.pop %v1851
    %v1853 = vadd.f32 %v1850, 1.0
    %v1854 = vadd.f32 %v1852, 1.0
    %v1855 = vrcp.pop %v1853
    %v1856 = vmul.f32 %v1853, %v1855
    %v1857 = vsub.f32 1.0, %v1856
    %v1858 = vmul.f32 %v1855, %v1857
    %v1859 = vadd.f32 %v1855, %v1858
    %vm1860 = vweird.f32 %v1853
    %vm1861 = vweird.f32 %v1855
    %vm1862 = vmor %vm1860, %vm1861
    %v1863 = vsel %vm1862, %v1855, %v1859
    %v1864 = vand.u32 2147483647, %v1853
    %vm1865 = vcmp.eq.f32.partialorder %v1864, 8.507059e+37
    %v1866 = vand.u32 %v1853, 2147483648
    %v1867 = vor.u32 1.1754944e-38, %v1866
    %v1868 = vsel %vm1865, %v1867, %v1863
    %v1869 = vmul.f32 1.0, %v1868
    %v1870 = vrcp.pop %v1854
    %v1871 = vmul.f32 %v1854, %v1870
    %v1872 = vsub.f32 1.0, %v1871
    %v1873 = vmul.f32 %v1870, %v1872
    %v1874 = vadd.f32 %v1870, %v1873
    %vm1875 = vweird.f32 %v1854
    %vm1876 = vweird.f32 %v1870
    %vm1877 = vmor %vm1875, %vm1876
    %v1878 = vsel %vm1877, %v1870, %v1874
    %v1879 = vand.u32 2147483647, %v1854
    %vm1880 = vcmp.eq.f32.partialorder %v1879, 8.507059e+37
    %v1881 = vand.u32 %v1854, 2147483648
    %v1882 = vor.u32 1.1754944e-38, %v1881
    %v1883 = vsel %vm1880, %v1882, %v1878
    %v1884 = vmul.f32 1.0, %v1883
    %v1885 = vtanh.pop %v1803
    %v1886 = vtanh.pop %v1807
    %v1887 = vxor.u32 %v1804, 2147483648
    %v1888 = vxor.u32 %v1808, 2147483648
    %v1889 = vmul.f32 %v1887, 1.442695
    %v1890 = vpow.pop %v1889
    %v1891 = vmul.f32 %v1888, 1.442695
    %v1892 = vpow.pop %v1891
    %v1893 = vadd.f32 %v1890, 1.0
    %v1894 = vadd.f32 %v1892, 1.0
    %v1895 = vrcp.pop %v1893
    %v1896 = vmul.f32 %v1893, %v1895
    %v1897 = vsub.f32 1.0, %v1896
    %v1898 = vmul.f32 %v1895, %v1897
    %v1899 = vadd.f32 %v1895, %v1898
    %vm1900 = vweird.f32 %v1893
    %vm1901 = vweird.f32 %v1895
    %vm1902 = vmor %vm1900, %vm1901
    %v1903 = vsel %vm1902, %v1895, %v1899
    %v1904 = vand.u32 2147483647, %v1893
    %vm1905 = vcmp.eq.f32.partialorder %v1904, 8.507059e+37
    %v1906 = vand.u32 %v1893, 2147483648
    %v1907 = vor.u32 1.1754944e-38, %v1906
    %v1908 = vsel %vm1905, %v1907, %v1903
    %v1909 = vmul.f32 1.0, %v1908
    %v1910 = vrcp.pop %v1894
    %v1911 = vmul.f32 %v1894, %v1910
    %v1912 = vsub.f32 1.0, %v1911
    %v1913 = vmul.f32 %v1910, %v1912
    %v1914 = vadd.f32 %v1910, %v1913
    %vm1915 = vweird.f32 %v1894
    %vm1916 = vweird.f32 %v1910
    %vm1917 = vmor %vm1915, %vm1916
    %v1918 = vsel %vm1917, %v1910, %v1914
    %v1919 = vand.u32 2147483647, %v1894
    %vm1920 = vcmp.eq.f32.partialorder %v1919, 8.507059e+37
    %v1921 = vand.u32 %v1894, 2147483648
    %v1922 = vor.u32 1.1754944e-38, %v1921
    %v1923 = vsel %vm1920, %v1922, %v1918
    %v1924 = vmul.f32 1.0, %v1923
    %v1925 = vmul.f32 %v1869, %v1730
    %v1926 = vmul.f32 %v1884, %v1731
    %v1927 = vmul.f32 %v1831, %v1885
    %v1928 = vmul.f32 %v1846, %v1886
    %v1929 = vadd.f32 %v1925, %v1927
    %v1930 = vadd.f32 %v1926, %v1928
    %v1931 = vtanh.pop %v1929
    %v1932 = vtanh.pop %v1930
    %v1933 = vmul.f32 %v1909, %v1931
    %v1934 = vmul.f32 %v1924, %v1932
    %v1935 = vld [vmem:[%s618] sm:$0xff]
    %v1936 = vld [vmem:[%s618 + $0x8] sm:$0xff]
    %v1937 = vld [vmem:[%s618 + $0x10] sm:$0xff]
    %v1938 = vld [vmem:[%s618 + $0x18] sm:$0xff]
    %v1939 = vld [vmem:[%s618 + $0x20] sm:$0xff]
    %v1940 = vld [vmem:[%s618 + $0x28] sm:$0xff]
    %v1941 = vld [vmem:[%s618 + $0x30] sm:$0xff]
    %v1942 = vld [vmem:[%s618 + $0x38] sm:$0xff]
    %v1943 = vpack.c.bf16 %v1934, %v1933
    %1944 = vmatpush.bf16.msra.mxu0 %v913
    %1945 = vmatpush.bf16.msra.mxu0 %v909
    %1946 = vmatpush.bf16.msra.mxu0 %v905
    %1947 = vmatpush.bf16.msra.mxu0 %v901
    %1948 = vmatpush.bf16.msra.mxu0 %v897
    %1949 = vmatpush.bf16.msra.mxu0 %v893
    %1950 = vmatpush.bf16.msra.mxu0 %v889
    %1951 = vmatpush.bf16.msra.mxu0 %v885
    %1952 = vmatmul.bf16.gmra.mxu0 %v1943
    %v1953 = vpop.f32.mrf.mxu0
    %v1954 = vadd.f32 0.0, %v1953
    %v1955 = vpop.f32.mrf.mxu0
    %v1956 = vadd.f32 0.0, %v1955
    %1957 = vdwg.mxu0
    %1958 = vmatpush.bf16.msra.mxu0 %v914
    %1959 = vmatpush.bf16.msra.mxu0 %v910
    %1960 = vmatpush.bf16.msra.mxu0 %v906
    %1961 = vmatpush.bf16.msra.mxu0 %v902
    %1962 = vmatpush.bf16.msra.mxu0 %v898
    %1963 = vmatpush.bf16.msra.mxu0 %v894
    %1964 = vmatpush.bf16.msra.mxu0 %v890
    %1965 = vmatpush.bf16.msra.mxu0 %v886
    %1966 = vmatmul.bf16.gmra.mxu0 %v1943
    %v1967 = vpop.f32.mrf.mxu0
    %v1968 = vadd.f32 0.0, %v1967
    %v1969 = vpop.f32.mrf.mxu0
    %v1970 = vadd.f32 0.0, %v1969
    %1971 = vdwg.mxu0
    %1972 = vmatpush.bf16.msra.mxu0 %v915
    %1973 = vmatpush.bf16.msra.mxu0 %v911
    %1974 = vmatpush.bf16.msra.mxu0 %v907
    %1975 = vmatpush.bf16.msra.mxu0 %v903
    %1976 = vmatpush.bf16.msra.mxu0 %v899
    %1977 = vmatpush.bf16.msra.mxu0 %v895
    %1978 = vmatpush.bf16.msra.mxu0 %v891
    %1979 = vmatpush.bf16.msra.mxu0 %v887
    %1980 = vmatmul.bf16.gmra.mxu0 %v1943
    %v1981 = vpop.f32.mrf.mxu0
    %v1982 = vadd.f32 0.0, %v1981
    %v1983 = vpop.f32.mrf.mxu0
    %v1984 = vadd.f32 0.0, %v1983
    %1985 = vdwg.mxu0
    %1986 = vmatpush.bf16.msra.mxu0 %v916
    %1987 = vmatpush.bf16.msra.mxu0 %v912
    %1988 = vmatpush.bf16.msra.mxu0 %v908
    %1989 = vmatpush.bf16.msra.mxu0 %v904
    %1990 = vmatpush.bf16.msra.mxu0 %v900
    %1991 = vmatpush.bf16.msra.mxu0 %v896
    %1992 = vmatpush.bf16.msra.mxu0 %v892
    %1993 = vmatpush.bf16.msra.mxu0 %v888
    %1994 = vmatmul.bf16.gmra.mxu0 %v1943
    %v1995 = vpop.f32.mrf.mxu0
    %v1996 = vadd.f32 0.0, %v1995
    %v1997 = vpop.f32.mrf.mxu0
    %v1998 = vadd.f32 0.0, %v1997
    %1999 = vdwg.mxu0
    %v2000 = vadd.f32 %v1935, %v1954
    %v2001 = vadd.f32 %v1936, %v1968
    %v2002 = vadd.f32 %v1937, %v1982
    %v2003 = vadd.f32 %v1938, %v1996
    %v2004 = vadd.f32 %v1939, %v1956
    %v2005 = vadd.f32 %v1940, %v1970
    %v2006 = vadd.f32 %v1941, %v1984
    %v2007 = vadd.f32 %v1942, %v1998
    %v2008 = vxor.u32 %v2000, 2147483648
    %v2009 = vxor.u32 %v2004, 2147483648
    %v2010 = vmul.f32 %v2008, 1.442695
    %v2011 = vpow.pop %v2010
    %v2012 = vmul.f32 %v2009, 1.442695
    %v2013 = vpow.pop %v2012
    %v2014 = vadd.f32 %v2011, 1.0
    %v2015 = vadd.f32 %v2013, 1.0
    %v2016 = vrcp.pop %v2014
    %v2017 = vmul.f32 %v2014, %v2016
    %v2018 = vsub.f32 1.0, %v2017
    %v2019 = vmul.f32 %v2016, %v2018
    %v2020 = vadd.f32 %v2016, %v2019
    %vm2021 = vweird.f32 %v2014
    %vm2022 = vweird.f32 %v2016
    %vm2023 = vmor %vm2021, %vm2022
    %v2024 = vsel %vm2023, %v2016, %v2020
    %v2025 = vand.u32 2147483647, %v2014
    %vm2026 = vcmp.eq.f32.partialorder %v2025, 8.507059e+37
    %v2027 = vand.u32 %v2014, 2147483648
    %v2028 = vor.u32 1.1754944e-38, %v2027
    %v2029 = vsel %vm2026, %v2028, %v2024
    %v2030 = vmul.f32 1.0, %v2029
    %v2031 = vrcp.pop %v2015
    %v2032 = vmul.f32 %v2015, %v2031
    %v2033 = vsub.f32 1.0, %v2032
    %v2034 = vmul.f32 %v2031, %v2033
    %v2035 = vadd.f32 %v2031, %v2034
    %vm2036 = vweird.f32 %v2015
    %vm2037 = vweird.f32 %v2031
    %vm2038 = vmor %vm2036, %vm2037
    %v2039 = vsel %vm2038, %v2031, %v2035
    %v2040 = vand.u32 2147483647, %v2015
    %vm2041 = vcmp.eq.f32.partialorder %v2040, 8.507059e+37
    %v2042 = vand.u32 %v2015, 2147483648
    %v2043 = vor.u32 1.1754944e-38, %v2042
    %v2044 = vsel %vm2041, %v2043, %v2039
    %v2045 = vmul.f32 1.0, %v2044
    %v2046 = vxor.u32 %v2001, 2147483648
    %v2047 = vxor.u32 %v2005, 2147483648
    %v2048 = vmul.f32 %v2046, 1.442695
    %v2049 = vpow.pop %v2048
    %v2050 = vmul.f32 %v2047, 1.442695
    %v2051 = vpow.pop %v2050
    %v2052 = vadd.f32 %v2049, 1.0
    %v2053 = vadd.f32 %v2051, 1.0
    %v2054 = vrcp.pop %v2052
    %v2055 = vmul.f32 %v2052, %v2054
    %v2056 = vsub.f32 1.0, %v2055
    %v2057 = vmul.f32 %v2054, %v2056
    %v2058 = vadd.f32 %v2054, %v2057
    %vm2059 = vweird.f32 %v2052
    %vm2060 = vweird.f32 %v2054
    %vm2061 = vmor %vm2059, %vm2060
    %v2062 = vsel %vm2061, %v2054, %v2058
    %v2063 = vand.u32 2147483647, %v2052
    %vm2064 = vcmp.eq.f32.partialorder %v2063, 8.507059e+37
    %v2065 = vand.u32 %v2052, 2147483648
    %v2066 = vor.u32 1.1754944e-38, %v2065
    %v2067 = vsel %vm2064, %v2066, %v2062
    %v2068 = vmul.f32 1.0, %v2067
    %v2069 = vrcp.pop %v2053
    %v2070 = vmul.f32 %v2053, %v2069
    %v2071 = vsub.f32 1.0, %v2070
    %v2072 = vmul.f32 %v2069, %v2071
    %v2073 = vadd.f32 %v2069, %v2072
    %vm2074 = vweird.f32 %v2053
    %vm2075 = vweird.f32 %v2069
    %vm2076 = vmor %vm2074, %vm2075
    %v2077 = vsel %vm2076, %v2069, %v2073
    %v2078 = vand.u32 2147483647, %v2053
    %vm2079 = vcmp.eq.f32.partialorder %v2078, 8.507059e+37
    %v2080 = vand.u32 %v2053, 2147483648
    %v2081 = vor.u32 1.1754944e-38, %v2080
    %v2082 = vsel %vm2079, %v2081, %v2077
    %v2083 = vmul.f32 1.0, %v2082
    %v2084 = vtanh.pop %v2002
    %v2085 = vtanh.pop %v2006
    %v2086 = vxor.u32 %v2003, 2147483648
    %v2087 = vxor.u32 %v2007, 2147483648
    %v2088 = vmul.f32 %v2086, 1.442695
    %v2089 = vpow.pop %v2088
    %v2090 = vmul.f32 %v2087, 1.442695
    %v2091 = vpow.pop %v2090
    %v2092 = vadd.f32 %v2089, 1.0
    %v2093 = vadd.f32 %v2091, 1.0
    %v2094 = vrcp.pop %v2092
    %v2095 = vmul.f32 %v2092, %v2094
    %v2096 = vsub.f32 1.0, %v2095
    %v2097 = vmul.f32 %v2094, %v2096
    %v2098 = vadd.f32 %v2094, %v2097
    %vm2099 = vweird.f32 %v2092
    %vm2100 = vweird.f32 %v2094
    %vm2101 = vmor %vm2099, %vm2100
    %v2102 = vsel %vm2101, %v2094, %v2098
    %v2103 = vand.u32 2147483647, %v2092
    %vm2104 = vcmp.eq.f32.partialorder %v2103, 8.507059e+37
    %v2105 = vand.u32 %v2092, 2147483648
    %v2106 = vor.u32 1.1754944e-38, %v2105
    %v2107 = vsel %vm2104, %v2106, %v2102
    %v2108 = vmul.f32 1.0, %v2107
    %v2109 = vrcp.pop %v2093
    %v2110 = vmul.f32 %v2093, %v2109
    %v2111 = vsub.f32 1.0, %v2110
    %v2112 = vmul.f32 %v2109, %v2111
    %v2113 = vadd.f32 %v2109, %v2112
    %vm2114 = vweird.f32 %v2093
    %vm2115 = vweird.f32 %v2109
    %vm2116 = vmor %vm2114, %vm2115
    %v2117 = vsel %vm2116, %v2109, %v2113
    %v2118 = vand.u32 2147483647, %v2093
    %vm2119 = vcmp.eq.f32.partialorder %v2118, 8.507059e+37
    %v2120 = vand.u32 %v2093, 2147483648
    %v2121 = vor.u32 1.1754944e-38, %v2120
    %v2122 = vsel %vm2119, %v2121, %v2117
    %v2123 = vmul.f32 1.0, %v2122
    %v2124 = vmul.f32 %v2068, %v1929
    %v2125 = vmul.f32 %v2083, %v1930
    %v2126 = vmul.f32 %v2030, %v2084
    %v2127 = vmul.f32 %v2045, %v2085
    %v2128 = vadd.f32 %v2124, %v2126
    %v2129 = vadd.f32 %v2125, %v2127
    %v2130 = vtanh.pop %v2128
    %v2131 = vtanh.pop %v2129
    %v2132 = vmul.f32 %v2108, %v2130
    %v2133 = vmul.f32 %v2123, %v2131
    %v2134 = vld [vmem:[%s695] sm:$0xff]
    %v2135 = vld [vmem:[%s695 + $0x8] sm:$0xff]
    %v2136 = vld [vmem:[%s695 + $0x10] sm:$0xff]
    %v2137 = vld [vmem:[%s695 + $0x18] sm:$0xff]
    %v2138 = vld [vmem:[%s695 + $0x20] sm:$0xff]
    %v2139 = vld [vmem:[%s695 + $0x28] sm:$0xff]
    %v2140 = vld [vmem:[%s695 + $0x30] sm:$0xff]
    %v2141 = vld [vmem:[%s695 + $0x38] sm:$0xff]
    %v2142 = vpack.c.bf16 %v2133, %v2132
    %2143 = vmatpush.bf16.msra.mxu0 %v913
    %2144 = vmatpush.bf16.msra.mxu0 %v909
    %2145 = vmatpush.bf16.msra.mxu0 %v905
    %2146 = vmatpush.bf16.msra.mxu0 %v901
    %2147 = vmatpush.bf16.msra.mxu0 %v897
    %2148 = vmatpush.bf16.msra.mxu0 %v893
    %2149 = vmatpush.bf16.msra.mxu0 %v889
    %2150 = vmatpush.bf16.msra.mxu0 %v885
    %2151 = vmatmul.bf16.gmra.mxu0 %v2142
    %v2152 = vpop.f32.mrf.mxu0
    %v2153 = vadd.f32 0.0, %v2152
    %v2154 = vpop.f32.mrf.mxu0
    %v2155 = vadd.f32 0.0, %v2154
    %2156 = vdwg.mxu0
    %2157 = vmatpush.bf16.msra.mxu0 %v914
    %2158 = vmatpush.bf16.msra.mxu0 %v910
    %2159 = vmatpush.bf16.msra.mxu0 %v906
    %2160 = vmatpush.bf16.msra.mxu0 %v902
    %2161 = vmatpush.bf16.msra.mxu0 %v898
    %2162 = vmatpush.bf16.msra.mxu0 %v894
    %2163 = vmatpush.bf16.msra.mxu0 %v890
    %2164 = vmatpush.bf16.msra.mxu0 %v886
    %2165 = vmatmul.bf16.gmra.mxu0 %v2142
    %v2166 = vpop.f32.mrf.mxu0
    %v2167 = vadd.f32 0.0, %v2166
    %v2168 = vpop.f32.mrf.mxu0
    %v2169 = vadd.f32 0.0, %v2168
    %2170 = vdwg.mxu0
    %2171 = vmatpush.bf16.msra.mxu0 %v915
    %2172 = vmatpush.bf16.msra.mxu0 %v911
    %2173 = vmatpush.bf16.msra.mxu0 %v907
    %2174 = vmatpush.bf16.msra.mxu0 %v903
    %2175 = vmatpush.bf16.msra.mxu0 %v899
    %2176 = vmatpush.bf16.msra.mxu0 %v895
    %2177 = vmatpush.bf16.msra.mxu0 %v891
    %2178 = vmatpush.bf16.msra.mxu0 %v887
    %2179 = vmatmul.bf16.gmra.mxu0 %v2142
    %v2180 = vpop.f32.mrf.mxu0
    %v2181 = vadd.f32 0.0, %v2180
    %v2182 = vpop.f32.mrf.mxu0
    %v2183 = vadd.f32 0.0, %v2182
    %2184 = vdwg.mxu0
    %2185 = vmatpush.bf16.msra.mxu0 %v916
    %2186 = vmatpush.bf16.msra.mxu0 %v912
    %2187 = vmatpush.bf16.msra.mxu0 %v908
    %2188 = vmatpush.bf16.msra.mxu0 %v904
    %2189 = vmatpush.bf16.msra.mxu0 %v900
    %2190 = vmatpush.bf16.msra.mxu0 %v896
    %2191 = vmatpush.bf16.msra.mxu0 %v892
    %2192 = vmatpush.bf16.msra.mxu0 %v888
    %2193 = vmatmul.bf16.gmra.mxu0 %v2142
    %v2194 = vpop.f32.mrf.mxu0
    %v2195 = vadd.f32 0.0, %v2194
    %v2196 = vpop.f32.mrf.mxu0
    %v2197 = vadd.f32 0.0, %v2196
    %2198 = vdwg.mxu0
    %v2199 = vadd.f32 %v2134, %v2153
    %v2200 = vadd.f32 %v2135, %v2167
    %v2201 = vadd.f32 %v2136, %v2181
    %v2202 = vadd.f32 %v2137, %v2195
    %v2203 = vadd.f32 %v2138, %v2155
    %v2204 = vadd.f32 %v2139, %v2169
    %v2205 = vadd.f32 %v2140, %v2183
    %v2206 = vadd.f32 %v2141, %v2197
    %v2207 = vxor.u32 %v2199, 2147483648
    %v2208 = vxor.u32 %v2203, 2147483648
    %v2209 = vmul.f32 %v2207, 1.442695
    %v2210 = vpow.pop %v2209
    %v2211 = vmul.f32 %v2208, 1.442695
    %v2212 = vpow.pop %v2211
    %v2213 = vadd.f32 %v2210, 1.0
    %v2214 = vadd.f32 %v2212, 1.0
    %v2215 = vrcp.pop %v2213
    %v2216 = vmul.f32 %v2213, %v2215
    %v2217 = vsub.f32 1.0, %v2216
    %v2218 = vmul.f32 %v2215, %v2217
    %v2219 = vadd.f32 %v2215, %v2218
    %vm2220 = vweird.f32 %v2213
    %vm2221 = vweird.f32 %v2215
    %vm2222 = vmor %vm2220, %vm2221
    %v2223 = vsel %vm2222, %v2215, %v2219
    %v2224 = vand.u32 2147483647, %v2213
    %vm2225 = vcmp.eq.f32.partialorder %v2224, 8.507059e+37
    %v2226 = vand.u32 %v2213, 2147483648
    %v2227 = vor.u32 1.1754944e-38, %v2226
    %v2228 = vsel %vm2225, %v2227, %v2223
    %v2229 = vmul.f32 1.0, %v2228
    %v2230 = vrcp.pop %v2214
    %v2231 = vmul.f32 %v2214, %v2230
    %v2232 = vsub.f32 1.0, %v2231
    %v2233 = vmul.f32 %v2230, %v2232
    %v2234 = vadd.f32 %v2230, %v2233
    %vm2235 = vweird.f32 %v2214
    %vm2236 = vweird.f32 %v2230
    %vm2237 = vmor %vm2235, %vm2236
    %v2238 = vsel %vm2237, %v2230, %v2234
    %v2239 = vand.u32 2147483647, %v2214
    %vm2240 = vcmp.eq.f32.partialorder %v2239, 8.507059e+37
    %v2241 = vand.u32 %v2214, 2147483648
    %v2242 = vor.u32 1.1754944e-38, %v2241
    %v2243 = vsel %vm2240, %v2242, %v2238
    %v2244 = vmul.f32 1.0, %v2243
    %v2245 = vxor.u32 %v2200, 2147483648
    %v2246 = vxor.u32 %v2204, 2147483648
    %v2247 = vmul.f32 %v2245, 1.442695
    %v2248 = vpow.pop %v2247
    %v2249 = vmul.f32 %v2246, 1.442695
    %v2250 = vpow.pop %v2249
    %v2251 = vadd.f32 %v2248, 1.0
    %v2252 = vadd.f32 %v2250, 1.0
    %v2253 = vrcp.pop %v2251
    %v2254 = vmul.f32 %v2251, %v2253
    %v2255 = vsub.f32 1.0, %v2254
    %v2256 = vmul.f32 %v2253, %v2255
    %v2257 = vadd.f32 %v2253, %v2256
    %vm2258 = vweird.f32 %v2251
    %vm2259 = vweird.f32 %v2253
    %vm2260 = vmor %vm2258, %vm2259
    %v2261 = vsel %vm2260, %v2253, %v2257
    %v2262 = vand.u32 2147483647, %v2251
    %vm2263 = vcmp.eq.f32.partialorder %v2262, 8.507059e+37
    %v2264 = vand.u32 %v2251, 2147483648
    %v2265 = vor.u32 1.1754944e-38, %v2264
    %v2266 = vsel %vm2263, %v2265, %v2261
    %v2267 = vmul.f32 1.0, %v2266
    %v2268 = vrcp.pop %v2252
    %v2269 = vmul.f32 %v2252, %v2268
    %v2270 = vsub.f32 1.0, %v2269
    %v2271 = vmul.f32 %v2268, %v2270
    %v2272 = vadd.f32 %v2268, %v2271
    %vm2273 = vweird.f32 %v2252
    %vm2274 = vweird.f32 %v2268
    %vm2275 = vmor %vm2273, %vm2274
    %v2276 = vsel %vm2275, %v2268, %v2272
    %v2277 = vand.u32 2147483647, %v2252
    %vm2278 = vcmp.eq.f32.partialorder %v2277, 8.507059e+37
    %v2279 = vand.u32 %v2252, 2147483648
    %v2280 = vor.u32 1.1754944e-38, %v2279
    %v2281 = vsel %vm2278, %v2280, %v2276
    %v2282 = vmul.f32 1.0, %v2281
    %v2283 = vtanh.pop %v2201
    %v2284 = vtanh.pop %v2205
    %v2285 = vxor.u32 %v2202, 2147483648
    %v2286 = vxor.u32 %v2206, 2147483648
    %v2287 = vmul.f32 %v2285, 1.442695
    %v2288 = vpow.pop %v2287
    %v2289 = vmul.f32 %v2286, 1.442695
    %v2290 = vpow.pop %v2289
    %v2291 = vadd.f32 %v2288, 1.0
    %v2292 = vadd.f32 %v2290, 1.0
    %v2293 = vrcp.pop %v2291
    %v2294 = vmul.f32 %v2291, %v2293
    %v2295 = vsub.f32 1.0, %v2294
    %v2296 = vmul.f32 %v2293, %v2295
    %v2297 = vadd.f32 %v2293, %v2296
    %vm2298 = vweird.f32 %v2291
    %vm2299 = vweird.f32 %v2293
    %vm2300 = vmor %vm2298, %vm2299
    %v2301 = vsel %vm2300, %v2293, %v2297
    %v2302 = vand.u32 2147483647, %v2291
    %vm2303 = vcmp.eq.f32.partialorder %v2302, 8.507059e+37
    %v2304 = vand.u32 %v2291, 2147483648
    %v2305 = vor.u32 1.1754944e-38, %v2304
    %v2306 = vsel %vm2303, %v2305, %v2301
    %v2307 = vmul.f32 1.0, %v2306
    %v2308 = vrcp.pop %v2292
    %v2309 = vmul.f32 %v2292, %v2308
    %v2310 = vsub.f32 1.0, %v2309
    %v2311 = vmul.f32 %v2308, %v2310
    %v2312 = vadd.f32 %v2308, %v2311
    %vm2313 = vweird.f32 %v2292
    %vm2314 = vweird.f32 %v2308
    %vm2315 = vmor %vm2313, %vm2314
    %v2316 = vsel %vm2315, %v2308, %v2312
    %v2317 = vand.u32 2147483647, %v2292
    %vm2318 = vcmp.eq.f32.partialorder %v2317, 8.507059e+37
    %v2319 = vand.u32 %v2292, 2147483648
    %v2320 = vor.u32 1.1754944e-38, %v2319
    %v2321 = vsel %vm2318, %v2320, %v2316
    %v2322 = vmul.f32 1.0, %v2321
    %v2323 = vmul.f32 %v2267, %v2128
    %v2324 = vmul.f32 %v2282, %v2129
    %v2325 = vmul.f32 %v2229, %v2283
    %v2326 = vmul.f32 %v2244, %v2284
    %v2327 = vadd.f32 %v2323, %v2325
    %v2328 = vadd.f32 %v2324, %v2326
    %v2329 = vtanh.pop %v2327
    %v2330 = vtanh.pop %v2328
    %v2331 = vmul.f32 %v2307, %v2329
    %v2332 = vmul.f32 %v2322, %v2330
    %v2333 = vld [vmem:[%s772] sm:$0xff]
    %v2334 = vld [vmem:[%s772 + $0x8] sm:$0xff]
    %v2335 = vld [vmem:[%s772 + $0x10] sm:$0xff]
    %v2336 = vld [vmem:[%s772 + $0x18] sm:$0xff]
    %v2337 = vld [vmem:[%s772 + $0x20] sm:$0xff]
    %v2338 = vld [vmem:[%s772 + $0x28] sm:$0xff]
    %v2339 = vld [vmem:[%s772 + $0x30] sm:$0xff]
    %v2340 = vld [vmem:[%s772 + $0x38] sm:$0xff]
    %v2341 = vpack.c.bf16 %v2332, %v2331
    %2342 = vmatpush.bf16.msra.mxu0 %v913
    %2343 = vmatpush.bf16.msra.mxu0 %v909
    %2344 = vmatpush.bf16.msra.mxu0 %v905
    %2345 = vmatpush.bf16.msra.mxu0 %v901
    %2346 = vmatpush.bf16.msra.mxu0 %v897
    %2347 = vmatpush.bf16.msra.mxu0 %v893
    %2348 = vmatpush.bf16.msra.mxu0 %v889
    %2349 = vmatpush.bf16.msra.mxu0 %v885
    %2350 = vmatmul.bf16.gmra.mxu0 %v2341
    %v2351 = vpop.f32.mrf.mxu0
    %v2352 = vadd.f32 0.0, %v2351
    %v2353 = vpop.f32.mrf.mxu0
    %v2354 = vadd.f32 0.0, %v2353
    %2355 = vdwg.mxu0
    %2356 = vmatpush.bf16.msra.mxu0 %v914
    %2357 = vmatpush.bf16.msra.mxu0 %v910
    %2358 = vmatpush.bf16.msra.mxu0 %v906
    %2359 = vmatpush.bf16.msra.mxu0 %v902
    %2360 = vmatpush.bf16.msra.mxu0 %v898
    %2361 = vmatpush.bf16.msra.mxu0 %v894
    %2362 = vmatpush.bf16.msra.mxu0 %v890
    %2363 = vmatpush.bf16.msra.mxu0 %v886
    %2364 = vmatmul.bf16.gmra.mxu0 %v2341
    %v2365 = vpop.f32.mrf.mxu0
    %v2366 = vadd.f32 0.0, %v2365
    %v2367 = vpop.f32.mrf.mxu0
    %v2368 = vadd.f32 0.0, %v2367
    %2369 = vdwg.mxu0
    %2370 = vmatpush.bf16.msra.mxu0 %v915
    %2371 = vmatpush.bf16.msra.mxu0 %v911
    %2372 = vmatpush.bf16.msra.mxu0 %v907
    %2373 = vmatpush.bf16.msra.mxu0 %v903
    %2374 = vmatpush.bf16.msra.mxu0 %v899
    %2375 = vmatpush.bf16.msra.mxu0 %v895
    %2376 = vmatpush.bf16.msra.mxu0 %v891
    %2377 = vmatpush.bf16.msra.mxu0 %v887
    %2378 = vmatmul.bf16.gmra.mxu0 %v2341
    %v2379 = vpop.f32.mrf.mxu0
    %v2380 = vadd.f32 0.0, %v2379
    %v2381 = vpop.f32.mrf.mxu0
    %v2382 = vadd.f32 0.0, %v2381
    %2383 = vdwg.mxu0
    %2384 = vmatpush.bf16.msra.mxu0 %v916
    %2385 = vmatpush.bf16.msra.mxu0 %v912
    %2386 = vmatpush.bf16.msra.mxu0 %v908
    %2387 = vmatpush.bf16.msra.mxu0 %v904
    %2388 = vmatpush.bf16.msra.mxu0 %v900
    %2389 = vmatpush.bf16.msra.mxu0 %v896
    %2390 = vmatpush.bf16.msra.mxu0 %v892
    %2391 = vmatpush.bf16.msra.mxu0 %v888
    %2392 = vmatmul.bf16.gmra.mxu0 %v2341
    %v2393 = vpop.f32.mrf.mxu0
    %v2394 = vadd.f32 0.0, %v2393
    %v2395 = vpop.f32.mrf.mxu0
    %v2396 = vadd.f32 0.0, %v2395
    %2397 = vdwg.mxu0
    %v2398 = vadd.f32 %v2333, %v2352
    %v2399 = vadd.f32 %v2334, %v2366
    %v2400 = vadd.f32 %v2335, %v2380
    %v2401 = vadd.f32 %v2336, %v2394
    %v2402 = vadd.f32 %v2337, %v2354
    %v2403 = vadd.f32 %v2338, %v2368
    %v2404 = vadd.f32 %v2339, %v2382
    %v2405 = vadd.f32 %v2340, %v2396
    %v2406 = vxor.u32 %v2398, 2147483648
    %v2407 = vxor.u32 %v2402, 2147483648
    %v2408 = vmul.f32 %v2406, 1.442695
    %v2409 = vpow.pop %v2408
    %v2410 = vmul.f32 %v2407, 1.442695
    %v2411 = vpow.pop %v2410
    %v2412 = vadd.f32 %v2409, 1.0
    %v2413 = vadd.f32 %v2411, 1.0
    %v2414 = vrcp.pop %v2412
    %v2415 = vmul.f32 %v2412, %v2414
    %v2416 = vsub.f32 1.0, %v2415
    %v2417 = vmul.f32 %v2414, %v2416
    %v2418 = vadd.f32 %v2414, %v2417
    %vm2419 = vweird.f32 %v2412
    %vm2420 = vweird.f32 %v2414
    %vm2421 = vmor %vm2419, %vm2420
    %v2422 = vsel %vm2421, %v2414, %v2418
    %v2423 = vand.u32 2147483647, %v2412
    %vm2424 = vcmp.eq.f32.partialorder %v2423, 8.507059e+37
    %v2425 = vand.u32 %v2412, 2147483648
    %v2426 = vor.u32 1.1754944e-38, %v2425
    %v2427 = vsel %vm2424, %v2426, %v2422
    %v2428 = vmul.f32 1.0, %v2427
    %v2429 = vrcp.pop %v2413
    %v2430 = vmul.f32 %v2413, %v2429
    %v2431 = vsub.f32 1.0, %v2430
    %v2432 = vmul.f32 %v2429, %v2431
    %v2433 = vadd.f32 %v2429, %v2432
    %vm2434 = vweird.f32 %v2413
    %vm2435 = vweird.f32 %v2429
    %vm2436 = vmor %vm2434, %vm2435
    %v2437 = vsel %vm2436, %v2429, %v2433
    %v2438 = vand.u32 2147483647, %v2413
    %vm2439 = vcmp.eq.f32.partialorder %v2438, 8.507059e+37
    %v2440 = vand.u32 %v2413, 2147483648
    %v2441 = vor.u32 1.1754944e-38, %v2440
    %v2442 = vsel %vm2439, %v2441, %v2437
    %v2443 = vmul.f32 1.0, %v2442
    %v2444 = vxor.u32 %v2399, 2147483648
    %v2445 = vxor.u32 %v2403, 2147483648
    %v2446 = vmul.f32 %v2444, 1.442695
    %v2447 = vpow.pop %v2446
    %v2448 = vmul.f32 %v2445, 1.442695
    %v2449 = vpow.pop %v2448
    %v2450 = vadd.f32 %v2447, 1.0
    %v2451 = vadd.f32 %v2449, 1.0
    %v2452 = vrcp.pop %v2450
    %v2453 = vmul.f32 %v2450, %v2452
    %v2454 = vsub.f32 1.0, %v2453
    %v2455 = vmul.f32 %v2452, %v2454
    %v2456 = vadd.f32 %v2452, %v2455
    %vm2457 = vweird.f32 %v2450
    %vm2458 = vweird.f32 %v2452
    %vm2459 = vmor %vm2457, %vm2458
    %v2460 = vsel %vm2459, %v2452, %v2456
    %v2461 = vand.u32 2147483647, %v2450
    %vm2462 = vcmp.eq.f32.partialorder %v2461, 8.507059e+37
    %v2463 = vand.u32 %v2450, 2147483648
    %v2464 = vor.u32 1.1754944e-38, %v2463
    %v2465 = vsel %vm2462, %v2464, %v2460
    %v2466 = vmul.f32 1.0, %v2465
    %v2467 = vrcp.pop %v2451
    %v2468 = vmul.f32 %v2451, %v2467
    %v2469 = vsub.f32 1.0, %v2468
    %v2470 = vmul.f32 %v2467, %v2469
    %v2471 = vadd.f32 %v2467, %v2470
    %vm2472 = vweird.f32 %v2451
    %vm2473 = vweird.f32 %v2467
    %vm2474 = vmor %vm2472, %vm2473
    %v2475 = vsel %vm2474, %v2467, %v2471
    %v2476 = vand.u32 2147483647, %v2451
    %vm2477 = vcmp.eq.f32.partialorder %v2476, 8.507059e+37
    %v2478 = vand.u32 %v2451, 2147483648
    %v2479 = vor.u32 1.1754944e-38, %v2478
    %v2480 = vsel %vm2477, %v2479, %v2475
    %v2481 = vmul.f32 1.0, %v2480
    %v2482 = vtanh.pop %v2400
    %v2483 = vtanh.pop %v2404
    %v2484 = vxor.u32 %v2401, 2147483648
    %v2485 = vxor.u32 %v2405, 2147483648
    %v2486 = vmul.f32 %v2484, 1.442695
    %v2487 = vpow.pop %v2486
    %v2488 = vmul.f32 %v2485, 1.442695
    %v2489 = vpow.pop %v2488
    %v2490 = vadd.f32 %v2487, 1.0
    %v2491 = vadd.f32 %v2489, 1.0
    %v2492 = vrcp.pop %v2490
    %v2493 = vmul.f32 %v2490, %v2492
    %v2494 = vsub.f32 1.0, %v2493
    %v2495 = vmul.f32 %v2492, %v2494
    %v2496 = vadd.f32 %v2492, %v2495
    %vm2497 = vweird.f32 %v2490
    %vm2498 = vweird.f32 %v2492
    %vm2499 = vmor %vm2497, %vm2498
    %v2500 = vsel %vm2499, %v2492, %v2496
    %v2501 = vand.u32 2147483647, %v2490
    %vm2502 = vcmp.eq.f32.partialorder %v2501, 8.507059e+37
    %v2503 = vand.u32 %v2490, 2147483648
    %v2504 = vor.u32 1.1754944e-38, %v2503
    %v2505 = vsel %vm2502, %v2504, %v2500
    %v2506 = vmul.f32 1.0, %v2505
    %v2507 = vrcp.pop %v2491
    %v2508 = vmul.f32 %v2491, %v2507
    %v2509 = vsub.f32 1.0, %v2508
    %v2510 = vmul.f32 %v2507, %v2509
    %v2511 = vadd.f32 %v2507, %v2510
    %vm2512 = vweird.f32 %v2491
    %vm2513 = vweird.f32 %v2507
    %vm2514 = vmor %vm2512, %vm2513
    %v2515 = vsel %vm2514, %v2507, %v2511
    %v2516 = vand.u32 2147483647, %v2491
    %vm2517 = vcmp.eq.f32.partialorder %v2516, 8.507059e+37
    %v2518 = vand.u32 %v2491, 2147483648
    %v2519 = vor.u32 1.1754944e-38, %v2518
    %v2520 = vsel %vm2517, %v2519, %v2515
    %v2521 = vmul.f32 1.0, %v2520
    %v2522 = vmul.f32 %v2466, %v2327
    %v2523 = vmul.f32 %v2481, %v2328
    %v2524 = vmul.f32 %v2428, %v2482
    %v2525 = vmul.f32 %v2443, %v2483
    %v2526 = vadd.f32 %v2522, %v2524
    %v2527 = vadd.f32 %v2523, %v2525
    %v2528 = vtanh.pop %v2526
    %v2529 = vtanh.pop %v2527
    %v2530 = vmul.f32 %v2506, %v2528
    %v2531 = vmul.f32 %v2521, %v2529
    %v2532 = vld [vmem:[#allocation3] sm:$0xf]
    %v2533 = vld [vmem:[#allocation3 + $0x4] sm:$0xf]
    %v2534 = vld [vmem:[#allocation11] sm:$0xff]
    %v2535 = vld [vmem:[#allocation11 + $0x8] sm:$0xff]
    %v2536 = vld [vmem:[#allocation11 + $0x10] sm:$0xff]
    %v2537 = vld [vmem:[#allocation11 + $0x18] sm:$0xff]
    %v2538 = vld [vmem:[%s5] sm:$0xf]
    %v2540 = vperm.slane %v2538, 0
    %v2541 = vperm.slane %v2538, 1
    %v2542 = vperm.slane %v2538, 2
    %v2543 = vperm.slane %v2538, 3
    %v2550 = vunpack.c.l.b16 %v2532
    %v2551 = vunpack.c.l.b16 %v2533
    %v2552 = vpack.c.b16 %v2551, %v2550
    %2553 = vrot.lane.b32.xlu0 %v2552, 16
    %v2554 = vpop.permute.xlu0 %2553
    %v2559 = vunpack.c.l.b16 %v2534
    %v2560 = vunpack.c.h.b16 %v2534
    %v2561 = vunpack.c.l.b16 %v2535
    %v2562 = vunpack.c.h.b16 %v2535
    %v2563 = vunpack.c.l.b16 %v2536
    %v2564 = vunpack.c.h.b16 %v2536
    %v2565 = vunpack.c.l.b16 %v2537
    %v2566 = vunpack.c.h.b16 %v2537
    %v2567 = vpack.c.b16 %v2563, %v2559
    %v2568 = vpack.c.b16 %v2564, %v2560
    %v2569 = vpack.c.b16 %v2565, %v2561
    %v2570 = vpack.c.b16 %v2566, %v2562
    %v2576 = vsel %vm174, %v2554, 0
    %2578 = vmatpush.bf16.msra.mxu0 0
    %2579 = vmatpush.bf16.msra.mxu0 0
    %2580 = vmatpush.bf16.msra.mxu0 0
    %2581 = vmatpush.bf16.msra.mxu0 0
    %2582 = vmatpush.bf16.msra.mxu0 0
    %2583 = vmatpush.bf16.msra.mxu0 0
    %2584 = vmatpush.bf16.msra.mxu0 0
    %2585 = vmatpush.bf16.msra.mxu0 %v2567
    %2586 = vmatmul.bf16.gmra.mxu0 %v2576
    %v2587 = vpop.f32.mrf.mxu0
    %v2588 = vadd.f32 %v2540, %v2587
    %v2589 = vpop.f32.mrf.mxu0
    %v2590 = vadd.f32 %v2540, %v2589
    %2591 = vdwg.mxu0
    %2592 = vmatpush.bf16.msra.mxu0 0
    %2593 = vmatpush.bf16.msra.mxu0 0
    %2594 = vmatpush.bf16.msra.mxu0 0
    %2595 = vmatpush.bf16.msra.mxu0 0
    %2596 = vmatpush.bf16.msra.mxu0 0
    %2597 = vmatpush.bf16.msra.mxu0 0
    %2598 = vmatpush.bf16.msra.mxu0 0
    %2599 = vmatpush.bf16.msra.mxu0 %v2568
    %2600 = vmatmul.bf16.gmra.mxu0 %v2576
    %v2601 = vpop.f32.mrf.mxu0
    %v2602 = vadd.f32 %v2541, %v2601
    %v2603 = vpop.f32.mrf.mxu0
    %v2604 = vadd.f32 %v2541, %v2603
    %2605 = vdwg.mxu0
    %2606 = vmatpush.bf16.msra.mxu0 0
    %2607 = vmatpush.bf16.msra.mxu0 0
    %2608 = vmatpush.bf16.msra.mxu0 0
    %2609 = vmatpush.bf16.msra.mxu0 0
    %2610 = vmatpush.bf16.msra.mxu0 0
    %2611 = vmatpush.bf16.msra.mxu0 0
    %2612 = vmatpush.bf16.msra.mxu0 0
    %2613 = vmatpush.bf16.msra.mxu0 %v2569
    %2614 = vmatmul.bf16.gmra.mxu0 %v2576
    %v2615 = vpop.f32.mrf.mxu0
    %v2616 = vadd.f32 %v2542, %v2615
    %v2617 = vpop.f32.mrf.mxu0
    %v2618 = vadd.f32 %v2542, %v2617
    %2619 = vdwg.mxu0
    %2620 = vmatpush.bf16.msra.mxu0 0
    %2621 = vmatpush.bf16.msra.mxu0 0
    %2622 = vmatpush.bf16.msra.mxu0 0
    %2623 = vmatpush.bf16.msra.mxu0 0
    %2624 = vmatpush.bf16.msra.mxu0 0
    %2625 = vmatpush.bf16.msra.mxu0 0
    %2626 = vmatpush.bf16.msra.mxu0 0
    %2627 = vmatpush.bf16.msra.mxu0 %v2570
    %2628 = vmatmul.bf16.gmra.mxu0 %v2576
    %v2629 = vpop.f32.mrf.mxu0
    %v2630 = vadd.f32 %v2543, %v2629
    %v2631 = vpop.f32.mrf.mxu0
    %v2632 = vadd.f32 %v2543, %v2631
    %2633 = vdwg.mxu0
    %v2634 = vxor.u32 %v2588, 2147483648
    %v2635 = vxor.u32 %v2590, 2147483648
    %v2636 = vmul.f32 %v2634, 1.442695
    %v2637 = vpow.pop %v2636
    %v2638 = vmul.f32 %v2635, 1.442695
    %v2639 = vpow.pop %v2638
    %v2640 = vadd.f32 %v2637, 1.0
    %v2641 = vadd.f32 %v2639, 1.0
    %v2642 = vrcp.pop %v2640
    %v2643 = vmul.f32 %v2640, %v2642
    %v2644 = vsub.f32 1.0, %v2643
    %v2645 = vmul.f32 %v2642, %v2644
    %v2646 = vadd.f32 %v2642, %v2645
    %vm2647 = vweird.f32 %v2640
    %vm2648 = vweird.f32 %v2642
    %vm2649 = vmor %vm2647, %vm2648
    %v2650 = vsel %vm2649, %v2642, %v2646
    %v2651 = vand.u32 2147483647, %v2640
    %vm2652 = vcmp.eq.f32.partialorder %v2651, 8.507059e+37
    %v2653 = vand.u32 %v2640, 2147483648
    %v2654 = vor.u32 1.1754944e-38, %v2653
    %v2655 = vsel %vm2652, %v2654, %v2650
    %v2656 = vmul.f32 1.0, %v2655
    %v2657 = vrcp.pop %v2641
    %v2658 = vmul.f32 %v2641, %v2657
    %v2659 = vsub.f32 1.0, %v2658
    %v2660 = vmul.f32 %v2657, %v2659
    %v2661 = vadd.f32 %v2657, %v2660
    %vm2662 = vweird.f32 %v2641
    %vm2663 = vweird.f32 %v2657
    %vm2664 = vmor %vm2662, %vm2663
    %v2665 = vsel %vm2664, %v2657, %v2661
    %v2666 = vand.u32 2147483647, %v2641
    %vm2667 = vcmp.eq.f32.partialorder %v2666, 8.507059e+37
    %v2668 = vand.u32 %v2641, 2147483648
    %v2669 = vor.u32 1.1754944e-38, %v2668
    %v2670 = vsel %vm2667, %v2669, %v2665
    %v2671 = vmul.f32 1.0, %v2670
    %v2672 = vxor.u32 %v2602, 2147483648
    %v2673 = vxor.u32 %v2604, 2147483648
    %v2674 = vmul.f32 %v2672, 1.442695
    %v2675 = vpow.pop %v2674
    %v2676 = vmul.f32 %v2673, 1.442695
    %v2677 = vpow.pop %v2676
    %v2678 = vadd.f32 %v2675, 1.0
    %v2679 = vadd.f32 %v2677, 1.0
    %v2680 = vrcp.pop %v2678
    %v2681 = vmul.f32 %v2678, %v2680
    %v2682 = vsub.f32 1.0, %v2681
    %v2683 = vmul.f32 %v2680, %v2682
    %v2684 = vadd.f32 %v2680, %v2683
    %vm2685 = vweird.f32 %v2678
    %vm2686 = vweird.f32 %v2680
    %vm2687 = vmor %vm2685, %vm2686
    %v2688 = vsel %vm2687, %v2680, %v2684
    %v2689 = vand.u32 2147483647, %v2678
    %vm2690 = vcmp.eq.f32.partialorder %v2689, 8.507059e+37
    %v2691 = vand.u32 %v2678, 2147483648
    %v2692 = vor.u32 1.1754944e-38, %v2691
    %v2693 = vsel %vm2690, %v2692, %v2688
    %v2694 = vmul.f32 1.0, %v2693
    %v2695 = vrcp.pop %v2679
    %v2696 = vmul.f32 %v2679, %v2695
    %v2697 = vsub.f32 1.0, %v2696
    %v2698 = vmul.f32 %v2695, %v2697
    %v2699 = vadd.f32 %v2695, %v2698
    %vm2700 = vweird.f32 %v2679
    %vm2701 = vweird.f32 %v2695
    %vm2702 = vmor %vm2700, %vm2701
    %v2703 = vsel %vm2702, %v2695, %v2699
    %v2704 = vand.u32 2147483647, %v2679
    %vm2705 = vcmp.eq.f32.partialorder %v2704, 8.507059e+37
    %v2706 = vand.u32 %v2679, 2147483648
    %v2707 = vor.u32 1.1754944e-38, %v2706
    %v2708 = vsel %vm2705, %v2707, %v2703
    %v2709 = vmul.f32 1.0, %v2708
    %v2710 = vtanh.pop %v2616
    %v2711 = vtanh.pop %v2618
    %v2712 = vxor.u32 %v2630, 2147483648
    %v2713 = vxor.u32 %v2632, 2147483648
    %v2714 = vmul.f32 %v2712, 1.442695
    %v2715 = vpow.pop %v2714
    %v2716 = vmul.f32 %v2713, 1.442695
    %v2717 = vpow.pop %v2716
    %v2718 = vadd.f32 %v2715, 1.0
    %v2719 = vadd.f32 %v2717, 1.0
    %v2720 = vrcp.pop %v2718
    %v2721 = vmul.f32 %v2718, %v2720
    %v2722 = vsub.f32 1.0, %v2721
    %v2723 = vmul.f32 %v2720, %v2722
    %v2724 = vadd.f32 %v2720, %v2723
    %vm2725 = vweird.f32 %v2718
    %vm2726 = vweird.f32 %v2720
    %vm2727 = vmor %vm2725, %vm2726
    %v2728 = vsel %vm2727, %v2720, %v2724
    %v2729 = vand.u32 2147483647, %v2718
    %vm2730 = vcmp.eq.f32.partialorder %v2729, 8.507059e+37
    %v2731 = vand.u32 %v2718, 2147483648
    %v2732 = vor.u32 1.1754944e-38, %v2731
    %v2733 = vsel %vm2730, %v2732, %v2728
    %v2734 = vmul.f32 1.0, %v2733
    %v2735 = vrcp.pop %v2719
    %v2736 = vmul.f32 %v2719, %v2735
    %v2737 = vsub.f32 1.0, %v2736
    %v2738 = vmul.f32 %v2735, %v2737
    %v2739 = vadd.f32 %v2735, %v2738
    %vm2740 = vweird.f32 %v2719
    %vm2741 = vweird.f32 %v2735
    %vm2742 = vmor %vm2740, %vm2741
    %v2743 = vsel %vm2742, %v2735, %v2739
    %v2744 = vand.u32 2147483647, %v2719
    %vm2745 = vcmp.eq.f32.partialorder %v2744, 8.507059e+37
    %v2746 = vand.u32 %v2719, 2147483648
    %v2747 = vor.u32 1.1754944e-38, %v2746
    %v2748 = vsel %vm2745, %v2747, %v2743
    %v2749 = vmul.f32 1.0, %v2748
    %v2750 = vmul.f32 %v2694, 0.0
    %v2751 = vmul.f32 %v2709, 0.0
    %v2752 = vmul.f32 %v2656, %v2710
    %v2753 = vmul.f32 %v2671, %v2711
    %v2754 = vadd.f32 %v2750, %v2752
    %v2755 = vadd.f32 %v2751, %v2753
    %v2756 = vtanh.pop %v2754
    %v2757 = vtanh.pop %v2755
    %v2758 = vmul.f32 %v2734, %v2756
    %v2759 = vmul.f32 %v2749, %v2757
    %2760 = vst [vmem:[#allocation12] sm:$0xff] %v2530
    %2761 = vst [vmem:[#allocation12 + $0x10] sm:$0xff] %v2531
    %2762 = vst [vmem:[#allocation12 + $0x8] sm:$0xff] %v2758
    %2763 = vst [vmem:[#allocation12 + $0x18] sm:$0xff] %v2759
    // Predicated region
    $region46: #{tpu_custom_call.1} parent=1 // pred_check
      _
    $region47: #{tpu_custom_call.1} parent=1 // pred_check_branch
      %2765 = sbr.rel (0) target = $region49
    $region48: #{tpu_custom_call.1} parent=1 // pred_region
      %2767 = vsyncadd [#allocation5], 0
      %s2768 = sshll.u32 [#allocation12], 4
      %s2769 = int_to_ptr.vmem [resolvable:$true] %s2768
      %s2770 = sshll.u32 %s6, 4
      %s2771 = int_to_ptr.hbm [resolvable:$true] %s2770
      %2776 = dma.vmem_to_hbm [thread:$0]  %s2769, 512, %s2771, [#allocation5], 256, 256, 16
    $region49: #{tpu_custom_call.1} parent=1 // pred_fallthru
      _
    // Predicated region
    $region50: #{tpu_custom_call.1} parent=1 // pred_check
      _
    $region51: #{tpu_custom_call.1} parent=1 // pred_check_branch
      %2778 = sbr.rel (0) target = $region53
    $region52: #{tpu_custom_call.1} parent=1 // pred_region
      %2780 = dma.done [#allocation5], 512
    $region53: #{tpu_custom_call.1} parent=1 // pred_fallthru
      _
    %2781 = vsyncpa [#allocation4], 1
    %2782 = vsyncpa [#allocation7], 1
    %2783 = vsyncpa [#allocation10], 1
    %2784 = vsyncpa [#allocation5], 1

</llo_original>
